<compile_context>
chip_gen: v7x
topology: tpu7x:2x2x1
jax: 0.10.0
libtpu: 0.0.40
codegen_flags: <defaults>
</compile_context>

<pallas_src>
import functools

import jax
import jax.numpy as jnp
import numpy as np
from jax.experimental import pallas as pl
from jax.experimental.pallas import tpu as pltpu

# Model hyper-parameters (SMALL, consistent with the module's __init__ signature)
VOCAB, EMB, HEADS, HID, LAYERS, DROP = 50, 32, 4, 64, 2, 0.0   # eval mode -> dropout no-op
B, L = 2, 8
EPS = 1e-5
VOCAB_PAD = 64      # vocab padded to a sublane-tile multiple (zero rows)
LANES = 128         # lane-dense slab width


# ----------------------------------------------------------------------------
# Fused Pallas kernel: embeddings + LAYERS encoder layers + pooled mean over seq
# ----------------------------------------------------------------------------
def fused_encoder_kernel(toks_ref, wslab_ref, bslab_ref, o_ref, *,
                         heads, layers, batch, seqlen, emb, hid, vocab_pad):
    E, hd = emb, emb // heads
    BL = batch * seqlen

    # ---- fused embedding lookup: one_hot(toks) @ tok_emb + pos ----
    tok_emb = wslab_ref[0:vocab_pad, 0:E]               # (VOCAB_PAD, E)
    pos = wslab_ref[0:BL, E:2 * E]                      # (B*L, E) host-tiled per batch
    tok_ids = toks_ref[...]                             # (B*L, 1) int32
    vocab_iota = jax.lax.broadcasted_iota(jnp.int32, (BL, vocab_pad), 1)
    onehot = (tok_ids == vocab_iota).astype(jnp.float32)
    x = jnp.dot(onehot, tok_emb, preferred_element_type=jnp.float32) + pos   # (B*L, E)

    for li in range(layers):
        base = vocab_pad + li * (E + hid)
        b0 = li * 8
        # weights (pre-transposed on host; Q part pre-scaled by 1/sqrt(hd))
        wqkv = wslab_ref[base:base + E, 0:3 * E]              # (E, 3E)
        wo   = wslab_ref[base:base + E, 3 * E:4 * E]          # (E, E)
        w2   = wslab_ref[base + E:base + E + hid, 0:E]        # (HID, E)
        w1   = wslab_ref[base + E:base + 2 * E, E:E + hid]    # (E, HID)
        # biases / LayerNorm params (one row each in the bias slab)
        bqkv  = bslab_ref[b0 + 0:b0 + 1, 0:3 * E]
        bo    = bslab_ref[b0 + 1:b0 + 2, 0:E]
        g1    = bslab_ref[b0 + 2:b0 + 3, 0:E]
        beta1 = bslab_ref[b0 + 3:b0 + 4, 0:E]
        b1    = bslab_ref[b0 + 4:b0 + 5, 0:hid]
        b2    = bslab_ref[b0 + 5:b0 + 6, 0:E]
        g2    = bslab_ref[b0 + 6:b0 + 7, 0:E]
        beta2 = bslab_ref[b0 + 7:b0 + 8, 0:E]

        # ---- QKV projection on the full (B*L, E) slab ----
        qkv = jnp.dot(x, wqkv, preferred_element_type=jnp.float32) + bqkv
        q = qkv[:, 0:E]
        k = qkv[:, E:2 * E]
        v = qkv[:, 2 * E:3 * E]

        # ---- head-batched attention: one scores einsum + one P@V einsum ----
        def gather_heads(t):
            return jnp.stack(
                [t[bb * seqlen:(bb + 1) * seqlen, hh * hd:(hh + 1) * hd]
                 for bb in range(batch) for hh in range(heads)], axis=0)   # (B*H, L, hd)

        qs, ks, vs = gather_heads(q), gather_heads(k), gather_heads(v)
        s = jnp.einsum('bqd,bkd->bqk', qs, ks,
                       preferred_element_type=jnp.float32)                 # (B*H, L, L)
        s = s - jnp.max(s, axis=-1, keepdims=True)
        ex = jnp.exp(s)
        pr = ex * pl.reciprocal(jnp.sum(ex, axis=-1, keepdims=True), approx=False)
        ctx = jnp.einsum('bqk,bkd->bqd', pr, vs,
                         preferred_element_type=jnp.float32)               # (B*H, L, hd)

        # reassemble (B*L, E): lane-concat heads per batch row group, row-concat batches
        attn_ctx = jnp.concatenate(
            [jnp.concatenate([ctx[bb * heads + hh] for hh in range(heads)], axis=-1)
             for bb in range(batch)], axis=0)                              # (B*L, E)
        attn = jnp.dot(attn_ctx, wo, preferred_element_type=jnp.float32) + bo

        # ---- residual + LayerNorm1 (post-norm) ----
        x = x + attn
        mu = jnp.mean(x, axis=-1, keepdims=True)
        var = jnp.mean((x - mu) ** 2, axis=-1, keepdims=True)
        x = (x - mu) * jax.lax.rsqrt(var + EPS) * g1 + beta1

        # ---- feed forward (Linear -> ReLU -> Linear) ----
        h1 = jnp.maximum(jnp.dot(x, w1, preferred_element_type=jnp.float32) + b1, 0.0)
        ff = jnp.dot(h1, w2, preferred_element_type=jnp.float32) + b2

        # ---- residual + LayerNorm2 ----
        x = x + ff
        mu = jnp.mean(x, axis=-1, keepdims=True)
        var = jnp.mean((x - mu) ** 2, axis=-1, keepdims=True)
        x = (x - mu) * jax.lax.rsqrt(var + EPS) * g2 + beta2

    # ---- pooled mean over the sequence: one (B, B*L) @ (B*L, E) matmul, one store ----
    b_iota = jax.lax.broadcasted_iota(jnp.int32, (batch, BL), 0)
    r_iota = jax.lax.broadcasted_iota(jnp.int32, (batch, BL), 1)
    in_row = (r_iota >= b_iota * seqlen) & (r_iota < (b_iota + 1) * seqlen)
    pool = jnp.where(in_row, jnp.float32(1.0 / seqlen), jnp.float32(0.0))
    o_ref[...] = jnp.dot(pool, x, preferred_element_type=jnp.float32)


# ----------------------------------------------------------------------------
# Host-side parameter packing (one time): two lane-dense slabs
# ----------------------------------------------------------------------------
def _layer_base(li):
    return VOCAB_PAD + li * (EMB + HID)


def prepare_kernel_params(tok_emb, pos_emb, layer_params):
    hd = EMB // HEADS
    scale = 1.0 / float(np.sqrt(hd))
    wrows = VOCAB_PAD + LAYERS * (EMB + HID)
    wslab = jnp.zeros((wrows, LANES), jnp.float32)
    wslab = wslab.at[0:VOCAB, 0:EMB].set(tok_emb)                    # padded vocab rows stay 0
    wslab = wslab.at[0:B * L, EMB:2 * EMB].set(jnp.tile(pos_emb[:L], (B, 1)))
    bslab = jnp.zeros((LAYERS * 8, LANES), jnp.float32)
    for li, p in enumerate(layer_params):
        base = _layer_base(li)
        wqkv_t = p["wqkv"].T                                         # (E, 3E)
        wqkv_t = wqkv_t.at[:, :EMB].multiply(scale)                  # fold 1/sqrt(hd) into Q cols
        bqkv = p["bqkv"].at[:, :EMB].multiply(scale)                 # ... and Q bias
        wslab = wslab.at[base:base + EMB, 0:3 * EMB].set(wqkv_t)
        wslab = wslab.at[base:base + EMB, 3 * EMB:4 * EMB].set(p["wo"].T)
        wslab = wslab.at[base + EMB:base + EMB + HID, 0:EMB].set(p["w2"].T)
        wslab = wslab.at[base + EMB:base + 2 * EMB, EMB:EMB + HID].set(p["w1"].T)
        b0 = li * 8
        bslab = bslab.at[b0 + 0, 0:3 * EMB].set(bqkv[0])
        bslab = bslab.at[b0 + 1, 0:EMB].set(p["bo"][0])
        bslab = bslab.at[b0 + 2, 0:EMB].set(p["g1"][0])
        bslab = bslab.at[b0 + 3, 0:EMB].set(p["beta1"][0])
        bslab = bslab.at[b0 + 4, 0:HID].set(p["b1"][0])
        bslab = bslab.at[b0 + 5, 0:EMB].set(p["b2"][0])
        bslab = bslab.at[b0 + 6, 0:EMB].set(p["g2"][0])
        bslab = bslab.at[b0 + 7, 0:EMB].set(p["beta2"][0])
    return wslab, bslab


def sequence_encoder_forward(toks, wslab, bslab):
    """toks: (B, L) int32 -> (B, E) float32. One fused, grid-less pallas_call."""
    Bb, Lb = toks.shape
    toks2d = toks.reshape(Bb * Lb, 1).astype(jnp.int32)
    kernel = functools.partial(
        fused_encoder_kernel, heads=HEADS, layers=LAYERS, batch=Bb, seqlen=Lb,
        emb=EMB, hid=HID, vocab_pad=VOCAB_PAD)
    vmem = pltpu.MemorySpace.VMEM
    return pl.pallas_call(
        kernel,
        out_shape=jax.ShapeDtypeStruct((Bb, EMB), jnp.float32),
        in_specs=[pl.BlockSpec(memory_space=vmem)] * 3,
        out_specs=pl.BlockSpec(memory_space=vmem),
    )(toks2d, wslab, bslab)


# ----------------------------------------------------------------------------
# Deterministic parameter init (synthetic; shapes match nn.TransformerEncoderLayer)
# ----------------------------------------------------------------------------
def init_params(key):
    ks = jax.random.split(key, 2 + LAYERS * 6)
    tok_emb = 0.02 * jax.random.normal(ks[0], (VOCAB, EMB), jnp.float32)
    tok_emb = tok_emb.at[0].set(0.0)                       # padding_idx=0
    pos_emb = 0.02 * jax.random.normal(ks[1], (256, EMB), jnp.float32)

    layer_params = []
    for li in range(LAYERS):
        kk = jax.random.split(ks[2 + li], 6)
        p = dict(
            wqkv=0.05 * jax.random.normal(kk[0], (3 * EMB, EMB), jnp.float32),
            bqkv=0.01 * jax.random.normal(kk[1], (1, 3 * EMB), jnp.float32),
            wo=0.05 * jax.random.normal(kk[2], (EMB, EMB), jnp.float32),
            bo=0.01 * jax.random.normal(kk[3], (1, EMB), jnp.float32),
            g1=jnp.ones((1, EMB), jnp.float32),
            beta1=jnp.zeros((1, EMB), jnp.float32),
            w1=0.05 * jax.random.normal(kk[4], (HID, EMB), jnp.float32),
            b1=jnp.zeros((1, HID), jnp.float32),
            w2=0.05 * jax.random.normal(kk[5], (EMB, HID), jnp.float32),
            b2=jnp.zeros((1, EMB), jnp.float32),
            g2=jnp.ones((1, EMB), jnp.float32),
            beta2=jnp.zeros((1, EMB), jnp.float32),
        )
        layer_params.append(p)
    return tok_emb, pos_emb, layer_params


# ----------------------------------------------------------------------------
# Pure-JAX reference (mirrors PyTorch eval-mode semantics) for a sanity check
# ----------------------------------------------------------------------------
def reference_forward(toks, tok_emb, pos_emb, layer_params):
    P = jax.lax.Precision.HIGHEST
    Bb, Lb = toks.shape
    x = jnp.take(tok_emb, toks, axis=0) + pos_emb[None, :Lb]
    hd = EMB // HEADS
    for p in layer_params:
        qkv = jnp.einsum('ble,fe->blf', x, p["wqkv"], precision=P) + p["bqkv"][0]
        q, k, v = jnp.split(qkv, 3, axis=-1)
        q = q.reshape(Bb, Lb, HEADS, hd) / np.sqrt(hd)
        k = k.reshape(Bb, Lb, HEADS, hd)
        v = v.reshape(Bb, Lb, HEADS, hd)
        s = jnp.einsum('bqhd,bkhd->bhqk', q, k, precision=P)
        a = jax.nn.softmax(s, axis=-1)
        ctx = jnp.einsum('bhqk,bkhd->bqhd', a, v, precision=P).reshape(Bb, Lb, EMB)
        attn = jnp.einsum('ble,fe->blf', ctx, p["wo"], precision=P) + p["bo"][0]
        x = x + attn
        mu = x.mean(-1, keepdims=True)
        var = ((x - mu) ** 2).mean(-1, keepdims=True)
        x = (x - mu) / jnp.sqrt(var + EPS) * p["g1"][0] + p["beta1"][0]
        h = jax.nn.relu(jnp.einsum('ble,he->blh', x, p["w1"], precision=P) + p["b1"][0])
        ff = jnp.einsum('blh,eh->ble', h, p["w2"], precision=P) + p["b2"][0]
        x = x + ff
        mu = x.mean(-1, keepdims=True)
        var = ((x - mu) ** 2).mean(-1, keepdims=True)
        x = (x - mu) / jnp.sqrt(var + EPS) * p["g2"][0] + p["beta2"][0]
    return x.mean(axis=1)


if __name__ == "__main__":
    key = jax.random.PRNGKey(0)
    kp, kt = jax.random.split(key)
    tok_emb, pos_emb, layer_params = init_params(kp)
    toks = jax.random.randint(kt, (B, L), 0, VOCAB, dtype=jnp.int32)

    wslab, bslab = prepare_kernel_params(tok_emb, pos_emb, layer_params)

    fwd = jax.jit(sequence_encoder_forward)
    out = jax.block_until_ready(fwd(toks, wslab, bslab))
    assert out.shape == (B, EMB) and out.dtype == jnp.float32

    ref = jax.block_until_ready(reference_forward(toks, tok_emb, pos_emb, layer_params))
    # Exact reciprocal now used in the kernel softmax; remaining slack only covers the
    # difference between the MXU's f32 matmul path and XLA's HIGHEST-precision matmuls.
    np.testing.assert_allclose(np.asarray(out), np.asarray(ref), atol=2e-3, rtol=2e-3)

    print("KERNEL_OK")
</pallas_src>

<mosaic_0001>
module attributes {stable_mosaic.version = 11 : i64} {
  func.func @fused_encoder_kernel(%arg0: memref<16x1xi32, #tpu.memory_space<vmem>>, %arg1: memref<256x128xf32, #tpu.memory_space<vmem>>, %arg2: memref<16x128xf32, #tpu.memory_space<vmem>>, %arg3: memref<2x32xf32, #tpu.memory_space<vmem>>) attributes {dimension_semantics = [], scalar_prefetch = 0 : i64, scratch_operands = 0 : i64, tpu.core_type = #tpu.core_type<tc>} {
    %c0 = arith.constant 0 : index
    %c0_0 = arith.constant 0 : index
    %0 = vector.load %arg1[%c0, %c0_0] : memref<256x128xf32, #tpu.memory_space<vmem>>, vector<64x32xf32>
    %c0_1 = arith.constant 0 : index
    %c32 = arith.constant 32 : index
    %1 = vector.load %arg1[%c0_1, %c32] : memref<256x128xf32, #tpu.memory_space<vmem>>, vector<16x32xf32>
    %c0_2 = arith.constant 0 : index
    %c0_3 = arith.constant 0 : index
    %2 = vector.load %arg0[%c0_2, %c0_3] : memref<16x1xi32, #tpu.memory_space<vmem>>, vector<16x1xi32>
    %3 = tpu.iota {dimensions = array<i32: 1>} : vector<16x64xi32>
    %4 = vector.broadcast %2 : vector<16x1xi32> to vector<16x64xi32>
    %5 = arith.cmpi eq, %4, %3 : vector<16x64xi32>
    %6 = arith.extui %5 : vector<16x64xi1> to vector<16x64xi32>
    %7 = arith.sitofp %6 : vector<16x64xi32> to vector<16x64xf32>
    %cst = arith.constant dense<0.000000e+00> : vector<16x32xf32>
    %8 = tpu.matmul %7, %0, %cst {dimension_numbers = #tpu.dot_dimension_numbers<[1], [0], [0], [1], [0, 0, 1, 1], [], []>} : vector<16x64xf32>, vector<64x32xf32>, vector<16x32xf32> -> vector<16x32xf32>
    %9 = arith.addf %8, %1 : vector<16x32xf32>
    %c64 = arith.constant 64 : index
    %c0_4 = arith.constant 0 : index
    %10 = vector.load %arg1[%c64, %c0_4] : memref<256x128xf32, #tpu.memory_space<vmem>>, vector<32x96xf32>
    %c64_5 = arith.constant 64 : index
    %c96 = arith.constant 96 : index
    %11 = vector.load %arg1[%c64_5, %c96] : memref<256x128xf32, #tpu.memory_space<vmem>>, vector<32x32xf32>
    %c96_6 = arith.constant 96 : index
    %c0_7 = arith.constant 0 : index
    %12 = vector.load %arg1[%c96_6, %c0_7] : memref<256x128xf32, #tpu.memory_space<vmem>>, vector<64x32xf32>
    %c96_8 = arith.constant 96 : index
    %c32_9 = arith.constant 32 : index
    %13 = vector.load %arg1[%c96_8, %c32_9] : memref<256x128xf32, #tpu.memory_space<vmem>>, vector<32x64xf32>
    %c0_10 = arith.constant 0 : index
    %c0_11 = arith.constant 0 : index
    %14 = vector.load %arg2[%c0_10, %c0_11] : memref<16x128xf32, #tpu.memory_space<vmem>>, vector<1x96xf32>
    %c1 = arith.constant 1 : index
    %c0_12 = arith.constant 0 : index
    %15 = vector.load %arg2[%c1, %c0_12] : memref<16x128xf32, #tpu.memory_space<vmem>>, vector<1x32xf32>
    %c2 = arith.constant 2 : index
    %c0_13 = arith.constant 0 : index
    %16 = vector.load %arg2[%c2, %c0_13] : memref<16x128xf32, #tpu.memory_space<vmem>>, vector<1x32xf32>
    %c3 = arith.constant 3 : index
    %c0_14 = arith.constant 0 : index
    %17 = vector.load %arg2[%c3, %c0_14] : memref<16x128xf32, #tpu.memory_space<vmem>>, vector<1x32xf32>
    %c4 = arith.constant 4 : index
    %c0_15 = arith.constant 0 : index
    %18 = vector.load %arg2[%c4, %c0_15] : memref<16x128xf32, #tpu.memory_space<vmem>>, vector<1x64xf32>
    %c5 = arith.constant 5 : index
    %c0_16 = arith.constant 0 : index
    %19 = vector.load %arg2[%c5, %c0_16] : memref<16x128xf32, #tpu.memory_space<vmem>>, vector<1x32xf32>
    %c6 = arith.constant 6 : index
    %c0_17 = arith.constant 0 : index
    %20 = vector.load %arg2[%c6, %c0_17] : memref<16x128xf32, #tpu.memory_space<vmem>>, vector<1x32xf32>
    %c7 = arith.constant 7 : index
    %c0_18 = arith.constant 0 : index
    %21 = vector.load %arg2[%c7, %c0_18] : memref<16x128xf32, #tpu.memory_space<vmem>>, vector<1x32xf32>
    %cst_19 = arith.constant dense<0.000000e+00> : vector<16x96xf32>
    %22 = tpu.matmul %9, %10, %cst_19 {dimension_numbers = #tpu.dot_dimension_numbers<[1], [0], [0], [1], [0, 0, 1, 1], [], []>} : vector<16x32xf32>, vector<32x96xf32>, vector<16x96xf32> -> vector<16x96xf32>
    %23 = vector.broadcast %14 : vector<1x96xf32> to vector<16x96xf32>
    %24 = arith.addf %22, %23 : vector<16x96xf32>
    %25 = vector.extract_strided_slice %24 {offsets = [0, 0], sizes = [16, 32], strides = [1, 1]} : vector<16x96xf32> to vector<16x32xf32>
    %26 = vector.extract_strided_slice %24 {offsets = [0, 32], sizes = [16, 32], strides = [1, 1]} : vector<16x96xf32> to vector<16x32xf32>
    %27 = vector.extract_strided_slice %24 {offsets = [0, 64], sizes = [16, 32], strides = [1, 1]} : vector<16x96xf32> to vector<16x32xf32>
    %28 = vector.extract_strided_slice %25 {offsets = [0, 0], sizes = [8, 8], strides = [1, 1]} : vector<16x32xf32> to vector<8x8xf32>
    %29 = vector.extract_strided_slice %25 {offsets = [0, 8], sizes = [8, 8], strides = [1, 1]} : vector<16x32xf32> to vector<8x8xf32>
    %30 = vector.extract_strided_slice %25 {offsets = [0, 16], sizes = [8, 8], strides = [1, 1]} : vector<16x32xf32> to vector<8x8xf32>
    %31 = vector.extract_strided_slice %25 {offsets = [0, 24], sizes = [8, 8], strides = [1, 1]} : vector<16x32xf32> to vector<8x8xf32>
    %32 = vector.extract_strided_slice %25 {offsets = [8, 0], sizes = [8, 8], strides = [1, 1]} : vector<16x32xf32> to vector<8x8xf32>
    %33 = vector.extract_strided_slice %25 {offsets = [8, 8], sizes = [8, 8], strides = [1, 1]} : vector<16x32xf32> to vector<8x8xf32>
    %34 = vector.extract_strided_slice %25 {offsets = [8, 16], sizes = [8, 8], strides = [1, 1]} : vector<16x32xf32> to vector<8x8xf32>
    %35 = vector.extract_strided_slice %25 {offsets = [8, 24], sizes = [8, 8], strides = [1, 1]} : vector<16x32xf32> to vector<8x8xf32>
    %36 = vector.shape_cast %28 : vector<8x8xf32> to vector<1x8x8xf32>
    %37 = vector.shape_cast %29 : vector<8x8xf32> to vector<1x8x8xf32>
    %38 = vector.shape_cast %30 : vector<8x8xf32> to vector<1x8x8xf32>
    %39 = vector.shape_cast %31 : vector<8x8xf32> to vector<1x8x8xf32>
    %40 = vector.shape_cast %32 : vector<8x8xf32> to vector<1x8x8xf32>
    %41 = vector.shape_cast %33 : vector<8x8xf32> to vector<1x8x8xf32>
    %42 = vector.shape_cast %34 : vector<8x8xf32> to vector<1x8x8xf32>
    %43 = vector.shape_cast %35 : vector<8x8xf32> to vector<1x8x8xf32>
    %44 = tpu.concatenate %36, %37, %38, %39, %40, %41, %42, %43 in 0 : vector<1x8x8xf32>, vector<1x8x8xf32>, vector<1x8x8xf32>, vector<1x8x8xf32>, vector<1x8x8xf32>, vector<1x8x8xf32>, vector<1x8x8xf32>, vector<1x8x8xf32> -> vector<8x8x8xf32>
    %45 = vector.extract_strided_slice %26 {offsets = [0, 0], sizes = [8, 8], strides = [1, 1]} : vector<16x32xf32> to vector<8x8xf32>
    %46 = vector.extract_strided_slice %26 {offsets = [0, 8], sizes = [8, 8], strides = [1, 1]} : vector<16x32xf32> to vector<8x8xf32>
    %47 = vector.extract_strided_slice %26 {offsets = [0, 16], sizes = [8, 8], strides = [1, 1]} : vector<16x32xf32> to vector<8x8xf32>
    %48 = vector.extract_strided_slice %26 {offsets = [0, 24], sizes = [8, 8], strides = [1, 1]} : vector<16x32xf32> to vector<8x8xf32>
    %49 = vector.extract_strided_slice %26 {offsets = [8, 0], sizes = [8, 8], strides = [1, 1]} : vector<16x32xf32> to vector<8x8xf32>
    %50 = vector.extract_strided_slice %26 {offsets = [8, 8], sizes = [8, 8], strides = [1, 1]} : vector<16x32xf32> to vector<8x8xf32>
    %51 = vector.extract_strided_slice %26 {offsets = [8, 16], sizes = [8, 8], strides = [1, 1]} : vector<16x32xf32> to vector<8x8xf32>
    %52 = vector.extract_strided_slice %26 {offsets = [8, 24], sizes = [8, 8], strides = [1, 1]} : vector<16x32xf32> to vector<8x8xf32>
    %53 = vector.shape_cast %45 : vector<8x8xf32> to vector<1x8x8xf32>
    %54 = vector.shape_cast %46 : vector<8x8xf32> to vector<1x8x8xf32>
    %55 = vector.shape_cast %47 : vector<8x8xf32> to vector<1x8x8xf32>
    %56 = vector.shape_cast %48 : vector<8x8xf32> to vector<1x8x8xf32>
    %57 = vector.shape_cast %49 : vector<8x8xf32> to vector<1x8x8xf32>
    %58 = vector.shape_cast %50 : vector<8x8xf32> to vector<1x8x8xf32>
    %59 = vector.shape_cast %51 : vector<8x8xf32> to vector<1x8x8xf32>
    %60 = vector.shape_cast %52 : vector<8x8xf32> to vector<1x8x8xf32>
    %61 = tpu.concatenate %53, %54, %55, %56, %57, %58, %59, %60 in 0 : vector<1x8x8xf32>, vector<1x8x8xf32>, vector<1x8x8xf32>, vector<1x8x8xf32>, vector<1x8x8xf32>, vector<1x8x8xf32>, vector<1x8x8xf32>, vector<1x8x8xf32> -> vector<8x8x8xf32>
    %62 = vector.extract_strided_slice %27 {offsets = [0, 0], sizes = [8, 8], strides = [1, 1]} : vector<16x32xf32> to vector<8x8xf32>
    %63 = vector.extract_strided_slice %27 {offsets = [0, 8], sizes = [8, 8], strides = [1, 1]} : vector<16x32xf32> to vector<8x8xf32>
    %64 = vector.extract_strided_slice %27 {offsets = [0, 16], sizes = [8, 8], strides = [1, 1]} : vector<16x32xf32> to vector<8x8xf32>
    %65 = vector.extract_strided_slice %27 {offsets = [0, 24], sizes = [8, 8], strides = [1, 1]} : vector<16x32xf32> to vector<8x8xf32>
    %66 = vector.extract_strided_slice %27 {offsets = [8, 0], sizes = [8, 8], strides = [1, 1]} : vector<16x32xf32> to vector<8x8xf32>
    %67 = vector.extract_strided_slice %27 {offsets = [8, 8], sizes = [8, 8], strides = [1, 1]} : vector<16x32xf32> to vector<8x8xf32>
    %68 = vector.extract_strided_slice %27 {offsets = [8, 16], sizes = [8, 8], strides = [1, 1]} : vector<16x32xf32> to vector<8x8xf32>
    %69 = vector.extract_strided_slice %27 {offsets = [8, 24], sizes = [8, 8], strides = [1, 1]} : vector<16x32xf32> to vector<8x8xf32>
    %70 = vector.shape_cast %62 : vector<8x8xf32> to vector<1x8x8xf32>
    %71 = vector.shape_cast %63 : vector<8x8xf32> to vector<1x8x8xf32>
    %72 = vector.shape_cast %64 : vector<8x8xf32> to vector<1x8x8xf32>
    %73 = vector.shape_cast %65 : vector<8x8xf32> to vector<1x8x8xf32>
    %74 = vector.shape_cast %66 : vector<8x8xf32> to vector<1x8x8xf32>
    %75 = vector.shape_cast %67 : vector<8x8xf32> to vector<1x8x8xf32>
    %76 = vector.shape_cast %68 : vector<8x8xf32> to vector<1x8x8xf32>
    %77 = vector.shape_cast %69 : vector<8x8xf32> to vector<1x8x8xf32>
    %78 = tpu.concatenate %70, %71, %72, %73, %74, %75, %76, %77 in 0 : vector<1x8x8xf32>, vector<1x8x8xf32>, vector<1x8x8xf32>, vector<1x8x8xf32>, vector<1x8x8xf32>, vector<1x8x8xf32>, vector<1x8x8xf32>, vector<1x8x8xf32> -> vector<8x8x8xf32>
    "tpu.trace_start"() <{level = 10 : i32, message = "bqd,bkd->bqk"}> : () -> ()
    %cst_20 = arith.constant dense<0.000000e+00> : vector<8x8x8xf32>
    %79 = tpu.matmul %44, %61, %cst_20 {dimension_numbers = #tpu.dot_dimension_numbers<[2], [2], [1], [1], [0, 0, 0, 1, 1, 1], [0], [0]>} : vector<8x8x8xf32>, vector<8x8x8xf32>, vector<8x8x8xf32> -> vector<8x8x8xf32>
    "tpu.trace_stop"() : () -> ()
    %cst_21 = arith.constant dense<0xFF800000> : vector<8x8xf32>
    %80 = vector.multi_reduction <maximumf>, %79, %cst_21 [2] : vector<8x8x8xf32> to vector<8x8xf32>
    %81 = vector.shape_cast %80 : vector<8x8xf32> to vector<8x8x1xf32>
    %82 = vector.broadcast %81 : vector<8x8x1xf32> to vector<8x8x8xf32>
    %83 = arith.subf %79, %82 : vector<8x8x8xf32>
    %84 = math.exp %83 : vector<8x8x8xf32>
    %cst_22 = arith.constant dense<0.000000e+00> : vector<8x8xf32>
    %85 = vector.multi_reduction <add>, %84, %cst_22 [2] : vector<8x8x8xf32> to vector<8x8xf32>
    %86 = vector.shape_cast %85 : vector<8x8xf32> to vector<8x8x1xf32>
    %87 = tpu.reciprocal %86 : vector<8x8x1xf32> -> vector<8x8x1xf32>
    %88 = vector.broadcast %87 : vector<8x8x1xf32> to vector<8x8x8xf32>
    %89 = arith.mulf %84, %88 : vector<8x8x8xf32>
    "tpu.trace_start"() <{level = 10 : i32, message = "bqk,bkd->bqd"}> : () -> ()
    %cst_23 = arith.constant dense<0.000000e+00> : vector<8x8x8xf32>
    %90 = tpu.matmul %89, %78, %cst_23 {dimension_numbers = #tpu.dot_dimension_numbers<[2], [1], [1], [2], [0, 0, 0, 1, 1, 2], [0], [0]>} : vector<8x8x8xf32>, vector<8x8x8xf32>, vector<8x8x8xf32> -> vector<8x8x8xf32>
    "tpu.trace_stop"() : () -> ()
    %91 = vector.extract_strided_slice %90 {offsets = [0, 0, 0], sizes = [1, 8, 8], strides = [1, 1, 1]} : vector<8x8x8xf32> to vector<1x8x8xf32>
    %92 = vector.shape_cast %91 : vector<1x8x8xf32> to vector<8x8xf32>
    %93 = vector.extract_strided_slice %90 {offsets = [1, 0, 0], sizes = [1, 8, 8], strides = [1, 1, 1]} : vector<8x8x8xf32> to vector<1x8x8xf32>
    %94 = vector.shape_cast %93 : vector<1x8x8xf32> to vector<8x8xf32>
    %95 = vector.extract_strided_slice %90 {offsets = [2, 0, 0], sizes = [1, 8, 8], strides = [1, 1, 1]} : vector<8x8x8xf32> to vector<1x8x8xf32>
    %96 = vector.shape_cast %95 : vector<1x8x8xf32> to vector<8x8xf32>
    %97 = vector.extract_strided_slice %90 {offsets = [3, 0, 0], sizes = [1, 8, 8], strides = [1, 1, 1]} : vector<8x8x8xf32> to vector<1x8x8xf32>
    %98 = vector.shape_cast %97 : vector<1x8x8xf32> to vector<8x8xf32>
    %99 = tpu.concatenate %92, %94, %96, %98 in 1 : vector<8x8xf32>, vector<8x8xf32>, vector<8x8xf32>, vector<8x8xf32> -> vector<8x32xf32>
    %100 = vector.extract_strided_slice %90 {offsets = [4, 0, 0], sizes = [1, 8, 8], strides = [1, 1, 1]} : vector<8x8x8xf32> to vector<1x8x8xf32>
    %101 = vector.shape_cast %100 : vector<1x8x8xf32> to vector<8x8xf32>
    %102 = vector.extract_strided_slice %90 {offsets = [5, 0, 0], sizes = [1, 8, 8], strides = [1, 1, 1]} : vector<8x8x8xf32> to vector<1x8x8xf32>
    %103 = vector.shape_cast %102 : vector<1x8x8xf32> to vector<8x8xf32>
    %104 = vector.extract_strided_slice %90 {offsets = [6, 0, 0], sizes = [1, 8, 8], strides = [1, 1, 1]} : vector<8x8x8xf32> to vector<1x8x8xf32>
    %105 = vector.shape_cast %104 : vector<1x8x8xf32> to vector<8x8xf32>
    %106 = vector.extract_strided_slice %90 {offsets = [7, 0, 0], sizes = [1, 8, 8], strides = [1, 1, 1]} : vector<8x8x8xf32> to vector<1x8x8xf32>
    %107 = vector.shape_cast %106 : vector<1x8x8xf32> to vector<8x8xf32>
    %108 = tpu.concatenate %101, %103, %105, %107 in 1 : vector<8x8xf32>, vector<8x8xf32>, vector<8x8xf32>, vector<8x8xf32> -> vector<8x32xf32>
    %109 = tpu.concatenate %99, %108 in 0 : vector<8x32xf32>, vector<8x32xf32> -> vector<16x32xf32>
    %cst_24 = arith.constant dense<0.000000e+00> : vector<16x32xf32>
    %110 = tpu.matmul %109, %11, %cst_24 {dimension_numbers = #tpu.dot_dimension_numbers<[1], [0], [0], [1], [0, 0, 1, 1], [], []>} : vector<16x32xf32>, vector<32x32xf32>, vector<16x32xf32> -> vector<16x32xf32>
    %111 = vector.broadcast %15 : vector<1x32xf32> to vector<16x32xf32>
    %112 = arith.addf %110, %111 : vector<16x32xf32>
    %113 = arith.addf %9, %112 : vector<16x32xf32>
    %cst_25 = arith.constant dense<0.000000e+00> : vector<16xf32>
    %114 = vector.multi_reduction <add>, %113, %cst_25 [1] : vector<16x32xf32> to vector<16xf32>
    %115 = vector.shape_cast %114 : vector<16xf32> to vector<16x1xf32>
    %cst_26 = arith.constant 3.200000e+01 : f32
    %116 = vector.broadcast %cst_26 : f32 to vector<16x1xf32>
    %117 = arith.divf %115, %116 : vector<16x1xf32>
    %118 = vector.broadcast %117 : vector<16x1xf32> to vector<16x32xf32>
    %119 = arith.subf %113, %118 : vector<16x32xf32>
    %120 = arith.mulf %119, %119 : vector<16x32xf32>
    %cst_27 = arith.constant dense<0.000000e+00> : vector<16xf32>
    %121 = vector.multi_reduction <add>, %120, %cst_27 [1] : vector<16x32xf32> to vector<16xf32>
    %122 = vector.shape_cast %121 : vector<16xf32> to vector<16x1xf32>
    %cst_28 = arith.constant 3.200000e+01 : f32
    %123 = vector.broadcast %cst_28 : f32 to vector<16x1xf32>
    %124 = arith.divf %122, %123 : vector<16x1xf32>
    %125 = vector.broadcast %117 : vector<16x1xf32> to vector<16x32xf32>
    %126 = arith.subf %113, %125 : vector<16x32xf32>
    %cst_29 = arith.constant 9.99999974E-6 : f32
    %127 = vector.broadcast %cst_29 : f32 to vector<16x1xf32>
    %128 = arith.addf %124, %127 : vector<16x1xf32>
    %129 = math.rsqrt %128 : vector<16x1xf32>
    %130 = vector.broadcast %129 : vector<16x1xf32> to vector<16x32xf32>
    %131 = arith.mulf %126, %130 : vector<16x32xf32>
    %132 = vector.broadcast %16 : vector<1x32xf32> to vector<16x32xf32>
    %133 = arith.mulf %131, %132 : vector<16x32xf32>
    %134 = vector.broadcast %17 : vector<1x32xf32> to vector<16x32xf32>
    %135 = arith.addf %133, %134 : vector<16x32xf32>
    %cst_30 = arith.constant dense<0.000000e+00> : vector<16x64xf32>
    %136 = tpu.matmul %135, %13, %cst_30 {dimension_numbers = #tpu.dot_dimension_numbers<[1], [0], [0], [1], [0, 0, 1, 1], [], []>} : vector<16x32xf32>, vector<32x64xf32>, vector<16x64xf32> -> vector<16x64xf32>
    %137 = vector.broadcast %18 : vector<1x64xf32> to vector<16x64xf32>
    %138 = arith.addf %136, %137 : vector<16x64xf32>
    %cst_31 = arith.constant 0.000000e+00 : f32
    %139 = vector.broadcast %cst_31 : f32 to vector<16x64xf32>
    %140 = arith.maximumf %138, %139 : vector<16x64xf32>
    %cst_32 = arith.constant dense<0.000000e+00> : vector<16x32xf32>
    %141 = tpu.matmul %140, %12, %cst_32 {dimension_numbers = #tpu.dot_dimension_numbers<[1], [0], [0], [1], [0, 0, 1, 1], [], []>} : vector<16x64xf32>, vector<64x32xf32>, vector<16x32xf32> -> vector<16x32xf32>
    %142 = vector.broadcast %19 : vector<1x32xf32> to vector<16x32xf32>
    %143 = arith.addf %141, %142 : vector<16x32xf32>
    %144 = arith.addf %135, %143 : vector<16x32xf32>
    %cst_33 = arith.constant dense<0.000000e+00> : vector<16xf32>
    %145 = vector.multi_reduction <add>, %144, %cst_33 [1] : vector<16x32xf32> to vector<16xf32>
    %146 = vector.shape_cast %145 : vector<16xf32> to vector<16x1xf32>
    %cst_34 = arith.constant 3.200000e+01 : f32
    %147 = vector.broadcast %cst_34 : f32 to vector<16x1xf32>
    %148 = arith.divf %146, %147 : vector<16x1xf32>
    %149 = vector.broadcast %148 : vector<16x1xf32> to vector<16x32xf32>
    %150 = arith.subf %144, %149 : vector<16x32xf32>
    %151 = arith.mulf %150, %150 : vector<16x32xf32>
    %cst_35 = arith.constant dense<0.000000e+00> : vector<16xf32>
    %152 = vector.multi_reduction <add>, %151, %cst_35 [1] : vector<16x32xf32> to vector<16xf32>
    %153 = vector.shape_cast %152 : vector<16xf32> to vector<16x1xf32>
    %cst_36 = arith.constant 3.200000e+01 : f32
    %154 = vector.broadcast %cst_36 : f32 to vector<16x1xf32>
    %155 = arith.divf %153, %154 : vector<16x1xf32>
    %156 = vector.broadcast %148 : vector<16x1xf32> to vector<16x32xf32>
    %157 = arith.subf %144, %156 : vector<16x32xf32>
    %cst_37 = arith.constant 9.99999974E-6 : f32
    %158 = vector.broadcast %cst_37 : f32 to vector<16x1xf32>
    %159 = arith.addf %155, %158 : vector<16x1xf32>
    %160 = math.rsqrt %159 : vector<16x1xf32>
    %161 = vector.broadcast %160 : vector<16x1xf32> to vector<16x32xf32>
    %162 = arith.mulf %157, %161 : vector<16x32xf32>
    %163 = vector.broadcast %20 : vector<1x32xf32> to vector<16x32xf32>
    %164 = arith.mulf %162, %163 : vector<16x32xf32>
    %165 = vector.broadcast %21 : vector<1x32xf32> to vector<16x32xf32>
    %166 = arith.addf %164, %165 : vector<16x32xf32>
    %c160 = arith.constant 160 : index
    %c0_38 = arith.constant 0 : index
    %167 = vector.load %arg1[%c160, %c0_38] : memref<256x128xf32, #tpu.memory_space<vmem>>, vector<32x96xf32>
    %c160_39 = arith.constant 160 : index
    %c96_40 = arith.constant 96 : index
    %168 = vector.load %arg1[%c160_39, %c96_40] : memref<256x128xf32, #tpu.memory_space<vmem>>, vector<32x32xf32>
    %c192 = arith.constant 192 : index
    %c0_41 = arith.constant 0 : index
    %169 = vector.load %arg1[%c192, %c0_41] : memref<256x128xf32, #tpu.memory_space<vmem>>, vector<64x32xf32>
    %c192_42 = arith.constant 192 : index
    %c32_43 = arith.constant 32 : index
    %170 = vector.load %arg1[%c192_42, %c32_43] : memref<256x128xf32, #tpu.memory_space<vmem>>, vector<32x64xf32>
    %c8 = arith.constant 8 : index
    %c0_44 = arith.constant 0 : index
    %171 = vector.load %arg2[%c8, %c0_44] : memref<16x128xf32, #tpu.memory_space<vmem>>, vector<1x96xf32>
    %c9 = arith.constant 9 : index
    %c0_45 = arith.constant 0 : index
    %172 = vector.load %arg2[%c9, %c0_45] : memref<16x128xf32, #tpu.memory_space<vmem>>, vector<1x32xf32>
    %c10 = arith.constant 10 : index
    %c0_46 = arith.constant 0 : index
    %173 = vector.load %arg2[%c10, %c0_46] : memref<16x128xf32, #tpu.memory_space<vmem>>, vector<1x32xf32>
    %c11 = arith.constant 11 : index
    %c0_47 = arith.constant 0 : index
    %174 = vector.load %arg2[%c11, %c0_47] : memref<16x128xf32, #tpu.memory_space<vmem>>, vector<1x32xf32>
    %c12 = arith.constant 12 : index
    %c0_48 = arith.constant 0 : index
    %175 = vector.load %arg2[%c12, %c0_48] : memref<16x128xf32, #tpu.memory_space<vmem>>, vector<1x64xf32>
    %c13 = arith.constant 13 : index
    %c0_49 = arith.constant 0 : index
    %176 = vector.load %arg2[%c13, %c0_49] : memref<16x128xf32, #tpu.memory_space<vmem>>, vector<1x32xf32>
    %c14 = arith.constant 14 : index
    %c0_50 = arith.constant 0 : index
    %177 = vector.load %arg2[%c14, %c0_50] : memref<16x128xf32, #tpu.memory_space<vmem>>, vector<1x32xf32>
    %c15 = arith.constant 15 : index
    %c0_51 = arith.constant 0 : index
    %178 = vector.load %arg2[%c15, %c0_51] : memref<16x128xf32, #tpu.memory_space<vmem>>, vector<1x32xf32>
    %cst_52 = arith.constant dense<0.000000e+00> : vector<16x96xf32>
    %179 = tpu.matmul %166, %167, %cst_52 {dimension_numbers = #tpu.dot_dimension_numbers<[1], [0], [0], [1], [0, 0, 1, 1], [], []>} : vector<16x32xf32>, vector<32x96xf32>, vector<16x96xf32> -> vector<16x96xf32>
    %180 = vector.broadcast %171 : vector<1x96xf32> to vector<16x96xf32>
    %181 = arith.addf %179, %180 : vector<16x96xf32>
    %182 = vector.extract_strided_slice %181 {offsets = [0, 0], sizes = [16, 32], strides = [1, 1]} : vector<16x96xf32> to vector<16x32xf32>
    %183 = vector.extract_strided_slice %181 {offsets = [0, 32], sizes = [16, 32], strides = [1, 1]} : vector<16x96xf32> to vector<16x32xf32>
    %184 = vector.extract_strided_slice %181 {offsets = [0, 64], sizes = [16, 32], strides = [1, 1]} : vector<16x96xf32> to vector<16x32xf32>
    %185 = vector.extract_strided_slice %182 {offsets = [0, 0], sizes = [8, 8], strides = [1, 1]} : vector<16x32xf32> to vector<8x8xf32>
    %186 = vector.extract_strided_slice %182 {offsets = [0, 8], sizes = [8, 8], strides = [1, 1]} : vector<16x32xf32> to vector<8x8xf32>
    %187 = vector.extract_strided_slice %182 {offsets = [0, 16], sizes = [8, 8], strides = [1, 1]} : vector<16x32xf32> to vector<8x8xf32>
    %188 = vector.extract_strided_slice %182 {offsets = [0, 24], sizes = [8, 8], strides = [1, 1]} : vector<16x32xf32> to vector<8x8xf32>
    %189 = vector.extract_strided_slice %182 {offsets = [8, 0], sizes = [8, 8], strides = [1, 1]} : vector<16x32xf32> to vector<8x8xf32>
    %190 = vector.extract_strided_slice %182 {offsets = [8, 8], sizes = [8, 8], strides = [1, 1]} : vector<16x32xf32> to vector<8x8xf32>
    %191 = vector.extract_strided_slice %182 {offsets = [8, 16], sizes = [8, 8], strides = [1, 1]} : vector<16x32xf32> to vector<8x8xf32>
    %192 = vector.extract_strided_slice %182 {offsets = [8, 24], sizes = [8, 8], strides = [1, 1]} : vector<16x32xf32> to vector<8x8xf32>
    %193 = vector.shape_cast %185 : vector<8x8xf32> to vector<1x8x8xf32>
    %194 = vector.shape_cast %186 : vector<8x8xf32> to vector<1x8x8xf32>
    %195 = vector.shape_cast %187 : vector<8x8xf32> to vector<1x8x8xf32>
    %196 = vector.shape_cast %188 : vector<8x8xf32> to vector<1x8x8xf32>
    %197 = vector.shape_cast %189 : vector<8x8xf32> to vector<1x8x8xf32>
    %198 = vector.shape_cast %190 : vector<8x8xf32> to vector<1x8x8xf32>
    %199 = vector.shape_cast %191 : vector<8x8xf32> to vector<1x8x8xf32>
    %200 = vector.shape_cast %192 : vector<8x8xf32> to vector<1x8x8xf32>
    %201 = tpu.concatenate %193, %194, %195, %196, %197, %198, %199, %200 in 0 : vector<1x8x8xf32>, vector<1x8x8xf32>, vector<1x8x8xf32>, vector<1x8x8xf32>, vector<1x8x8xf32>, vector<1x8x8xf32>, vector<1x8x8xf32>, vector<1x8x8xf32> -> vector<8x8x8xf32>
    %202 = vector.extract_strided_slice %183 {offsets = [0, 0], sizes = [8, 8], strides = [1, 1]} : vector<16x32xf32> to vector<8x8xf32>
    %203 = vector.extract_strided_slice %183 {offsets = [0, 8], sizes = [8, 8], strides = [1, 1]} : vector<16x32xf32> to vector<8x8xf32>
    %204 = vector.extract_strided_slice %183 {offsets = [0, 16], sizes = [8, 8], strides = [1, 1]} : vector<16x32xf32> to vector<8x8xf32>
    %205 = vector.extract_strided_slice %183 {offsets = [0, 24], sizes = [8, 8], strides = [1, 1]} : vector<16x32xf32> to vector<8x8xf32>
    %206 = vector.extract_strided_slice %183 {offsets = [8, 0], sizes = [8, 8], strides = [1, 1]} : vector<16x32xf32> to vector<8x8xf32>
    %207 = vector.extract_strided_slice %183 {offsets = [8, 8], sizes = [8, 8], strides = [1, 1]} : vector<16x32xf32> to vector<8x8xf32>
    %208 = vector.extract_strided_slice %183 {offsets = [8, 16], sizes = [8, 8], strides = [1, 1]} : vector<16x32xf32> to vector<8x8xf32>
    %209 = vector.extract_strided_slice %183 {offsets = [8, 24], sizes = [8, 8], strides = [1, 1]} : vector<16x32xf32> to vector<8x8xf32>
    %210 = vector.shape_cast %202 : vector<8x8xf32> to vector<1x8x8xf32>
    %211 = vector.shape_cast %203 : vector<8x8xf32> to vector<1x8x8xf32>
    %212 = vector.shape_cast %204 : vector<8x8xf32> to vector<1x8x8xf32>
    %213 = vector.shape_cast %205 : vector<8x8xf32> to vector<1x8x8xf32>
    %214 = vector.shape_cast %206 : vector<8x8xf32> to vector<1x8x8xf32>
    %215 = vector.shape_cast %207 : vector<8x8xf32> to vector<1x8x8xf32>
    %216 = vector.shape_cast %208 : vector<8x8xf32> to vector<1x8x8xf32>
    %217 = vector.shape_cast %209 : vector<8x8xf32> to vector<1x8x8xf32>
    %218 = tpu.concatenate %210, %211, %212, %213, %214, %215, %216, %217 in 0 : vector<1x8x8xf32>, vector<1x8x8xf32>, vector<1x8x8xf32>, vector<1x8x8xf32>, vector<1x8x8xf32>, vector<1x8x8xf32>, vector<1x8x8xf32>, vector<1x8x8xf32> -> vector<8x8x8xf32>
    %219 = vector.extract_strided_slice %184 {offsets = [0, 0], sizes = [8, 8], strides = [1, 1]} : vector<16x32xf32> to vector<8x8xf32>
    %220 = vector.extract_strided_slice %184 {offsets = [0, 8], sizes = [8, 8], strides = [1, 1]} : vector<16x32xf32> to vector<8x8xf32>
    %221 = vector.extract_strided_slice %184 {offsets = [0, 16], sizes = [8, 8], strides = [1, 1]} : vector<16x32xf32> to vector<8x8xf32>
    %222 = vector.extract_strided_slice %184 {offsets = [0, 24], sizes = [8, 8], strides = [1, 1]} : vector<16x32xf32> to vector<8x8xf32>
    %223 = vector.extract_strided_slice %184 {offsets = [8, 0], sizes = [8, 8], strides = [1, 1]} : vector<16x32xf32> to vector<8x8xf32>
    %224 = vector.extract_strided_slice %184 {offsets = [8, 8], sizes = [8, 8], strides = [1, 1]} : vector<16x32xf32> to vector<8x8xf32>
    %225 = vector.extract_strided_slice %184 {offsets = [8, 16], sizes = [8, 8], strides = [1, 1]} : vector<16x32xf32> to vector<8x8xf32>
    %226 = vector.extract_strided_slice %184 {offsets = [8, 24], sizes = [8, 8], strides = [1, 1]} : vector<16x32xf32> to vector<8x8xf32>
    %227 = vector.shape_cast %219 : vector<8x8xf32> to vector<1x8x8xf32>
    %228 = vector.shape_cast %220 : vector<8x8xf32> to vector<1x8x8xf32>
    %229 = vector.shape_cast %221 : vector<8x8xf32> to vector<1x8x8xf32>
    %230 = vector.shape_cast %222 : vector<8x8xf32> to vector<1x8x8xf32>
    %231 = vector.shape_cast %223 : vector<8x8xf32> to vector<1x8x8xf32>
    %232 = vector.shape_cast %224 : vector<8x8xf32> to vector<1x8x8xf32>
    %233 = vector.shape_cast %225 : vector<8x8xf32> to vector<1x8x8xf32>
    %234 = vector.shape_cast %226 : vector<8x8xf32> to vector<1x8x8xf32>
    %235 = tpu.concatenate %227, %228, %229, %230, %231, %232, %233, %234 in 0 : vector<1x8x8xf32>, vector<1x8x8xf32>, vector<1x8x8xf32>, vector<1x8x8xf32>, vector<1x8x8xf32>, vector<1x8x8xf32>, vector<1x8x8xf32>, vector<1x8x8xf32> -> vector<8x8x8xf32>
    "tpu.trace_start"() <{level = 10 : i32, message = "bqd,bkd->bqk"}> : () -> ()
    %cst_53 = arith.constant dense<0.000000e+00> : vector<8x8x8xf32>
    %236 = tpu.matmul %201, %218, %cst_53 {dimension_numbers = #tpu.dot_dimension_numbers<[2], [2], [1], [1], [0, 0, 0, 1, 1, 1], [0], [0]>} : vector<8x8x8xf32>, vector<8x8x8xf32>, vector<8x8x8xf32> -> vector<8x8x8xf32>
    "tpu.trace_stop"() : () -> ()
    %cst_54 = arith.constant dense<0xFF800000> : vector<8x8xf32>
    %237 = vector.multi_reduction <maximumf>, %236, %cst_54 [2] : vector<8x8x8xf32> to vector<8x8xf32>
    %238 = vector.shape_cast %237 : vector<8x8xf32> to vector<8x8x1xf32>
    %239 = vector.broadcast %238 : vector<8x8x1xf32> to vector<8x8x8xf32>
    %240 = arith.subf %236, %239 : vector<8x8x8xf32>
    %241 = math.exp %240 : vector<8x8x8xf32>
    %cst_55 = arith.constant dense<0.000000e+00> : vector<8x8xf32>
    %242 = vector.multi_reduction <add>, %241, %cst_55 [2] : vector<8x8x8xf32> to vector<8x8xf32>
    %243 = vector.shape_cast %242 : vector<8x8xf32> to vector<8x8x1xf32>
    %244 = tpu.reciprocal %243 : vector<8x8x1xf32> -> vector<8x8x1xf32>
    %245 = vector.broadcast %244 : vector<8x8x1xf32> to vector<8x8x8xf32>
    %246 = arith.mulf %241, %245 : vector<8x8x8xf32>
    "tpu.trace_start"() <{level = 10 : i32, message = "bqk,bkd->bqd"}> : () -> ()
    %cst_56 = arith.constant dense<0.000000e+00> : vector<8x8x8xf32>
    %247 = tpu.matmul %246, %235, %cst_56 {dimension_numbers = #tpu.dot_dimension_numbers<[2], [1], [1], [2], [0, 0, 0, 1, 1, 2], [0], [0]>} : vector<8x8x8xf32>, vector<8x8x8xf32>, vector<8x8x8xf32> -> vector<8x8x8xf32>
    "tpu.trace_stop"() : () -> ()
    %248 = vector.extract_strided_slice %247 {offsets = [0, 0, 0], sizes = [1, 8, 8], strides = [1, 1, 1]} : vector<8x8x8xf32> to vector<1x8x8xf32>
    %249 = vector.shape_cast %248 : vector<1x8x8xf32> to vector<8x8xf32>
    %250 = vector.extract_strided_slice %247 {offsets = [1, 0, 0], sizes = [1, 8, 8], strides = [1, 1, 1]} : vector<8x8x8xf32> to vector<1x8x8xf32>
    %251 = vector.shape_cast %250 : vector<1x8x8xf32> to vector<8x8xf32>
    %252 = vector.extract_strided_slice %247 {offsets = [2, 0, 0], sizes = [1, 8, 8], strides = [1, 1, 1]} : vector<8x8x8xf32> to vector<1x8x8xf32>
    %253 = vector.shape_cast %252 : vector<1x8x8xf32> to vector<8x8xf32>
    %254 = vector.extract_strided_slice %247 {offsets = [3, 0, 0], sizes = [1, 8, 8], strides = [1, 1, 1]} : vector<8x8x8xf32> to vector<1x8x8xf32>
    %255 = vector.shape_cast %254 : vector<1x8x8xf32> to vector<8x8xf32>
    %256 = tpu.concatenate %249, %251, %253, %255 in 1 : vector<8x8xf32>, vector<8x8xf32>, vector<8x8xf32>, vector<8x8xf32> -> vector<8x32xf32>
    %257 = vector.extract_strided_slice %247 {offsets = [4, 0, 0], sizes = [1, 8, 8], strides = [1, 1, 1]} : vector<8x8x8xf32> to vector<1x8x8xf32>
    %258 = vector.shape_cast %257 : vector<1x8x8xf32> to vector<8x8xf32>
    %259 = vector.extract_strided_slice %247 {offsets = [5, 0, 0], sizes = [1, 8, 8], strides = [1, 1, 1]} : vector<8x8x8xf32> to vector<1x8x8xf32>
    %260 = vector.shape_cast %259 : vector<1x8x8xf32> to vector<8x8xf32>
    %261 = vector.extract_strided_slice %247 {offsets = [6, 0, 0], sizes = [1, 8, 8], strides = [1, 1, 1]} : vector<8x8x8xf32> to vector<1x8x8xf32>
    %262 = vector.shape_cast %261 : vector<1x8x8xf32> to vector<8x8xf32>
    %263 = vector.extract_strided_slice %247 {offsets = [7, 0, 0], sizes = [1, 8, 8], strides = [1, 1, 1]} : vector<8x8x8xf32> to vector<1x8x8xf32>
    %264 = vector.shape_cast %263 : vector<1x8x8xf32> to vector<8x8xf32>
    %265 = tpu.concatenate %258, %260, %262, %264 in 1 : vector<8x8xf32>, vector<8x8xf32>, vector<8x8xf32>, vector<8x8xf32> -> vector<8x32xf32>
    %266 = tpu.concatenate %256, %265 in 0 : vector<8x32xf32>, vector<8x32xf32> -> vector<16x32xf32>
    %cst_57 = arith.constant dense<0.000000e+00> : vector<16x32xf32>
    %267 = tpu.matmul %266, %168, %cst_57 {dimension_numbers = #tpu.dot_dimension_numbers<[1], [0], [0], [1], [0, 0, 1, 1], [], []>} : vector<16x32xf32>, vector<32x32xf32>, vector<16x32xf32> -> vector<16x32xf32>
    %268 = vector.broadcast %172 : vector<1x32xf32> to vector<16x32xf32>
    %269 = arith.addf %267, %268 : vector<16x32xf32>
    %270 = arith.addf %166, %269 : vector<16x32xf32>
    %cst_58 = arith.constant dense<0.000000e+00> : vector<16xf32>
    %271 = vector.multi_reduction <add>, %270, %cst_58 [1] : vector<16x32xf32> to vector<16xf32>
    %272 = vector.shape_cast %271 : vector<16xf32> to vector<16x1xf32>
    %cst_59 = arith.constant 3.200000e+01 : f32
    %273 = vector.broadcast %cst_59 : f32 to vector<16x1xf32>
    %274 = arith.divf %272, %273 : vector<16x1xf32>
    %275 = vector.broadcast %274 : vector<16x1xf32> to vector<16x32xf32>
    %276 = arith.subf %270, %275 : vector<16x32xf32>
    %277 = arith.mulf %276, %276 : vector<16x32xf32>
    %cst_60 = arith.constant dense<0.000000e+00> : vector<16xf32>
    %278 = vector.multi_reduction <add>, %277, %cst_60 [1] : vector<16x32xf32> to vector<16xf32>
    %279 = vector.shape_cast %278 : vector<16xf32> to vector<16x1xf32>
    %cst_61 = arith.constant 3.200000e+01 : f32
    %280 = vector.broadcast %cst_61 : f32 to vector<16x1xf32>
    %281 = arith.divf %279, %280 : vector<16x1xf32>
    %282 = vector.broadcast %274 : vector<16x1xf32> to vector<16x32xf32>
    %283 = arith.subf %270, %282 : vector<16x32xf32>
    %cst_62 = arith.constant 9.99999974E-6 : f32
    %284 = vector.broadcast %cst_62 : f32 to vector<16x1xf32>
    %285 = arith.addf %281, %284 : vector<16x1xf32>
    %286 = math.rsqrt %285 : vector<16x1xf32>
    %287 = vector.broadcast %286 : vector<16x1xf32> to vector<16x32xf32>
    %288 = arith.mulf %283, %287 : vector<16x32xf32>
    %289 = vector.broadcast %173 : vector<1x32xf32> to vector<16x32xf32>
    %290 = arith.mulf %288, %289 : vector<16x32xf32>
    %291 = vector.broadcast %174 : vector<1x32xf32> to vector<16x32xf32>
    %292 = arith.addf %290, %291 : vector<16x32xf32>
    %cst_63 = arith.constant dense<0.000000e+00> : vector<16x64xf32>
    %293 = tpu.matmul %292, %170, %cst_63 {dimension_numbers = #tpu.dot_dimension_numbers<[1], [0], [0], [1], [0, 0, 1, 1], [], []>} : vector<16x32xf32>, vector<32x64xf32>, vector<16x64xf32> -> vector<16x64xf32>
    %294 = vector.broadcast %175 : vector<1x64xf32> to vector<16x64xf32>
    %295 = arith.addf %293, %294 : vector<16x64xf32>
    %cst_64 = arith.constant 0.000000e+00 : f32
    %296 = vector.broadcast %cst_64 : f32 to vector<16x64xf32>
    %297 = arith.maximumf %295, %296 : vector<16x64xf32>
    %cst_65 = arith.constant dense<0.000000e+00> : vector<16x32xf32>
    %298 = tpu.matmul %297, %169, %cst_65 {dimension_numbers = #tpu.dot_dimension_numbers<[1], [0], [0], [1], [0, 0, 1, 1], [], []>} : vector<16x64xf32>, vector<64x32xf32>, vector<16x32xf32> -> vector<16x32xf32>
    %299 = vector.broadcast %176 : vector<1x32xf32> to vector<16x32xf32>
    %300 = arith.addf %298, %299 : vector<16x32xf32>
    %301 = arith.addf %292, %300 : vector<16x32xf32>
    %cst_66 = arith.constant dense<0.000000e+00> : vector<16xf32>
    %302 = vector.multi_reduction <add>, %301, %cst_66 [1] : vector<16x32xf32> to vector<16xf32>
    %303 = vector.shape_cast %302 : vector<16xf32> to vector<16x1xf32>
    %cst_67 = arith.constant 3.200000e+01 : f32
    %304 = vector.broadcast %cst_67 : f32 to vector<16x1xf32>
    %305 = arith.divf %303, %304 : vector<16x1xf32>
    %306 = vector.broadcast %305 : vector<16x1xf32> to vector<16x32xf32>
    %307 = arith.subf %301, %306 : vector<16x32xf32>
    %308 = arith.mulf %307, %307 : vector<16x32xf32>
    %cst_68 = arith.constant dense<0.000000e+00> : vector<16xf32>
    %309 = vector.multi_reduction <add>, %308, %cst_68 [1] : vector<16x32xf32> to vector<16xf32>
    %310 = vector.shape_cast %309 : vector<16xf32> to vector<16x1xf32>
    %cst_69 = arith.constant 3.200000e+01 : f32
    %311 = vector.broadcast %cst_69 : f32 to vector<16x1xf32>
    %312 = arith.divf %310, %311 : vector<16x1xf32>
    %313 = vector.broadcast %305 : vector<16x1xf32> to vector<16x32xf32>
    %314 = arith.subf %301, %313 : vector<16x32xf32>
    %cst_70 = arith.constant 9.99999974E-6 : f32
    %315 = vector.broadcast %cst_70 : f32 to vector<16x1xf32>
    %316 = arith.addf %312, %315 : vector<16x1xf32>
    %317 = math.rsqrt %316 : vector<16x1xf32>
    %318 = vector.broadcast %317 : vector<16x1xf32> to vector<16x32xf32>
    %319 = arith.mulf %314, %318 : vector<16x32xf32>
    %320 = vector.broadcast %177 : vector<1x32xf32> to vector<16x32xf32>
    %321 = arith.mulf %319, %320 : vector<16x32xf32>
    %322 = vector.broadcast %178 : vector<1x32xf32> to vector<16x32xf32>
    %323 = arith.addf %321, %322 : vector<16x32xf32>
    %324 = tpu.iota {dimensions = array<i32: 0>} : vector<2x16xi32>
    %325 = tpu.iota {dimensions = array<i32: 1>} : vector<2x16xi32>
    %c8_i32 = arith.constant 8 : i32
    %326 = vector.broadcast %c8_i32 : i32 to vector<2x16xi32>
    %327 = arith.muli %324, %326 : vector<2x16xi32>
    %328 = arith.cmpi sge, %325, %327 : vector<2x16xi32>
    %c1_i32 = arith.constant 1 : i32
    %329 = vector.broadcast %c1_i32 : i32 to vector<2x16xi32>
    %330 = arith.addi %324, %329 : vector<2x16xi32>
    %c8_i32_71 = arith.constant 8 : i32
    %331 = vector.broadcast %c8_i32_71 : i32 to vector<2x16xi32>
    %332 = arith.muli %330, %331 : vector<2x16xi32>
    %333 = arith.cmpi slt, %325, %332 : vector<2x16xi32>
    %334 = arith.andi %328, %333 : vector<2x16xi1>
    %cst_72 = arith.constant 1.250000e-01 : f32
    %cst_73 = arith.constant 0.000000e+00 : f32
    %335 = vector.broadcast %cst_72 : f32 to vector<2x16xf32>
    %336 = vector.broadcast %cst_73 : f32 to vector<2x16xf32>
    %337 = arith.select %334, %335, %336 : vector<2x16xi1>, vector<2x16xf32>
    %cst_74 = arith.constant dense<0.000000e+00> : vector<2x32xf32>
    %338 = tpu.matmul %337, %323, %cst_74 {dimension_numbers = #tpu.dot_dimension_numbers<[1], [0], [0], [1], [0, 0, 1, 1], [], []>} : vector<2x16xf32>, vector<16x32xf32>, vector<2x32xf32> -> vector<2x32xf32>
    %c0_75 = arith.constant 0 : index
    %c0_76 = arith.constant 0 : index
    %339 = vector.load %arg3[%c0_75, %c0_76] : memref<2x32xf32, #tpu.memory_space<vmem>>, vector<2x32xf32>
    tpu.vector_store %arg3[%c0_75, %c0_76], %338 {strides = array<i32>} : memref<2x32xf32, #tpu.memory_space<vmem>>, vector<2x32xf32>,
    return
  }
}

</mosaic_0001>

<llo_original>
// kernel: sequence_encoder_forward.1
$region0: #{sequence_encoder_forward.1}
  #allocation0 [shape = 'u32[]', space=smem, size = 0x4, offset = 0x4, fixed_abs, tag = 'smem constant byte address 0x4 - core index']
  #allocation1 [shape = 'u32[144,128]{1,0:T(1,128)}', space=vmem, size = 0x12000, scoped, tag = 'internal scratch']
  %s0 = inlined_call_operand.vmem [shape: s32[16,1], index: 0, kind: input, shape index: {}]
  %s1 = inlined_call_operand.hbm [shape: f32[256,128], index: 1, kind: input, shape index: {}]
  %s2 = inlined_call_operand.vmem [shape: f32[16,128], index: 2, kind: input, shape index: {}]
  %s3 = inlined_call_operand.hbm [shape: f32[2,32], index: 3, kind: output, shape index: {}]
  %s4 = sld [smem:[#allocation0]]
  $region26: #{sequence_encoder_forward.1} parent=0
    _
  %s6 = ssub.s32 1, %s4
  %s7 = scalar_select 0, %s6, %s4
  $region1: #{sequence_encoder_forward.1} parent=0
    #allocation2 [shape = 'u8[131072]{0}', space=vmem, size = 0x20000, scoped, tag = 'input window, operand 1, single buffered']
    #allocation3 [shape = 's32[1]{0}', space=sflag, size = 0x4, scoped, tag = 'scoped memory for sequence_encoder_forward.1']
    #allocation4 [shape = 's32[1]{0}', space=sflag, size = 0x4, scoped, tag = 'scoped memory for sequence_encoder_forward.1']
    #allocation5 [shape = 'u8[1024]{0}', space=vmem, size = 0x400, scoped, tag = 'output window, operand 0, single buffered']
    %8 = vsyncpa [#allocation3], 0
    %9 = vsyncpa [#allocation4], 0
    // Predicated region
    $region2: #{sequence_encoder_forward.1} parent=1 // pred_check
      _
    $region3: #{sequence_encoder_forward.1} parent=1 // pred_check_branch
      %11 = sbr.rel (0) target = $region5
    $region4: #{sequence_encoder_forward.1} parent=1 // pred_region
      _
    $region5: #{sequence_encoder_forward.1} parent=1 // pred_fallthru
      _
    // Predicated region
    $region6: #{sequence_encoder_forward.1} parent=1 // pred_check
      _
    $region7: #{sequence_encoder_forward.1} parent=1 // pred_check_branch
      %13 = sbr.rel (0) target = $region9
    $region8: #{sequence_encoder_forward.1} parent=1 // pred_region
      %s15 = ssub.s32 4096, 4096
      %16 = vsyncadd [#allocation3], %s15
      %s17 = sshll.u32 [#allocation2], 4
      %s18 = int_to_ptr.vmem [resolvable:$true] %s17
      %23 = dma.hbm_to_vmem [thread:$0]  %s1, 4096, %s18, [#allocation3], 128, 128, 8
    $region9: #{sequence_encoder_forward.1} parent=1 // pred_fallthru
      _
    // Predicated region
    $region10: #{sequence_encoder_forward.1} parent=1 // pred_check
      _
    $region11: #{sequence_encoder_forward.1} parent=1 // pred_check_branch
      %25 = sbr.rel (0) target = $region13
    $region12: #{sequence_encoder_forward.1} parent=1 // pred_region
      _
    $region13: #{sequence_encoder_forward.1} parent=1 // pred_fallthru
      _
    // Predicated region
    $region14: #{sequence_encoder_forward.1} parent=1 // pred_check
      _
    $region15: #{sequence_encoder_forward.1} parent=1 // pred_check_branch
      %27 = sbr.rel (0) target = $region17
    $region16: #{sequence_encoder_forward.1} parent=1 // pred_region
      %28 = dma.done [#allocation3], 4096
    $region17: #{sequence_encoder_forward.1} parent=1 // pred_fallthru
      _
    %v29 = vld [vmem:[#allocation2] sm:$0xff]
    %v30 = vld [vmem:[#allocation2 + $0x8] sm:$0xff]
    %v31 = vld [vmem:[#allocation2 + $0x10] sm:$0xff]
    %v32 = vld [vmem:[#allocation2 + $0x18] sm:$0xff]
    %v33 = vld [vmem:[#allocation2 + $0x20] sm:$0xff]
    %v34 = vld [vmem:[#allocation2 + $0x28] sm:$0xff]
    %v35 = vld [vmem:[#allocation2 + $0x30] sm:$0xff]
    %v36 = vld [vmem:[#allocation2 + $0x38] sm:$0xff]
    %v37 = vld [vmem:[%s0] sm:$0xff]
    %v38 = vld [vmem:[%s0 + $0x8] sm:$0xff]
    %v39 = vlaneseq
    %v40 = vand.u32 %v39, 127
    %41 = vset.pattern.permute.xlu0 0
    %42 = vperm.xlu0 %41, %v37
    %v43 = vpop.permute.xlu0 %42
    %44 = vset.pattern.permute.xlu0 0
    %45 = vperm.xlu0 %44, %v38
    %v46 = vpop.permute.xlu0 %45
    %vm47 = vcmp.eq.s32.totalorder %v43, %v40
    %vm48 = vcmp.eq.s32.totalorder %v46, %v40
    %v49 = vsel %vm47, 1, 0
    %v50 = vsel %vm48, 1, 0
    %v51 = vcvt.s32.f32 %v49
    %v52 = vcvt.s32.f32 %v50
    %55 = vrot.lane.b32.xlu0 %v29, 96
    %v56 = vpop.permute.xlu0 %55
    %57 = vrot.lane.b32.xlu0 %v30, 96
    %v58 = vpop.permute.xlu0 %57
    %vm61 = vcmask 523264
    %v63 = vsel %vm61, %v51, 0
    %v66 = vsel %vm61, %v52, 0
    %68 = vmatprep.subr.mxu0 0.0
    %69 = vmatpush1.msra.mxu0 %v29
    %70 = vmatprep.subr.mxu0 0.0
    %71 = vmatpush1.msra.mxu0 %v30
    %72 = vmatprep.subr.mxu0 0.0
    %73 = vmatpush1.msra.mxu0 %v31
    %74 = vmatprep.subr.mxu0 0.0
    %75 = vmatpush1.msra.mxu0 %v32
    %76 = vmatprep.subr.mxu0 0.0
    %77 = vmatpush1.msra.mxu0 %v33
    %78 = vmatprep.subr.mxu0 0.0
    %79 = vmatpush1.msra.mxu0 %v34
    %80 = vmatprep.subr.mxu0 0.0
    %81 = vmatpush1.msra.mxu0 %v35
    %82 = vmatprep.subr.mxu0 0.0
    %83 = vmatpush1.msra.mxu0 %v36
    %84 = vmatprep.subr.mxu0 0.0
    %85 = vmatpush1.msra.mxu0 0.0
    %86 = vmatprep.subr.mxu0 0.0
    %87 = vmatpush1.msra.mxu0 0.0
    %88 = vmatprep.subr.mxu0 0.0
    %89 = vmatpush1.msra.mxu0 0.0
    %90 = vmatprep.subr.mxu0 0.0
    %91 = vmatpush1.msra.mxu0 0.0
    %92 = vmatprep.subr.mxu0 0.0
    %93 = vmatpush1.msra.mxu0 0.0
    %94 = vmatprep.subr.mxu0 0.0
    %95 = vmatpush1.msra.mxu0 0.0
    %96 = vmatprep.subr.mxu0 0.0
    %97 = vmatpush1.msra.mxu0 0.0
    %98 = vmatprep.subr.mxu0 0.0
    %99 = vmatpush1.msra.mxu0 0.0
    %100 = vmatprep.subr.mxu0 0.0
    %101 = vmatpush1.msra.mxu0 0.0
    %102 = vmatprep.subr.mxu0 0.0
    %103 = vmatpush1.msra.mxu0 0.0
    %104 = vmatprep.subr.mxu0 0.0
    %105 = vmatpush1.msra.mxu0 0.0
    %106 = vmatprep.subr.mxu0 0.0
    %107 = vmatpush1.msra.mxu0 0.0
    %108 = vmatprep.subr.mxu0 0.0
    %109 = vmatpush1.msra.mxu0 0.0
    %110 = vmatprep.subr.mxu0 0.0
    %111 = vmatpush1.msra.mxu0 0.0
    %112 = vmatprep.subr.mxu0 0.0
    %113 = vmatpush1.msra.mxu0 0.0
    %114 = vmatprep.subr.mxu0 0.0
    %115 = vmatpush1.msra.mxu0 0.0
    %116 = vmatprep.subr.mxu0 0.0
    %117 = vmatpush1.msra.mxu0 0.0
    %118 = vmatprep.subr.mxu0 0.0
    %119 = vmatpush1.msra.mxu0 0.0
    %120 = vmatprep.subr.mxu0 0.0
    %121 = vmatpush1.msra.mxu0 0.0
    %122 = vmatprep.subr.mxu0 0.0
    %123 = vmatpush1.msra.mxu0 0.0
    %124 = vmatprep.subr.mxu0 0.0
    %125 = vmatpush1.msra.mxu0 0.0
    %126 = vmatprep.subr.mxu0 0.0
    %127 = vmatpush1.msra.mxu0 0.0
    %128 = vmatprep.subr.mxu0 0.0
    %129 = vmatpush1.msra.mxu0 0.0
    %130 = vmatprep.subr.mxu0 0.0
    %131 = vmatpush1.msra.mxu0 0.0
    %132 = vmatprep.mubr.f32.mxu0 0.0
    %133 = vmatmul.mubr.f32.gmra.mrb[0].mxu0 %v63
    %v134 = vpop.f32.mrb[0].mxu0
    %v135 = vadd.f32 %v56, %v134
    %v136 = vpop.f32.mrb[0].mxu0
    %137 = vmatprep.mubr.f32.mxu0 0.0
    %138 = vmatmul.mubr.f32.gmra.mrb[0].mxu0 %v66
    %v139 = vpop.f32.mrb[0].mxu0
    %v140 = vadd.f32 %v58, %v139
    %v141 = vpop.f32.mrb[0].mxu0
    %142 = vdwg.mxu0
    %v143 = vld [vmem:[#allocation2 + $0x40] sm:$0xff]
    %v144 = vld [vmem:[#allocation2 + $0x48] sm:$0xff]
    %v145 = vld [vmem:[#allocation2 + $0x50] sm:$0xff]
    %v146 = vld [vmem:[#allocation2 + $0x58] sm:$0xff]
    %v147 = vld [vmem:[#allocation2 + $0x60] sm:$0xff]
    %v148 = vld [vmem:[#allocation2 + $0x68] sm:$0xff]
    %v149 = vld [vmem:[#allocation2 + $0x70] sm:$0xff]
    %v150 = vld [vmem:[#allocation2 + $0x78] sm:$0xff]
    %v151 = vld [vmem:[#allocation2 + $0x80] sm:$0xff]
    %v152 = vld [vmem:[#allocation2 + $0x88] sm:$0xff]
    %v153 = vld [vmem:[#allocation2 + $0x90] sm:$0xff]
    %v154 = vld [vmem:[#allocation2 + $0x98] sm:$0xff]
    %v155 = vld [vmem:[%s2] sm:$0x1]
    %v156 = vld [vmem:[%s2 + $0x1] sm:$0x1]
    %v157 = vld [vmem:[%s2 + $0x2] sm:$0x1]
    %v158 = vld [vmem:[%s2 + $0x3] sm:$0x1]
    %v159 = vld [vmem:[%s2 + $0x4] sm:$0x1]
    %v160 = vld [vmem:[%s2 + $0x5] sm:$0x1]
    %v161 = vld [vmem:[%s2 + $0x6] sm:$0x1]
    %v162 = vld [vmem:[%s2 + $0x7] sm:$0x1]
    %v163 = vlaneseq
    %v164 = vshrl.u32 %v163, 7
    %v165 = vsub.s32 0, %v164
    %v166 = vrot.slane %v155, %v165
    %vm167 = vcmask 261120
    %v169 = vsel %vm167, %v135, 0
    %v172 = vsel %vm167, %v140, 0
    %174 = vmatprep.subr.mxu0 0.0
    %175 = vmatpush1.msra.mxu0 %v143
    %176 = vmatprep.subr.mxu0 0.0
    %177 = vmatpush1.msra.mxu0 %v144
    %178 = vmatprep.subr.mxu0 0.0
    %179 = vmatpush1.msra.mxu0 %v145
    %180 = vmatprep.subr.mxu0 0.0
    %181 = vmatpush1.msra.mxu0 %v146
    %182 = vmatprep.subr.mxu0 0.0
    %183 = vmatpush1.msra.mxu0 0.0
    %184 = vmatprep.subr.mxu0 0.0
    %185 = vmatpush1.msra.mxu0 0.0
    %186 = vmatprep.subr.mxu0 0.0
    %187 = vmatpush1.msra.mxu0 0.0
    %188 = vmatprep.subr.mxu0 0.0
    %189 = vmatpush1.msra.mxu0 0.0
    %190 = vmatprep.subr.mxu0 0.0
    %191 = vmatpush1.msra.mxu0 0.0
    %192 = vmatprep.subr.mxu0 0.0
    %193 = vmatpush1.msra.mxu0 0.0
    %194 = vmatprep.subr.mxu0 0.0
    %195 = vmatpush1.msra.mxu0 0.0
    %196 = vmatprep.subr.mxu0 0.0
    %197 = vmatpush1.msra.mxu0 0.0
    %198 = vmatprep.subr.mxu0 0.0
    %199 = vmatpush1.msra.mxu0 0.0
    %200 = vmatprep.subr.mxu0 0.0
    %201 = vmatpush1.msra.mxu0 0.0
    %202 = vmatprep.subr.mxu0 0.0
    %203 = vmatpush1.msra.mxu0 0.0
    %204 = vmatprep.subr.mxu0 0.0
    %205 = vmatpush1.msra.mxu0 0.0
    %206 = vmatprep.subr.mxu0 0.0
    %207 = vmatpush1.msra.mxu0 0.0
    %208 = vmatprep.subr.mxu0 0.0
    %209 = vmatpush1.msra.mxu0 0.0
    %210 = vmatprep.subr.mxu0 0.0
    %211 = vmatpush1.msra.mxu0 0.0
    %212 = vmatprep.subr.mxu0 0.0
    %213 = vmatpush1.msra.mxu0 0.0
    %214 = vmatprep.subr.mxu0 0.0
    %215 = vmatpush1.msra.mxu0 0.0
    %216 = vmatprep.subr.mxu0 0.0
    %217 = vmatpush1.msra.mxu0 0.0
    %218 = vmatprep.subr.mxu0 0.0
    %219 = vmatpush1.msra.mxu0 0.0
    %220 = vmatprep.subr.mxu0 0.0
    %221 = vmatpush1.msra.mxu0 0.0
    %222 = vmatprep.subr.mxu0 0.0
    %223 = vmatpush1.msra.mxu0 0.0
    %224 = vmatprep.subr.mxu0 0.0
    %225 = vmatpush1.msra.mxu0 0.0
    %226 = vmatprep.subr.mxu0 0.0
    %227 = vmatpush1.msra.mxu0 0.0
    %228 = vmatprep.subr.mxu0 0.0
    %229 = vmatpush1.msra.mxu0 0.0
    %230 = vmatprep.subr.mxu0 0.0
    %231 = vmatpush1.msra.mxu0 0.0
    %232 = vmatprep.subr.mxu0 0.0
    %233 = vmatpush1.msra.mxu0 0.0
    %234 = vmatprep.subr.mxu0 0.0
    %235 = vmatpush1.msra.mxu0 0.0
    %236 = vmatprep.subr.mxu0 0.0
    %237 = vmatpush1.msra.mxu0 0.0
    %238 = vmatprep.mubr.f32.mxu0 0.0
    %239 = vmatmul.mubr.f32.gmra.mrb[0].mxu0 %v169
    %v240 = vpop.f32.mrb[0].mxu0
    %v241 = vadd.f32 %v166, %v240
    %v242 = vpop.f32.mrb[0].mxu0
    %243 = vmatprep.mubr.f32.mxu0 0.0
    %244 = vmatmul.mubr.f32.gmra.mrb[0].mxu0 %v172
    %v245 = vpop.f32.mrb[0].mxu0
    %v246 = vadd.f32 %v166, %v245
    %v247 = vpop.f32.mrb[0].mxu0
    %248 = vdwg.mxu0
    %250 = vrot.lane.b32.xlu0 %v241, 120
    %v251 = vpop.permute.xlu0 %250
    %252 = vrot.lane.b32.xlu0 %v241, 112
    %v253 = vpop.permute.xlu0 %252
    %254 = vrot.lane.b32.xlu0 %v241, 104
    %v255 = vpop.permute.xlu0 %254
    %257 = vrot.lane.b32.xlu0 %v246, 120
    %v258 = vpop.permute.xlu0 %257
    %259 = vrot.lane.b32.xlu0 %v246, 112
    %v260 = vpop.permute.xlu0 %259
    %261 = vrot.lane.b32.xlu0 %v246, 104
    %v262 = vpop.permute.xlu0 %261
    %263 = vrot.lane.b32.xlu0 %v241, 96
    %v264 = vpop.permute.xlu0 %263
    %vm265 = vcmask 64512
    %v266 = vsel %vm265, %v241, 0
    %v268 = vsel %vm265, %v264, 0
    %270 = vmatprep.subr.mxu0 0.0
    %271 = vmatpush1.xpose.msra.mxu0 %v268
    %272 = vmatprep.subr.mxu0 0.0
    %273 = vmatpush1.xpose.msra.mxu0 0.0
    %274 = vmatprep.subr.mxu0 0.0
    %275 = vmatpush1.xpose.msra.mxu0 0.0
    %276 = vmatprep.subr.mxu0 0.0
    %277 = vmatpush1.xpose.msra.mxu0 0.0
    %278 = vmatprep.subr.mxu0 0.0
    %279 = vmatpush1.xpose.msra.mxu0 0.0
    %280 = vmatprep.subr.mxu0 0.0
    %281 = vmatpush1.xpose.msra.mxu0 0.0
    %282 = vmatprep.subr.mxu0 0.0
    %283 = vmatpush1.xpose.msra.mxu0 0.0
    %284 = vmatprep.subr.mxu0 0.0
    %285 = vmatpush1.xpose.msra.mxu0 0.0
    %286 = vmatprep.subr.mxu0 0.0
    %287 = vmatpush1.xpose.msra.mxu0 0.0
    %288 = vmatprep.subr.mxu0 0.0
    %289 = vmatpush1.xpose.msra.mxu0 0.0
    %290 = vmatprep.subr.mxu0 0.0
    %291 = vmatpush1.xpose.msra.mxu0 0.0
    %292 = vmatprep.subr.mxu0 0.0
    %293 = vmatpush1.xpose.msra.mxu0 0.0
    %294 = vmatprep.subr.mxu0 0.0
    %295 = vmatpush1.xpose.msra.mxu0 0.0
    %296 = vmatprep.subr.mxu0 0.0
    %297 = vmatpush1.xpose.msra.mxu0 0.0
    %298 = vmatprep.subr.mxu0 0.0
    %299 = vmatpush1.xpose.msra.mxu0 0.0
    %300 = vmatprep.subr.mxu0 0.0
    %301 = vmatpush1.xpose.msra.mxu0 0.0
    %302 = vmatprep.subr.mxu0 0.0
    %303 = vmatpush1.xpose.msra.mxu0 0.0
    %304 = vmatprep.subr.mxu0 0.0
    %305 = vmatpush1.xpose.msra.mxu0 0.0
    %306 = vmatprep.subr.mxu0 0.0
    %307 = vmatpush1.xpose.msra.mxu0 0.0
    %308 = vmatprep.subr.mxu0 0.0
    %309 = vmatpush1.xpose.msra.mxu0 0.0
    %310 = vmatprep.subr.mxu0 0.0
    %311 = vmatpush1.xpose.msra.mxu0 0.0
    %312 = vmatprep.subr.mxu0 0.0
    %313 = vmatpush1.xpose.msra.mxu0 0.0
    %314 = vmatprep.subr.mxu0 0.0
    %315 = vmatpush1.xpose.msra.mxu0 0.0
    %316 = vmatprep.subr.mxu0 0.0
    %317 = vmatpush1.xpose.msra.mxu0 0.0
    %318 = vmatprep.subr.mxu0 0.0
    %319 = vmatpush1.xpose.msra.mxu0 0.0
    %320 = vmatprep.subr.mxu0 0.0
    %321 = vmatpush1.xpose.msra.mxu0 0.0
    %322 = vmatprep.subr.mxu0 0.0
    %323 = vmatpush1.xpose.msra.mxu0 0.0
    %324 = vmatprep.subr.mxu0 0.0
    %325 = vmatpush1.xpose.msra.mxu0 0.0
    %326 = vmatprep.subr.mxu0 0.0
    %327 = vmatpush1.xpose.msra.mxu0 0.0
    %328 = vmatprep.subr.mxu0 0.0
    %329 = vmatpush1.xpose.msra.mxu0 0.0
    %330 = vmatprep.subr.mxu0 0.0
    %331 = vmatpush1.xpose.msra.mxu0 0.0
    %332 = vmatprep.subr.mxu0 0.0
    %333 = vmatpush1.xpose.msra.mxu0 0.0
    %334 = vmatprep.mubr.f32.mxu0 0.0
    %335 = vmatmul.mubr.f32.gmra.mrb[0].mxu0 %v266
    %v336 = vpop.f32.mrb[0].mxu0
    %v337 = vadd.f32 0.0, %v336
    %v338 = vpop.f32.mrb[0].mxu0
    %339 = vdwg.mxu0
    %340 = vrot.lane.b32.xlu0 %v251, 96
    %v341 = vpop.permute.xlu0 %340
    %v342 = vsel %vm265, %v251, 0
    %v344 = vsel %vm265, %v341, 0
    %346 = vmatprep.subr.mxu0 0.0
    %347 = vmatpush1.xpose.msra.mxu0 %v344
    %348 = vmatprep.subr.mxu0 0.0
    %349 = vmatpush1.xpose.msra.mxu0 0.0
    %350 = vmatprep.subr.mxu0 0.0
    %351 = vmatpush1.xpose.msra.mxu0 0.0
    %352 = vmatprep.subr.mxu0 0.0
    %353 = vmatpush1.xpose.msra.mxu0 0.0
    %354 = vmatprep.subr.mxu0 0.0
    %355 = vmatpush1.xpose.msra.mxu0 0.0
    %356 = vmatprep.subr.mxu0 0.0
    %357 = vmatpush1.xpose.msra.mxu0 0.0
    %358 = vmatprep.subr.mxu0 0.0
    %359 = vmatpush1.xpose.msra.mxu0 0.0
    %360 = vmatprep.subr.mxu0 0.0
    %361 = vmatpush1.xpose.msra.mxu0 0.0
    %362 = vmatprep.subr.mxu0 0.0
    %363 = vmatpush1.xpose.msra.mxu0 0.0
    %364 = vmatprep.subr.mxu0 0.0
    %365 = vmatpush1.xpose.msra.mxu0 0.0
    %366 = vmatprep.subr.mxu0 0.0
    %367 = vmatpush1.xpose.msra.mxu0 0.0
    %368 = vmatprep.subr.mxu0 0.0
    %369 = vmatpush1.xpose.msra.mxu0 0.0
    %370 = vmatprep.subr.mxu0 0.0
    %371 = vmatpush1.xpose.msra.mxu0 0.0
    %372 = vmatprep.subr.mxu0 0.0
    %373 = vmatpush1.xpose.msra.mxu0 0.0
    %374 = vmatprep.subr.mxu0 0.0
    %375 = vmatpush1.xpose.msra.mxu0 0.0
    %376 = vmatprep.subr.mxu0 0.0
    %377 = vmatpush1.xpose.msra.mxu0 0.0
    %378 = vmatprep.subr.mxu0 0.0
    %379 = vmatpush1.xpose.msra.mxu0 0.0
    %380 = vmatprep.subr.mxu0 0.0
    %381 = vmatpush1.xpose.msra.mxu0 0.0
    %382 = vmatprep.subr.mxu0 0.0
    %383 = vmatpush1.xpose.msra.mxu0 0.0
    %384 = vmatprep.subr.mxu0 0.0
    %385 = vmatpush1.xpose.msra.mxu0 0.0
    %386 = vmatprep.subr.mxu0 0.0
    %387 = vmatpush1.xpose.msra.mxu0 0.0
    %388 = vmatprep.subr.mxu0 0.0
    %389 = vmatpush1.xpose.msra.mxu0 0.0
    %390 = vmatprep.subr.mxu0 0.0
    %391 = vmatpush1.xpose.msra.mxu0 0.0
    %392 = vmatprep.subr.mxu0 0.0
    %393 = vmatpush1.xpose.msra.mxu0 0.0
    %394 = vmatprep.subr.mxu0 0.0
    %395 = vmatpush1.xpose.msra.mxu0 0.0
    %396 = vmatprep.subr.mxu0 0.0
    %397 = vmatpush1.xpose.msra.mxu0 0.0
    %398 = vmatprep.subr.mxu0 0.0
    %399 = vmatpush1.xpose.msra.mxu0 0.0
    %400 = vmatprep.subr.mxu0 0.0
    %401 = vmatpush1.xpose.msra.mxu0 0.0
    %402 = vmatprep.subr.mxu0 0.0
    %403 = vmatpush1.xpose.msra.mxu0 0.0
    %404 = vmatprep.subr.mxu0 0.0
    %405 = vmatpush1.xpose.msra.mxu0 0.0
    %406 = vmatprep.subr.mxu0 0.0
    %407 = vmatpush1.xpose.msra.mxu0 0.0
    %408 = vmatprep.subr.mxu0 0.0
    %409 = vmatpush1.xpose.msra.mxu0 0.0
    %410 = vmatprep.mubr.f32.mxu0 0.0
    %411 = vmatmul.mubr.f32.gmra.mrb[0].mxu0 %v342
    %v412 = vpop.f32.mrb[0].mxu0
    %v413 = vadd.f32 0.0, %v412
    %v414 = vpop.f32.mrb[0].mxu0
    %415 = vdwg.mxu0
    %416 = vrot.lane.b32.xlu0 %v253, 96
    %v417 = vpop.permute.xlu0 %416
    %v418 = vsel %vm265, %v253, 0
    %v420 = vsel %vm265, %v417, 0
    %422 = vmatprep.subr.mxu0 0.0
    %423 = vmatpush1.xpose.msra.mxu0 %v420
    %424 = vmatprep.subr.mxu0 0.0
    %425 = vmatpush1.xpose.msra.mxu0 0.0
    %426 = vmatprep.subr.mxu0 0.0
    %427 = vmatpush1.xpose.msra.mxu0 0.0
    %428 = vmatprep.subr.mxu0 0.0
    %429 = vmatpush1.xpose.msra.mxu0 0.0
    %430 = vmatprep.subr.mxu0 0.0
    %431 = vmatpush1.xpose.msra.mxu0 0.0
    %432 = vmatprep.subr.mxu0 0.0
    %433 = vmatpush1.xpose.msra.mxu0 0.0
    %434 = vmatprep.subr.mxu0 0.0
    %435 = vmatpush1.xpose.msra.mxu0 0.0
    %436 = vmatprep.subr.mxu0 0.0
    %437 = vmatpush1.xpose.msra.mxu0 0.0
    %438 = vmatprep.subr.mxu0 0.0
    %439 = vmatpush1.xpose.msra.mxu0 0.0
    %440 = vmatprep.subr.mxu0 0.0
    %441 = vmatpush1.xpose.msra.mxu0 0.0
    %442 = vmatprep.subr.mxu0 0.0
    %443 = vmatpush1.xpose.msra.mxu0 0.0
    %444 = vmatprep.subr.mxu0 0.0
    %445 = vmatpush1.xpose.msra.mxu0 0.0
    %446 = vmatprep.subr.mxu0 0.0
    %447 = vmatpush1.xpose.msra.mxu0 0.0
    %448 = vmatprep.subr.mxu0 0.0
    %449 = vmatpush1.xpose.msra.mxu0 0.0
    %450 = vmatprep.subr.mxu0 0.0
    %451 = vmatpush1.xpose.msra.mxu0 0.0
    %452 = vmatprep.subr.mxu0 0.0
    %453 = vmatpush1.xpose.msra.mxu0 0.0
    %454 = vmatprep.subr.mxu0 0.0
    %455 = vmatpush1.xpose.msra.mxu0 0.0
    %456 = vmatprep.subr.mxu0 0.0
    %457 = vmatpush1.xpose.msra.mxu0 0.0
    %458 = vmatprep.subr.mxu0 0.0
    %459 = vmatpush1.xpose.msra.mxu0 0.0
    %460 = vmatprep.subr.mxu0 0.0
    %461 = vmatpush1.xpose.msra.mxu0 0.0
    %462 = vmatprep.subr.mxu0 0.0
    %463 = vmatpush1.xpose.msra.mxu0 0.0
    %464 = vmatprep.subr.mxu0 0.0
    %465 = vmatpush1.xpose.msra.mxu0 0.0
    %466 = vmatprep.subr.mxu0 0.0
    %467 = vmatpush1.xpose.msra.mxu0 0.0
    %468 = vmatprep.subr.mxu0 0.0
    %469 = vmatpush1.xpose.msra.mxu0 0.0
    %470 = vmatprep.subr.mxu0 0.0
    %471 = vmatpush1.xpose.msra.mxu0 0.0
    %472 = vmatprep.subr.mxu0 0.0
    %473 = vmatpush1.xpose.msra.mxu0 0.0
    %474 = vmatprep.subr.mxu0 0.0
    %475 = vmatpush1.xpose.msra.mxu0 0.0
    %476 = vmatprep.subr.mxu0 0.0
    %477 = vmatpush1.xpose.msra.mxu0 0.0
    %478 = vmatprep.subr.mxu0 0.0
    %479 = vmatpush1.xpose.msra.mxu0 0.0
    %480 = vmatprep.subr.mxu0 0.0
    %481 = vmatpush1.xpose.msra.mxu0 0.0
    %482 = vmatprep.subr.mxu0 0.0
    %483 = vmatpush1.xpose.msra.mxu0 0.0
    %484 = vmatprep.subr.mxu0 0.0
    %485 = vmatpush1.xpose.msra.mxu0 0.0
    %486 = vmatprep.mubr.f32.mxu0 0.0
    %487 = vmatmul.mubr.f32.gmra.mrb[0].mxu0 %v418
    %v488 = vpop.f32.mrb[0].mxu0
    %v489 = vadd.f32 0.0, %v488
    %v490 = vpop.f32.mrb[0].mxu0
    %491 = vdwg.mxu0
    %492 = vrot.lane.b32.xlu0 %v255, 96
    %v493 = vpop.permute.xlu0 %492
    %v494 = vsel %vm265, %v255, 0
    %v496 = vsel %vm265, %v493, 0
    %498 = vmatprep.subr.mxu0 0.0
    %499 = vmatpush1.xpose.msra.mxu0 %v496
    %500 = vmatprep.subr.mxu0 0.0
    %501 = vmatpush1.xpose.msra.mxu0 0.0
    %502 = vmatprep.subr.mxu0 0.0
    %503 = vmatpush1.xpose.msra.mxu0 0.0
    %504 = vmatprep.subr.mxu0 0.0
    %505 = vmatpush1.xpose.msra.mxu0 0.0
    %506 = vmatprep.subr.mxu0 0.0
    %507 = vmatpush1.xpose.msra.mxu0 0.0
    %508 = vmatprep.subr.mxu0 0.0
    %509 = vmatpush1.xpose.msra.mxu0 0.0
    %510 = vmatprep.subr.mxu0 0.0
    %511 = vmatpush1.xpose.msra.mxu0 0.0
    %512 = vmatprep.subr.mxu0 0.0
    %513 = vmatpush1.xpose.msra.mxu0 0.0
    %514 = vmatprep.subr.mxu0 0.0
    %515 = vmatpush1.xpose.msra.mxu0 0.0
    %516 = vmatprep.subr.mxu0 0.0
    %517 = vmatpush1.xpose.msra.mxu0 0.0
    %518 = vmatprep.subr.mxu0 0.0
    %519 = vmatpush1.xpose.msra.mxu0 0.0
    %520 = vmatprep.subr.mxu0 0.0
    %521 = vmatpush1.xpose.msra.mxu0 0.0
    %522 = vmatprep.subr.mxu0 0.0
    %523 = vmatpush1.xpose.msra.mxu0 0.0
    %524 = vmatprep.subr.mxu0 0.0
    %525 = vmatpush1.xpose.msra.mxu0 0.0
    %526 = vmatprep.subr.mxu0 0.0
    %527 = vmatpush1.xpose.msra.mxu0 0.0
    %528 = vmatprep.subr.mxu0 0.0
    %529 = vmatpush1.xpose.msra.mxu0 0.0
    %530 = vmatprep.subr.mxu0 0.0
    %531 = vmatpush1.xpose.msra.mxu0 0.0
    %532 = vmatprep.subr.mxu0 0.0
    %533 = vmatpush1.xpose.msra.mxu0 0.0
    %534 = vmatprep.subr.mxu0 0.0
    %535 = vmatpush1.xpose.msra.mxu0 0.0
    %536 = vmatprep.subr.mxu0 0.0
    %537 = vmatpush1.xpose.msra.mxu0 0.0
    %538 = vmatprep.subr.mxu0 0.0
    %539 = vmatpush1.xpose.msra.mxu0 0.0
    %540 = vmatprep.subr.mxu0 0.0
    %541 = vmatpush1.xpose.msra.mxu0 0.0
    %542 = vmatprep.subr.mxu0 0.0
    %543 = vmatpush1.xpose.msra.mxu0 0.0
    %544 = vmatprep.subr.mxu0 0.0
    %545 = vmatpush1.xpose.msra.mxu0 0.0
    %546 = vmatprep.subr.mxu0 0.0
    %547 = vmatpush1.xpose.msra.mxu0 0.0
    %548 = vmatprep.subr.mxu0 0.0
    %549 = vmatpush1.xpose.msra.mxu0 0.0
    %550 = vmatprep.subr.mxu0 0.0
    %551 = vmatpush1.xpose.msra.mxu0 0.0
    %552 = vmatprep.subr.mxu0 0.0
    %553 = vmatpush1.xpose.msra.mxu0 0.0
    %554 = vmatprep.subr.mxu0 0.0
    %555 = vmatpush1.xpose.msra.mxu0 0.0
    %556 = vmatprep.subr.mxu0 0.0
    %557 = vmatpush1.xpose.msra.mxu0 0.0
    %558 = vmatprep.subr.mxu0 0.0
    %559 = vmatpush1.xpose.msra.mxu0 0.0
    %560 = vmatprep.subr.mxu0 0.0
    %561 = vmatpush1.xpose.msra.mxu0 0.0
    %562 = vmatprep.mubr.f32.mxu0 0.0
    %563 = vmatmul.mubr.f32.gmra.mrb[0].mxu0 %v494
    %v564 = vpop.f32.mrb[0].mxu0
    %v565 = vadd.f32 0.0, %v564
    %v566 = vpop.f32.mrb[0].mxu0
    %567 = vdwg.mxu0
    %568 = vrot.lane.b32.xlu0 %v246, 96
    %v569 = vpop.permute.xlu0 %568
    %v570 = vsel %vm265, %v246, 0
    %v572 = vsel %vm265, %v569, 0
    %574 = vmatprep.subr.mxu0 0.0
    %575 = vmatpush1.xpose.msra.mxu0 %v572
    %576 = vmatprep.subr.mxu0 0.0
    %577 = vmatpush1.xpose.msra.mxu0 0.0
    %578 = vmatprep.subr.mxu0 0.0
    %579 = vmatpush1.xpose.msra.mxu0 0.0
    %580 = vmatprep.subr.mxu0 0.0
    %581 = vmatpush1.xpose.msra.mxu0 0.0
    %582 = vmatprep.subr.mxu0 0.0
    %583 = vmatpush1.xpose.msra.mxu0 0.0
    %584 = vmatprep.subr.mxu0 0.0
    %585 = vmatpush1.xpose.msra.mxu0 0.0
    %586 = vmatprep.subr.mxu0 0.0
    %587 = vmatpush1.xpose.msra.mxu0 0.0
    %588 = vmatprep.subr.mxu0 0.0
    %589 = vmatpush1.xpose.msra.mxu0 0.0
    %590 = vmatprep.subr.mxu0 0.0
    %591 = vmatpush1.xpose.msra.mxu0 0.0
    %592 = vmatprep.subr.mxu0 0.0
    %593 = vmatpush1.xpose.msra.mxu0 0.0
    %594 = vmatprep.subr.mxu0 0.0
    %595 = vmatpush1.xpose.msra.mxu0 0.0
    %596 = vmatprep.subr.mxu0 0.0
    %597 = vmatpush1.xpose.msra.mxu0 0.0
    %598 = vmatprep.subr.mxu0 0.0
    %599 = vmatpush1.xpose.msra.mxu0 0.0
    %600 = vmatprep.subr.mxu0 0.0
    %601 = vmatpush1.xpose.msra.mxu0 0.0
    %602 = vmatprep.subr.mxu0 0.0
    %603 = vmatpush1.xpose.msra.mxu0 0.0
    %604 = vmatprep.subr.mxu0 0.0
    %605 = vmatpush1.xpose.msra.mxu0 0.0
    %606 = vmatprep.subr.mxu0 0.0
    %607 = vmatpush1.xpose.msra.mxu0 0.0
    %608 = vmatprep.subr.mxu0 0.0
    %609 = vmatpush1.xpose.msra.mxu0 0.0
    %610 = vmatprep.subr.mxu0 0.0
    %611 = vmatpush1.xpose.msra.mxu0 0.0
    %612 = vmatprep.subr.mxu0 0.0
    %613 = vmatpush1.xpose.msra.mxu0 0.0
    %614 = vmatprep.subr.mxu0 0.0
    %615 = vmatpush1.xpose.msra.mxu0 0.0
    %616 = vmatprep.subr.mxu0 0.0
    %617 = vmatpush1.xpose.msra.mxu0 0.0
    %618 = vmatprep.subr.mxu0 0.0
    %619 = vmatpush1.xpose.msra.mxu0 0.0
    %620 = vmatprep.subr.mxu0 0.0
    %621 = vmatpush1.xpose.msra.mxu0 0.0
    %622 = vmatprep.subr.mxu0 0.0
    %623 = vmatpush1.xpose.msra.mxu0 0.0
    %624 = vmatprep.subr.mxu0 0.0
    %625 = vmatpush1.xpose.msra.mxu0 0.0
    %626 = vmatprep.subr.mxu0 0.0
    %627 = vmatpush1.xpose.msra.mxu0 0.0
    %628 = vmatprep.subr.mxu0 0.0
    %629 = vmatpush1.xpose.msra.mxu0 0.0
    %630 = vmatprep.subr.mxu0 0.0
    %631 = vmatpush1.xpose.msra.mxu0 0.0
    %632 = vmatprep.subr.mxu0 0.0
    %633 = vmatpush1.xpose.msra.mxu0 0.0
    %634 = vmatprep.subr.mxu0 0.0
    %635 = vmatpush1.xpose.msra.mxu0 0.0
    %636 = vmatprep.subr.mxu0 0.0
    %637 = vmatpush1.xpose.msra.mxu0 0.0
    %638 = vmatprep.mubr.f32.mxu0 0.0
    %639 = vmatmul.mubr.f32.gmra.mrb[0].mxu0 %v570
    %v640 = vpop.f32.mrb[0].mxu0
    %v641 = vadd.f32 0.0, %v640
    %v642 = vpop.f32.mrb[0].mxu0
    %643 = vdwg.mxu0
    %644 = vrot.lane.b32.xlu0 %v258, 96
    %v645 = vpop.permute.xlu0 %644
    %v646 = vsel %vm265, %v258, 0
    %v648 = vsel %vm265, %v645, 0
    %650 = vmatprep.subr.mxu0 0.0
    %651 = vmatpush1.xpose.msra.mxu0 %v648
    %652 = vmatprep.subr.mxu0 0.0
    %653 = vmatpush1.xpose.msra.mxu0 0.0
    %654 = vmatprep.subr.mxu0 0.0
    %655 = vmatpush1.xpose.msra.mxu0 0.0
    %656 = vmatprep.subr.mxu0 0.0
    %657 = vmatpush1.xpose.msra.mxu0 0.0
    %658 = vmatprep.subr.mxu0 0.0
    %659 = vmatpush1.xpose.msra.mxu0 0.0
    %660 = vmatprep.subr.mxu0 0.0
    %661 = vmatpush1.xpose.msra.mxu0 0.0
    %662 = vmatprep.subr.mxu0 0.0
    %663 = vmatpush1.xpose.msra.mxu0 0.0
    %664 = vmatprep.subr.mxu0 0.0
    %665 = vmatpush1.xpose.msra.mxu0 0.0
    %666 = vmatprep.subr.mxu0 0.0
    %667 = vmatpush1.xpose.msra.mxu0 0.0
    %668 = vmatprep.subr.mxu0 0.0
    %669 = vmatpush1.xpose.msra.mxu0 0.0
    %670 = vmatprep.subr.mxu0 0.0
    %671 = vmatpush1.xpose.msra.mxu0 0.0
    %672 = vmatprep.subr.mxu0 0.0
    %673 = vmatpush1.xpose.msra.mxu0 0.0
    %674 = vmatprep.subr.mxu0 0.0
    %675 = vmatpush1.xpose.msra.mxu0 0.0
    %676 = vmatprep.subr.mxu0 0.0
    %677 = vmatpush1.xpose.msra.mxu0 0.0
    %678 = vmatprep.subr.mxu0 0.0
    %679 = vmatpush1.xpose.msra.mxu0 0.0
    %680 = vmatprep.subr.mxu0 0.0
    %681 = vmatpush1.xpose.msra.mxu0 0.0
    %682 = vmatprep.subr.mxu0 0.0
    %683 = vmatpush1.xpose.msra.mxu0 0.0
    %684 = vmatprep.subr.mxu0 0.0
    %685 = vmatpush1.xpose.msra.mxu0 0.0
    %686 = vmatprep.subr.mxu0 0.0
    %687 = vmatpush1.xpose.msra.mxu0 0.0
    %688 = vmatprep.subr.mxu0 0.0
    %689 = vmatpush1.xpose.msra.mxu0 0.0
    %690 = vmatprep.subr.mxu0 0.0
    %691 = vmatpush1.xpose.msra.mxu0 0.0
    %692 = vmatprep.subr.mxu0 0.0
    %693 = vmatpush1.xpose.msra.mxu0 0.0
    %694 = vmatprep.subr.mxu0 0.0
    %695 = vmatpush1.xpose.msra.mxu0 0.0
    %696 = vmatprep.subr.mxu0 0.0
    %697 = vmatpush1.xpose.msra.mxu0 0.0
    %698 = vmatprep.subr.mxu0 0.0
    %699 = vmatpush1.xpose.msra.mxu0 0.0
    %700 = vmatprep.subr.mxu0 0.0
    %701 = vmatpush1.xpose.msra.mxu0 0.0
    %702 = vmatprep.subr.mxu0 0.0
    %703 = vmatpush1.xpose.msra.mxu0 0.0
    %704 = vmatprep.subr.mxu0 0.0
    %705 = vmatpush1.xpose.msra.mxu0 0.0
    %706 = vmatprep.subr.mxu0 0.0
    %707 = vmatpush1.xpose.msra.mxu0 0.0
    %708 = vmatprep.subr.mxu0 0.0
    %709 = vmatpush1.xpose.msra.mxu0 0.0
    %710 = vmatprep.subr.mxu0 0.0
    %711 = vmatpush1.xpose.msra.mxu0 0.0
    %712 = vmatprep.subr.mxu0 0.0
    %713 = vmatpush1.xpose.msra.mxu0 0.0
    %714 = vmatprep.mubr.f32.mxu0 0.0
    %715 = vmatmul.mubr.f32.gmra.mrb[0].mxu0 %v646
    %v716 = vpop.f32.mrb[0].mxu0
    %v717 = vadd.f32 0.0, %v716
    %v718 = vpop.f32.mrb[0].mxu0
    %719 = vdwg.mxu0
    %720 = vrot.lane.b32.xlu0 %v260, 96
    %v721 = vpop.permute.xlu0 %720
    %v722 = vsel %vm265, %v260, 0
    %v724 = vsel %vm265, %v721, 0
    %726 = vmatprep.subr.mxu0 0.0
    %727 = vmatpush1.xpose.msra.mxu0 %v724
    %728 = vmatprep.subr.mxu0 0.0
    %729 = vmatpush1.xpose.msra.mxu0 0.0
    %730 = vmatprep.subr.mxu0 0.0
    %731 = vmatpush1.xpose.msra.mxu0 0.0
    %732 = vmatprep.subr.mxu0 0.0
    %733 = vmatpush1.xpose.msra.mxu0 0.0
    %734 = vmatprep.subr.mxu0 0.0
    %735 = vmatpush1.xpose.msra.mxu0 0.0
    %736 = vmatprep.subr.mxu0 0.0
    %737 = vmatpush1.xpose.msra.mxu0 0.0
    %738 = vmatprep.subr.mxu0 0.0
    %739 = vmatpush1.xpose.msra.mxu0 0.0
    %740 = vmatprep.subr.mxu0 0.0
    %741 = vmatpush1.xpose.msra.mxu0 0.0
    %742 = vmatprep.subr.mxu0 0.0
    %743 = vmatpush1.xpose.msra.mxu0 0.0
    %744 = vmatprep.subr.mxu0 0.0
    %745 = vmatpush1.xpose.msra.mxu0 0.0
    %746 = vmatprep.subr.mxu0 0.0
    %747 = vmatpush1.xpose.msra.mxu0 0.0
    %748 = vmatprep.subr.mxu0 0.0
    %749 = vmatpush1.xpose.msra.mxu0 0.0
    %750 = vmatprep.subr.mxu0 0.0
    %751 = vmatpush1.xpose.msra.mxu0 0.0
    %752 = vmatprep.subr.mxu0 0.0
    %753 = vmatpush1.xpose.msra.mxu0 0.0
    %754 = vmatprep.subr.mxu0 0.0
    %755 = vmatpush1.xpose.msra.mxu0 0.0
    %756 = vmatprep.subr.mxu0 0.0
    %757 = vmatpush1.xpose.msra.mxu0 0.0
    %758 = vmatprep.subr.mxu0 0.0
    %759 = vmatpush1.xpose.msra.mxu0 0.0
    %760 = vmatprep.subr.mxu0 0.0
    %761 = vmatpush1.xpose.msra.mxu0 0.0
    %762 = vmatprep.subr.mxu0 0.0
    %763 = vmatpush1.xpose.msra.mxu0 0.0
    %764 = vmatprep.subr.mxu0 0.0
    %765 = vmatpush1.xpose.msra.mxu0 0.0
    %766 = vmatprep.subr.mxu0 0.0
    %767 = vmatpush1.xpose.msra.mxu0 0.0
    %768 = vmatprep.subr.mxu0 0.0
    %769 = vmatpush1.xpose.msra.mxu0 0.0
    %770 = vmatprep.subr.mxu0 0.0
    %771 = vmatpush1.xpose.msra.mxu0 0.0
    %772 = vmatprep.subr.mxu0 0.0
    %773 = vmatpush1.xpose.msra.mxu0 0.0
    %774 = vmatprep.subr.mxu0 0.0
    %775 = vmatpush1.xpose.msra.mxu0 0.0
    %776 = vmatprep.subr.mxu0 0.0
    %777 = vmatpush1.xpose.msra.mxu0 0.0
    %778 = vmatprep.subr.mxu0 0.0
    %779 = vmatpush1.xpose.msra.mxu0 0.0
    %780 = vmatprep.subr.mxu0 0.0
    %781 = vmatpush1.xpose.msra.mxu0 0.0
    %782 = vmatprep.subr.mxu0 0.0
    %783 = vmatpush1.xpose.msra.mxu0 0.0
    %784 = vmatprep.subr.mxu0 0.0
    %785 = vmatpush1.xpose.msra.mxu0 0.0
    %786 = vmatprep.subr.mxu0 0.0
    %787 = vmatpush1.xpose.msra.mxu0 0.0
    %788 = vmatprep.subr.mxu0 0.0
    %789 = vmatpush1.xpose.msra.mxu0 0.0
    %790 = vmatprep.mubr.f32.mxu0 0.0
    %791 = vmatmul.mubr.f32.gmra.mrb[0].mxu0 %v722
    %v792 = vpop.f32.mrb[0].mxu0
    %v793 = vadd.f32 0.0, %v792
    %v794 = vpop.f32.mrb[0].mxu0
    %795 = vdwg.mxu0
    %796 = vrot.lane.b32.xlu0 %v262, 96
    %v797 = vpop.permute.xlu0 %796
    %v798 = vsel %vm265, %v262, 0
    %v800 = vsel %vm265, %v797, 0
    %802 = vmatprep.subr.mxu0 0.0
    %803 = vmatpush1.xpose.msra.mxu0 %v800
    %804 = vmatprep.subr.mxu0 0.0
    %805 = vmatpush1.xpose.msra.mxu0 0.0
    %806 = vmatprep.subr.mxu0 0.0
    %807 = vmatpush1.xpose.msra.mxu0 0.0
    %808 = vmatprep.subr.mxu0 0.0
    %809 = vmatpush1.xpose.msra.mxu0 0.0
    %810 = vmatprep.subr.mxu0 0.0
    %811 = vmatpush1.xpose.msra.mxu0 0.0
    %812 = vmatprep.subr.mxu0 0.0
    %813 = vmatpush1.xpose.msra.mxu0 0.0
    %814 = vmatprep.subr.mxu0 0.0
    %815 = vmatpush1.xpose.msra.mxu0 0.0
    %816 = vmatprep.subr.mxu0 0.0
    %817 = vmatpush1.xpose.msra.mxu0 0.0
    %818 = vmatprep.subr.mxu0 0.0
    %819 = vmatpush1.xpose.msra.mxu0 0.0
    %820 = vmatprep.subr.mxu0 0.0
    %821 = vmatpush1.xpose.msra.mxu0 0.0
    %822 = vmatprep.subr.mxu0 0.0
    %823 = vmatpush1.xpose.msra.mxu0 0.0
    %824 = vmatprep.subr.mxu0 0.0
    %825 = vmatpush1.xpose.msra.mxu0 0.0
    %826 = vmatprep.subr.mxu0 0.0
    %827 = vmatpush1.xpose.msra.mxu0 0.0
    %828 = vmatprep.subr.mxu0 0.0
    %829 = vmatpush1.xpose.msra.mxu0 0.0
    %830 = vmatprep.subr.mxu0 0.0
    %831 = vmatpush1.xpose.msra.mxu0 0.0
    %832 = vmatprep.subr.mxu0 0.0
    %833 = vmatpush1.xpose.msra.mxu0 0.0
    %834 = vmatprep.subr.mxu0 0.0
    %835 = vmatpush1.xpose.msra.mxu0 0.0
    %836 = vmatprep.subr.mxu0 0.0
    %837 = vmatpush1.xpose.msra.mxu0 0.0
    %838 = vmatprep.subr.mxu0 0.0
    %839 = vmatpush1.xpose.msra.mxu0 0.0
    %840 = vmatprep.subr.mxu0 0.0
    %841 = vmatpush1.xpose.msra.mxu0 0.0
    %842 = vmatprep.subr.mxu0 0.0
    %843 = vmatpush1.xpose.msra.mxu0 0.0
    %844 = vmatprep.subr.mxu0 0.0
    %845 = vmatpush1.xpose.msra.mxu0 0.0
    %846 = vmatprep.subr.mxu0 0.0
    %847 = vmatpush1.xpose.msra.mxu0 0.0
    %848 = vmatprep.subr.mxu0 0.0
    %849 = vmatpush1.xpose.msra.mxu0 0.0
    %850 = vmatprep.subr.mxu0 0.0
    %851 = vmatpush1.xpose.msra.mxu0 0.0
    %852 = vmatprep.subr.mxu0 0.0
    %853 = vmatpush1.xpose.msra.mxu0 0.0
    %854 = vmatprep.subr.mxu0 0.0
    %855 = vmatpush1.xpose.msra.mxu0 0.0
    %856 = vmatprep.subr.mxu0 0.0
    %857 = vmatpush1.xpose.msra.mxu0 0.0
    %858 = vmatprep.subr.mxu0 0.0
    %859 = vmatpush1.xpose.msra.mxu0 0.0
    %860 = vmatprep.subr.mxu0 0.0
    %861 = vmatpush1.xpose.msra.mxu0 0.0
    %862 = vmatprep.subr.mxu0 0.0
    %863 = vmatpush1.xpose.msra.mxu0 0.0
    %864 = vmatprep.subr.mxu0 0.0
    %865 = vmatpush1.xpose.msra.mxu0 0.0
    %866 = vmatprep.mubr.f32.mxu0 0.0
    %867 = vmatmul.mubr.f32.gmra.mrb[0].mxu0 %v798
    %v868 = vpop.f32.mrb[0].mxu0
    %v869 = vadd.f32 0.0, %v868
    %v870 = vpop.f32.mrb[0].mxu0
    %871 = vdwg.mxu0
    %v872 = vsel %vm265, %v337, -inf
    %873 = vmax.xlane.f32.xlu0 %v872
    %v874 = vpop.xlane.xlu0 %873
    %v875 = vsel %vm265, %v413, -inf
    %876 = vmax.xlane.f32.xlu0 %v875
    %v877 = vpop.xlane.xlu0 %876
    %v878 = vsel %vm265, %v489, -inf
    %879 = vmax.xlane.f32.xlu0 %v878
    %v880 = vpop.xlane.xlu0 %879
    %v881 = vsel %vm265, %v565, -inf
    %882 = vmax.xlane.f32.xlu0 %v881
    %v883 = vpop.xlane.xlu0 %882
    %v884 = vsel %vm265, %v641, -inf
    %885 = vmax.xlane.f32.xlu0 %v884
    %v886 = vpop.xlane.xlu0 %885
    %v887 = vsel %vm265, %v717, -inf
    %888 = vmax.xlane.f32.xlu0 %v887
    %v889 = vpop.xlane.xlu0 %888
    %v890 = vsel %vm265, %v793, -inf
    %891 = vmax.xlane.f32.xlu0 %v890
    %v892 = vpop.xlane.xlu0 %891
    %v893 = vsel %vm265, %v869, -inf
    %894 = vmax.xlane.f32.xlu0 %v893
    %v895 = vpop.xlane.xlu0 %894
    %v896 = vsub.f32 %v337, %v874
    %v897 = vsub.f32 %v413, %v877
    %v898 = vsub.f32 %v489, %v880
    %v899 = vsub.f32 %v565, %v883
    %v900 = vsub.f32 %v641, %v886
    %v901 = vsub.f32 %v717, %v889
    %v902 = vsub.f32 %v793, %v892
    %v903 = vsub.f32 %v869, %v895
    %v904 = vmul.f32 %v896, 1.442695
    %v905 = vpow.pop %v904
    %v906 = vmul.f32 %v897, 1.442695
    %v907 = vpow.pop %v906
    %v908 = vmul.f32 %v898, 1.442695
    %v909 = vpow.pop %v908
    %v910 = vmul.f32 %v899, 1.442695
    %v911 = vpow.pop %v910
    %v912 = vmul.f32 %v900, 1.442695
    %v913 = vpow.pop %v912
    %v914 = vmul.f32 %v901, 1.442695
    %v915 = vpow.pop %v914
    %v916 = vmul.f32 %v902, 1.442695
    %v917 = vpow.pop %v916
    %v918 = vmul.f32 %v903, 1.442695
    %v919 = vpow.pop %v918
    %v920 = vsel %vm265, %v905, 0.0
    %921 = vadd.xlane.f32.xlu0 %v920
    %v922 = vpop.xlane.xlu0 %921
    %v923 = vsel %vm265, %v907, 0.0
    %924 = vadd.xlane.f32.xlu0 %v923
    %v925 = vpop.xlane.xlu0 %924
    %v926 = vsel %vm265, %v909, 0.0
    %927 = vadd.xlane.f32.xlu0 %v926
    %v928 = vpop.xlane.xlu0 %927
    %v929 = vsel %vm265, %v911, 0.0
    %930 = vadd.xlane.f32.xlu0 %v929
    %v931 = vpop.xlane.xlu0 %930
    %v932 = vsel %vm265, %v913, 0.0
    %933 = vadd.xlane.f32.xlu0 %v932
    %v934 = vpop.xlane.xlu0 %933
    %v935 = vsel %vm265, %v915, 0.0
    %936 = vadd.xlane.f32.xlu0 %v935
    %v937 = vpop.xlane.xlu0 %936
    %v938 = vsel %vm265, %v917, 0.0
    %939 = vadd.xlane.f32.xlu0 %v938
    %v940 = vpop.xlane.xlu0 %939
    %v941 = vsel %vm265, %v919, 0.0
    %942 = vadd.xlane.f32.xlu0 %v941
    %v943 = vpop.xlane.xlu0 %942
    %v944 = vrcp.pop %v922
    %v945 = vrcp.pop %v925
    %v946 = vrcp.pop %v928
    %v947 = vrcp.pop %v931
    %v948 = vrcp.pop %v934
    %v949 = vrcp.pop %v937
    %v950 = vrcp.pop %v940
    %v951 = vrcp.pop %v943
    %v952 = vmul.f32 %v905, %v944
    %v953 = vmul.f32 %v907, %v945
    %v954 = vmul.f32 %v909, %v946
    %v955 = vmul.f32 %v911, %v947
    %v956 = vmul.f32 %v913, %v948
    %v957 = vmul.f32 %v915, %v949
    %v958 = vmul.f32 %v917, %v950
    %v959 = vmul.f32 %v919, %v951
    %960 = vrot.lane.b32.xlu0 %v241, 64
    %v961 = vpop.permute.xlu0 %960
    %v964 = vsel %vm265, %v952, 0
    %966 = vmatprep.subr.mxu0 0.0
    %967 = vmatpush1.msra.mxu0 %v961
    %968 = vmatprep.subr.mxu0 0.0
    %969 = vmatpush1.msra.mxu0 0.0
    %970 = vmatprep.subr.mxu0 0.0
    %971 = vmatpush1.msra.mxu0 0.0
    %972 = vmatprep.subr.mxu0 0.0
    %973 = vmatpush1.msra.mxu0 0.0
    %974 = vmatprep.subr.mxu0 0.0
    %975 = vmatpush1.msra.mxu0 0.0
    %976 = vmatprep.subr.mxu0 0.0
    %977 = vmatpush1.msra.mxu0 0.0
    %978 = vmatprep.subr.mxu0 0.0
    %979 = vmatpush1.msra.mxu0 0.0
    %980 = vmatprep.subr.mxu0 0.0
    %981 = vmatpush1.msra.mxu0 0.0
    %982 = vmatprep.subr.mxu0 0.0
    %983 = vmatpush1.msra.mxu0 0.0
    %984 = vmatprep.subr.mxu0 0.0
    %985 = vmatpush1.msra.mxu0 0.0
    %986 = vmatprep.subr.mxu0 0.0
    %987 = vmatpush1.msra.mxu0 0.0
    %988 = vmatprep.subr.mxu0 0.0
    %989 = vmatpush1.msra.mxu0 0.0
    %990 = vmatprep.subr.mxu0 0.0
    %991 = vmatpush1.msra.mxu0 0.0
    %992 = vmatprep.subr.mxu0 0.0
    %993 = vmatpush1.msra.mxu0 0.0
    %994 = vmatprep.subr.mxu0 0.0
    %995 = vmatpush1.msra.mxu0 0.0
    %996 = vmatprep.subr.mxu0 0.0
    %997 = vmatpush1.msra.mxu0 0.0
    %998 = vmatprep.subr.mxu0 0.0
    %999 = vmatpush1.msra.mxu0 0.0
    %1000 = vmatprep.subr.mxu0 0.0
    %1001 = vmatpush1.msra.mxu0 0.0
    %1002 = vmatprep.subr.mxu0 0.0
    %1003 = vmatpush1.msra.mxu0 0.0
    %1004 = vmatprep.subr.mxu0 0.0
    %1005 = vmatpush1.msra.mxu0 0.0
    %1006 = vmatprep.subr.mxu0 0.0
    %1007 = vmatpush1.msra.mxu0 0.0
    %1008 = vmatprep.subr.mxu0 0.0
    %1009 = vmatpush1.msra.mxu0 0.0
    %1010 = vmatprep.subr.mxu0 0.0
    %1011 = vmatpush1.msra.mxu0 0.0
    %1012 = vmatprep.subr.mxu0 0.0
    %1013 = vmatpush1.msra.mxu0 0.0
    %1014 = vmatprep.subr.mxu0 0.0
    %1015 = vmatpush1.msra.mxu0 0.0
    %1016 = vmatprep.subr.mxu0 0.0
    %1017 = vmatpush1.msra.mxu0 0.0
    %1018 = vmatprep.subr.mxu0 0.0
    %1019 = vmatpush1.msra.mxu0 0.0
    %1020 = vmatprep.subr.mxu0 0.0
    %1021 = vmatpush1.msra.mxu0 0.0
    %1022 = vmatprep.subr.mxu0 0.0
    %1023 = vmatpush1.msra.mxu0 0.0
    %1024 = vmatprep.subr.mxu0 0.0
    %1025 = vmatpush1.msra.mxu0 0.0
    %1026 = vmatprep.subr.mxu0 0.0
    %1027 = vmatpush1.msra.mxu0 0.0
    %1028 = vmatprep.subr.mxu0 0.0
    %1029 = vmatpush1.msra.mxu0 0.0
    %1030 = vmatprep.mubr.f32.mxu0 0.0
    %1031 = vmatmul.mubr.f32.gmra.mrb[0].mxu0 %v964
    %v1032 = vpop.f32.mrb[0].mxu0
    %v1033 = vadd.f32 0.0, %v1032
    %v1034 = vpop.f32.mrb[0].mxu0
    %1035 = vdwg.mxu0
    %1036 = vrot.lane.b32.xlu0 %v251, 64
    %v1037 = vpop.permute.xlu0 %1036
    %v1040 = vsel %vm265, %v953, 0
    %1042 = vmatprep.subr.mxu0 0.0
    %1043 = vmatpush1.msra.mxu0 %v1037
    %1044 = vmatprep.subr.mxu0 0.0
    %1045 = vmatpush1.msra.mxu0 0.0
    %1046 = vmatprep.subr.mxu0 0.0
    %1047 = vmatpush1.msra.mxu0 0.0
    %1048 = vmatprep.subr.mxu0 0.0
    %1049 = vmatpush1.msra.mxu0 0.0
    %1050 = vmatprep.subr.mxu0 0.0
    %1051 = vmatpush1.msra.mxu0 0.0
    %1052 = vmatprep.subr.mxu0 0.0
    %1053 = vmatpush1.msra.mxu0 0.0
    %1054 = vmatprep.subr.mxu0 0.0
    %1055 = vmatpush1.msra.mxu0 0.0
    %1056 = vmatprep.subr.mxu0 0.0
    %1057 = vmatpush1.msra.mxu0 0.0
    %1058 = vmatprep.subr.mxu0 0.0
    %1059 = vmatpush1.msra.mxu0 0.0
    %1060 = vmatprep.subr.mxu0 0.0
    %1061 = vmatpush1.msra.mxu0 0.0
    %1062 = vmatprep.subr.mxu0 0.0
    %1063 = vmatpush1.msra.mxu0 0.0
    %1064 = vmatprep.subr.mxu0 0.0
    %1065 = vmatpush1.msra.mxu0 0.0
    %1066 = vmatprep.subr.mxu0 0.0
    %1067 = vmatpush1.msra.mxu0 0.0
    %1068 = vmatprep.subr.mxu0 0.0
    %1069 = vmatpush1.msra.mxu0 0.0
    %1070 = vmatprep.subr.mxu0 0.0
    %1071 = vmatpush1.msra.mxu0 0.0
    %1072 = vmatprep.subr.mxu0 0.0
    %1073 = vmatpush1.msra.mxu0 0.0
    %1074 = vmatprep.subr.mxu0 0.0
    %1075 = vmatpush1.msra.mxu0 0.0
    %1076 = vmatprep.subr.mxu0 0.0
    %1077 = vmatpush1.msra.mxu0 0.0
    %1078 = vmatprep.subr.mxu0 0.0
    %1079 = vmatpush1.msra.mxu0 0.0
    %1080 = vmatprep.subr.mxu0 0.0
    %1081 = vmatpush1.msra.mxu0 0.0
    %1082 = vmatprep.subr.mxu0 0.0
    %1083 = vmatpush1.msra.mxu0 0.0
    %1084 = vmatprep.subr.mxu0 0.0
    %1085 = vmatpush1.msra.mxu0 0.0
    %1086 = vmatprep.subr.mxu0 0.0
    %1087 = vmatpush1.msra.mxu0 0.0
    %1088 = vmatprep.subr.mxu0 0.0
    %1089 = vmatpush1.msra.mxu0 0.0
    %1090 = vmatprep.subr.mxu0 0.0
    %1091 = vmatpush1.msra.mxu0 0.0
    %1092 = vmatprep.subr.mxu0 0.0
    %1093 = vmatpush1.msra.mxu0 0.0
    %1094 = vmatprep.subr.mxu0 0.0
    %1095 = vmatpush1.msra.mxu0 0.0
    %1096 = vmatprep.subr.mxu0 0.0
    %1097 = vmatpush1.msra.mxu0 0.0
    %1098 = vmatprep.subr.mxu0 0.0
    %1099 = vmatpush1.msra.mxu0 0.0
    %1100 = vmatprep.subr.mxu0 0.0
    %1101 = vmatpush1.msra.mxu0 0.0
    %1102 = vmatprep.subr.mxu0 0.0
    %1103 = vmatpush1.msra.mxu0 0.0
    %1104 = vmatprep.subr.mxu0 0.0
    %1105 = vmatpush1.msra.mxu0 0.0
    %1106 = vmatprep.mubr.f32.mxu0 0.0
    %1107 = vmatmul.mubr.f32.gmra.mrb[0].mxu0 %v1040
    %v1108 = vpop.f32.mrb[0].mxu0
    %v1109 = vadd.f32 0.0, %v1108
    %v1110 = vpop.f32.mrb[0].mxu0
    %1111 = vdwg.mxu0
    %1112 = vrot.lane.b32.xlu0 %v253, 64
    %v1113 = vpop.permute.xlu0 %1112
    %v1116 = vsel %vm265, %v954, 0
    %1118 = vmatprep.subr.mxu0 0.0
    %1119 = vmatpush1.msra.mxu0 %v1113
    %1120 = vmatprep.subr.mxu0 0.0
    %1121 = vmatpush1.msra.mxu0 0.0
    %1122 = vmatprep.subr.mxu0 0.0
    %1123 = vmatpush1.msra.mxu0 0.0
    %1124 = vmatprep.subr.mxu0 0.0
    %1125 = vmatpush1.msra.mxu0 0.0
    %1126 = vmatprep.subr.mxu0 0.0
    %1127 = vmatpush1.msra.mxu0 0.0
    %1128 = vmatprep.subr.mxu0 0.0
    %1129 = vmatpush1.msra.mxu0 0.0
    %1130 = vmatprep.subr.mxu0 0.0
    %1131 = vmatpush1.msra.mxu0 0.0
    %1132 = vmatprep.subr.mxu0 0.0
    %1133 = vmatpush1.msra.mxu0 0.0
    %1134 = vmatprep.subr.mxu0 0.0
    %1135 = vmatpush1.msra.mxu0 0.0
    %1136 = vmatprep.subr.mxu0 0.0
    %1137 = vmatpush1.msra.mxu0 0.0
    %1138 = vmatprep.subr.mxu0 0.0
    %1139 = vmatpush1.msra.mxu0 0.0
    %1140 = vmatprep.subr.mxu0 0.0
    %1141 = vmatpush1.msra.mxu0 0.0
    %1142 = vmatprep.subr.mxu0 0.0
    %1143 = vmatpush1.msra.mxu0 0.0
    %1144 = vmatprep.subr.mxu0 0.0
    %1145 = vmatpush1.msra.mxu0 0.0
    %1146 = vmatprep.subr.mxu0 0.0
    %1147 = vmatpush1.msra.mxu0 0.0
    %1148 = vmatprep.subr.mxu0 0.0
    %1149 = vmatpush1.msra.mxu0 0.0
    %1150 = vmatprep.subr.mxu0 0.0
    %1151 = vmatpush1.msra.mxu0 0.0
    %1152 = vmatprep.subr.mxu0 0.0
    %1153 = vmatpush1.msra.mxu0 0.0
    %1154 = vmatprep.subr.mxu0 0.0
    %1155 = vmatpush1.msra.mxu0 0.0
    %1156 = vmatprep.subr.mxu0 0.0
    %1157 = vmatpush1.msra.mxu0 0.0
    %1158 = vmatprep.subr.mxu0 0.0
    %1159 = vmatpush1.msra.mxu0 0.0
    %1160 = vmatprep.subr.mxu0 0.0
    %1161 = vmatpush1.msra.mxu0 0.0
    %1162 = vmatprep.subr.mxu0 0.0
    %1163 = vmatpush1.msra.mxu0 0.0
    %1164 = vmatprep.subr.mxu0 0.0
    %1165 = vmatpush1.msra.mxu0 0.0
    %1166 = vmatprep.subr.mxu0 0.0
    %1167 = vmatpush1.msra.mxu0 0.0
    %1168 = vmatprep.subr.mxu0 0.0
    %1169 = vmatpush1.msra.mxu0 0.0
    %1170 = vmatprep.subr.mxu0 0.0
    %1171 = vmatpush1.msra.mxu0 0.0
    %1172 = vmatprep.subr.mxu0 0.0
    %1173 = vmatpush1.msra.mxu0 0.0
    %1174 = vmatprep.subr.mxu0 0.0
    %1175 = vmatpush1.msra.mxu0 0.0
    %1176 = vmatprep.subr.mxu0 0.0
    %1177 = vmatpush1.msra.mxu0 0.0
    %1178 = vmatprep.subr.mxu0 0.0
    %1179 = vmatpush1.msra.mxu0 0.0
    %1180 = vmatprep.subr.mxu0 0.0
    %1181 = vmatpush1.msra.mxu0 0.0
    %1182 = vmatprep.mubr.f32.mxu0 0.0
    %1183 = vmatmul.mubr.f32.gmra.mrb[0].mxu0 %v1116
    %v1184 = vpop.f32.mrb[0].mxu0
    %v1185 = vadd.f32 0.0, %v1184
    %v1186 = vpop.f32.mrb[0].mxu0
    %1187 = vdwg.mxu0
    %1188 = vrot.lane.b32.xlu0 %v255, 64
    %v1189 = vpop.permute.xlu0 %1188
    %v1192 = vsel %vm265, %v955, 0
    %1194 = vmatprep.subr.mxu0 0.0
    %1195 = vmatpush1.msra.mxu0 %v1189
    %1196 = vmatprep.subr.mxu0 0.0
    %1197 = vmatpush1.msra.mxu0 0.0
    %1198 = vmatprep.subr.mxu0 0.0
    %1199 = vmatpush1.msra.mxu0 0.0
    %1200 = vmatprep.subr.mxu0 0.0
    %1201 = vmatpush1.msra.mxu0 0.0
    %1202 = vmatprep.subr.mxu0 0.0
    %1203 = vmatpush1.msra.mxu0 0.0
    %1204 = vmatprep.subr.mxu0 0.0
    %1205 = vmatpush1.msra.mxu0 0.0
    %1206 = vmatprep.subr.mxu0 0.0
    %1207 = vmatpush1.msra.mxu0 0.0
    %1208 = vmatprep.subr.mxu0 0.0
    %1209 = vmatpush1.msra.mxu0 0.0
    %1210 = vmatprep.subr.mxu0 0.0
    %1211 = vmatpush1.msra.mxu0 0.0
    %1212 = vmatprep.subr.mxu0 0.0
    %1213 = vmatpush1.msra.mxu0 0.0
    %1214 = vmatprep.subr.mxu0 0.0
    %1215 = vmatpush1.msra.mxu0 0.0
    %1216 = vmatprep.subr.mxu0 0.0
    %1217 = vmatpush1.msra.mxu0 0.0
    %1218 = vmatprep.subr.mxu0 0.0
    %1219 = vmatpush1.msra.mxu0 0.0
    %1220 = vmatprep.subr.mxu0 0.0
    %1221 = vmatpush1.msra.mxu0 0.0
    %1222 = vmatprep.subr.mxu0 0.0
    %1223 = vmatpush1.msra.mxu0 0.0
    %1224 = vmatprep.subr.mxu0 0.0
    %1225 = vmatpush1.msra.mxu0 0.0
    %1226 = vmatprep.subr.mxu0 0.0
    %1227 = vmatpush1.msra.mxu0 0.0
    %1228 = vmatprep.subr.mxu0 0.0
    %1229 = vmatpush1.msra.mxu0 0.0
    %1230 = vmatprep.subr.mxu0 0.0
    %1231 = vmatpush1.msra.mxu0 0.0
    %1232 = vmatprep.subr.mxu0 0.0
    %1233 = vmatpush1.msra.mxu0 0.0
    %1234 = vmatprep.subr.mxu0 0.0
    %1235 = vmatpush1.msra.mxu0 0.0
    %1236 = vmatprep.subr.mxu0 0.0
    %1237 = vmatpush1.msra.mxu0 0.0
    %1238 = vmatprep.subr.mxu0 0.0
    %1239 = vmatpush1.msra.mxu0 0.0
    %1240 = vmatprep.subr.mxu0 0.0
    %1241 = vmatpush1.msra.mxu0 0.0
    %1242 = vmatprep.subr.mxu0 0.0
    %1243 = vmatpush1.msra.mxu0 0.0
    %1244 = vmatprep.subr.mxu0 0.0
    %1245 = vmatpush1.msra.mxu0 0.0
    %1246 = vmatprep.subr.mxu0 0.0
    %1247 = vmatpush1.msra.mxu0 0.0
    %1248 = vmatprep.subr.mxu0 0.0
    %1249 = vmatpush1.msra.mxu0 0.0
    %1250 = vmatprep.subr.mxu0 0.0
    %1251 = vmatpush1.msra.mxu0 0.0
    %1252 = vmatprep.subr.mxu0 0.0
    %1253 = vmatpush1.msra.mxu0 0.0
    %1254 = vmatprep.subr.mxu0 0.0
    %1255 = vmatpush1.msra.mxu0 0.0
    %1256 = vmatprep.subr.mxu0 0.0
    %1257 = vmatpush1.msra.mxu0 0.0
    %1258 = vmatprep.mubr.f32.mxu0 0.0
    %1259 = vmatmul.mubr.f32.gmra.mrb[0].mxu0 %v1192
    %v1260 = vpop.f32.mrb[0].mxu0
    %v1261 = vadd.f32 0.0, %v1260
    %v1262 = vpop.f32.mrb[0].mxu0
    %1263 = vdwg.mxu0
    %1264 = vrot.lane.b32.xlu0 %v246, 64
    %v1265 = vpop.permute.xlu0 %1264
    %v1268 = vsel %vm265, %v956, 0
    %1270 = vmatprep.subr.mxu0 0.0
    %1271 = vmatpush1.msra.mxu0 %v1265
    %1272 = vmatprep.subr.mxu0 0.0
    %1273 = vmatpush1.msra.mxu0 0.0
    %1274 = vmatprep.subr.mxu0 0.0
    %1275 = vmatpush1.msra.mxu0 0.0
    %1276 = vmatprep.subr.mxu0 0.0
    %1277 = vmatpush1.msra.mxu0 0.0
    %1278 = vmatprep.subr.mxu0 0.0
    %1279 = vmatpush1.msra.mxu0 0.0
    %1280 = vmatprep.subr.mxu0 0.0
    %1281 = vmatpush1.msra.mxu0 0.0
    %1282 = vmatprep.subr.mxu0 0.0
    %1283 = vmatpush1.msra.mxu0 0.0
    %1284 = vmatprep.subr.mxu0 0.0
    %1285 = vmatpush1.msra.mxu0 0.0
    %1286 = vmatprep.subr.mxu0 0.0
    %1287 = vmatpush1.msra.mxu0 0.0
    %1288 = vmatprep.subr.mxu0 0.0
    %1289 = vmatpush1.msra.mxu0 0.0
    %1290 = vmatprep.subr.mxu0 0.0
    %1291 = vmatpush1.msra.mxu0 0.0
    %1292 = vmatprep.subr.mxu0 0.0
    %1293 = vmatpush1.msra.mxu0 0.0
    %1294 = vmatprep.subr.mxu0 0.0
    %1295 = vmatpush1.msra.mxu0 0.0
    %1296 = vmatprep.subr.mxu0 0.0
    %1297 = vmatpush1.msra.mxu0 0.0
    %1298 = vmatprep.subr.mxu0 0.0
    %1299 = vmatpush1.msra.mxu0 0.0
    %1300 = vmatprep.subr.mxu0 0.0
    %1301 = vmatpush1.msra.mxu0 0.0
    %1302 = vmatprep.subr.mxu0 0.0
    %1303 = vmatpush1.msra.mxu0 0.0
    %1304 = vmatprep.subr.mxu0 0.0
    %1305 = vmatpush1.msra.mxu0 0.0
    %1306 = vmatprep.subr.mxu0 0.0
    %1307 = vmatpush1.msra.mxu0 0.0
    %1308 = vmatprep.subr.mxu0 0.0
    %1309 = vmatpush1.msra.mxu0 0.0
    %1310 = vmatprep.subr.mxu0 0.0
    %1311 = vmatpush1.msra.mxu0 0.0
    %1312 = vmatprep.subr.mxu0 0.0
    %1313 = vmatpush1.msra.mxu0 0.0
    %1314 = vmatprep.subr.mxu0 0.0
    %1315 = vmatpush1.msra.mxu0 0.0
    %1316 = vmatprep.subr.mxu0 0.0
    %1317 = vmatpush1.msra.mxu0 0.0
    %1318 = vmatprep.subr.mxu0 0.0
    %1319 = vmatpush1.msra.mxu0 0.0
    %1320 = vmatprep.subr.mxu0 0.0
    %1321 = vmatpush1.msra.mxu0 0.0
    %1322 = vmatprep.subr.mxu0 0.0
    %1323 = vmatpush1.msra.mxu0 0.0
    %1324 = vmatprep.subr.mxu0 0.0
    %1325 = vmatpush1.msra.mxu0 0.0
    %1326 = vmatprep.subr.mxu0 0.0
    %1327 = vmatpush1.msra.mxu0 0.0
    %1328 = vmatprep.subr.mxu0 0.0
    %1329 = vmatpush1.msra.mxu0 0.0
    %1330 = vmatprep.subr.mxu0 0.0
    %1331 = vmatpush1.msra.mxu0 0.0
    %1332 = vmatprep.subr.mxu0 0.0
    %1333 = vmatpush1.msra.mxu0 0.0
    %1334 = vmatprep.mubr.f32.mxu0 0.0
    %1335 = vmatmul.mubr.f32.gmra.mrb[0].mxu0 %v1268
    %v1336 = vpop.f32.mrb[0].mxu0
    %v1337 = vadd.f32 0.0, %v1336
    %v1338 = vpop.f32.mrb[0].mxu0
    %1339 = vdwg.mxu0
    %1340 = vrot.lane.b32.xlu0 %v258, 64
    %v1341 = vpop.permute.xlu0 %1340
    %v1344 = vsel %vm265, %v957, 0
    %1346 = vmatprep.subr.mxu0 0.0
    %1347 = vmatpush1.msra.mxu0 %v1341
    %1348 = vmatprep.subr.mxu0 0.0
    %1349 = vmatpush1.msra.mxu0 0.0
    %1350 = vmatprep.subr.mxu0 0.0
    %1351 = vmatpush1.msra.mxu0 0.0
    %1352 = vmatprep.subr.mxu0 0.0
    %1353 = vmatpush1.msra.mxu0 0.0
    %1354 = vmatprep.subr.mxu0 0.0
    %1355 = vmatpush1.msra.mxu0 0.0
    %1356 = vmatprep.subr.mxu0 0.0
    %1357 = vmatpush1.msra.mxu0 0.0
    %1358 = vmatprep.subr.mxu0 0.0
    %1359 = vmatpush1.msra.mxu0 0.0
    %1360 = vmatprep.subr.mxu0 0.0
    %1361 = vmatpush1.msra.mxu0 0.0
    %1362 = vmatprep.subr.mxu0 0.0
    %1363 = vmatpush1.msra.mxu0 0.0
    %1364 = vmatprep.subr.mxu0 0.0
    %1365 = vmatpush1.msra.mxu0 0.0
    %1366 = vmatprep.subr.mxu0 0.0
    %1367 = vmatpush1.msra.mxu0 0.0
    %1368 = vmatprep.subr.mxu0 0.0
    %1369 = vmatpush1.msra.mxu0 0.0
    %1370 = vmatprep.subr.mxu0 0.0
    %1371 = vmatpush1.msra.mxu0 0.0
    %1372 = vmatprep.subr.mxu0 0.0
    %1373 = vmatpush1.msra.mxu0 0.0
    %1374 = vmatprep.subr.mxu0 0.0
    %1375 = vmatpush1.msra.mxu0 0.0
    %1376 = vmatprep.subr.mxu0 0.0
    %1377 = vmatpush1.msra.mxu0 0.0
    %1378 = vmatprep.subr.mxu0 0.0
    %1379 = vmatpush1.msra.mxu0 0.0
    %1380 = vmatprep.subr.mxu0 0.0
    %1381 = vmatpush1.msra.mxu0 0.0
    %1382 = vmatprep.subr.mxu0 0.0
    %1383 = vmatpush1.msra.mxu0 0.0
    %1384 = vmatprep.subr.mxu0 0.0
    %1385 = vmatpush1.msra.mxu0 0.0
    %1386 = vmatprep.subr.mxu0 0.0
    %1387 = vmatpush1.msra.mxu0 0.0
    %1388 = vmatprep.subr.mxu0 0.0
    %1389 = vmatpush1.msra.mxu0 0.0
    %1390 = vmatprep.subr.mxu0 0.0
    %1391 = vmatpush1.msra.mxu0 0.0
    %1392 = vmatprep.subr.mxu0 0.0
    %1393 = vmatpush1.msra.mxu0 0.0
    %1394 = vmatprep.subr.mxu0 0.0
    %1395 = vmatpush1.msra.mxu0 0.0
    %1396 = vmatprep.subr.mxu0 0.0
    %1397 = vmatpush1.msra.mxu0 0.0
    %1398 = vmatprep.subr.mxu0 0.0
    %1399 = vmatpush1.msra.mxu0 0.0
    %1400 = vmatprep.subr.mxu0 0.0
    %1401 = vmatpush1.msra.mxu0 0.0
    %1402 = vmatprep.subr.mxu0 0.0
    %1403 = vmatpush1.msra.mxu0 0.0
    %1404 = vmatprep.subr.mxu0 0.0
    %1405 = vmatpush1.msra.mxu0 0.0
    %1406 = vmatprep.subr.mxu0 0.0
    %1407 = vmatpush1.msra.mxu0 0.0
    %1408 = vmatprep.subr.mxu0 0.0
    %1409 = vmatpush1.msra.mxu0 0.0
    %1410 = vmatprep.mubr.f32.mxu0 0.0
    %1411 = vmatmul.mubr.f32.gmra.mrb[0].mxu0 %v1344
    %v1412 = vpop.f32.mrb[0].mxu0
    %v1413 = vadd.f32 0.0, %v1412
    %v1414 = vpop.f32.mrb[0].mxu0
    %1415 = vdwg.mxu0
    %1416 = vrot.lane.b32.xlu0 %v260, 64
    %v1417 = vpop.permute.xlu0 %1416
    %v1420 = vsel %vm265, %v958, 0
    %1422 = vmatprep.subr.mxu0 0.0
    %1423 = vmatpush1.msra.mxu0 %v1417
    %1424 = vmatprep.subr.mxu0 0.0
    %1425 = vmatpush1.msra.mxu0 0.0
    %1426 = vmatprep.subr.mxu0 0.0
    %1427 = vmatpush1.msra.mxu0 0.0
    %1428 = vmatprep.subr.mxu0 0.0
    %1429 = vmatpush1.msra.mxu0 0.0
    %1430 = vmatprep.subr.mxu0 0.0
    %1431 = vmatpush1.msra.mxu0 0.0
    %1432 = vmatprep.subr.mxu0 0.0
    %1433 = vmatpush1.msra.mxu0 0.0
    %1434 = vmatprep.subr.mxu0 0.0
    %1435 = vmatpush1.msra.mxu0 0.0
    %1436 = vmatprep.subr.mxu0 0.0
    %1437 = vmatpush1.msra.mxu0 0.0
    %1438 = vmatprep.subr.mxu0 0.0
    %1439 = vmatpush1.msra.mxu0 0.0
    %1440 = vmatprep.subr.mxu0 0.0
    %1441 = vmatpush1.msra.mxu0 0.0
    %1442 = vmatprep.subr.mxu0 0.0
    %1443 = vmatpush1.msra.mxu0 0.0
    %1444 = vmatprep.subr.mxu0 0.0
    %1445 = vmatpush1.msra.mxu0 0.0
    %1446 = vmatprep.subr.mxu0 0.0
    %1447 = vmatpush1.msra.mxu0 0.0
    %1448 = vmatprep.subr.mxu0 0.0
    %1449 = vmatpush1.msra.mxu0 0.0
    %1450 = vmatprep.subr.mxu0 0.0
    %1451 = vmatpush1.msra.mxu0 0.0
    %1452 = vmatprep.subr.mxu0 0.0
    %1453 = vmatpush1.msra.mxu0 0.0
    %1454 = vmatprep.subr.mxu0 0.0
    %1455 = vmatpush1.msra.mxu0 0.0
    %1456 = vmatprep.subr.mxu0 0.0
    %1457 = vmatpush1.msra.mxu0 0.0
    %1458 = vmatprep.subr.mxu0 0.0
    %1459 = vmatpush1.msra.mxu0 0.0
    %1460 = vmatprep.subr.mxu0 0.0
    %1461 = vmatpush1.msra.mxu0 0.0
    %1462 = vmatprep.subr.mxu0 0.0
    %1463 = vmatpush1.msra.mxu0 0.0
    %1464 = vmatprep.subr.mxu0 0.0
    %1465 = vmatpush1.msra.mxu0 0.0
    %1466 = vmatprep.subr.mxu0 0.0
    %1467 = vmatpush1.msra.mxu0 0.0
    %1468 = vmatprep.subr.mxu0 0.0
    %1469 = vmatpush1.msra.mxu0 0.0
    %1470 = vmatprep.subr.mxu0 0.0
    %1471 = vmatpush1.msra.mxu0 0.0
    %1472 = vmatprep.subr.mxu0 0.0
    %1473 = vmatpush1.msra.mxu0 0.0
    %1474 = vmatprep.subr.mxu0 0.0
    %1475 = vmatpush1.msra.mxu0 0.0
    %1476 = vmatprep.subr.mxu0 0.0
    %1477 = vmatpush1.msra.mxu0 0.0
    %1478 = vmatprep.subr.mxu0 0.0
    %1479 = vmatpush1.msra.mxu0 0.0
    %1480 = vmatprep.subr.mxu0 0.0
    %1481 = vmatpush1.msra.mxu0 0.0
    %1482 = vmatprep.subr.mxu0 0.0
    %1483 = vmatpush1.msra.mxu0 0.0
    %1484 = vmatprep.subr.mxu0 0.0
    %1485 = vmatpush1.msra.mxu0 0.0
    %1486 = vmatprep.mubr.f32.mxu0 0.0
    %1487 = vmatmul.mubr.f32.gmra.mrb[0].mxu0 %v1420
    %v1488 = vpop.f32.mrb[0].mxu0
    %v1489 = vadd.f32 0.0, %v1488
    %v1490 = vpop.f32.mrb[0].mxu0
    %1491 = vdwg.mxu0
    %1492 = vrot.lane.b32.xlu0 %v262, 64
    %v1493 = vpop.permute.xlu0 %1492
    %v1496 = vsel %vm265, %v959, 0
    %1498 = vmatprep.subr.mxu0 0.0
    %1499 = vmatpush1.msra.mxu0 %v1493
    %1500 = vmatprep.subr.mxu0 0.0
    %1501 = vmatpush1.msra.mxu0 0.0
    %1502 = vmatprep.subr.mxu0 0.0
    %1503 = vmatpush1.msra.mxu0 0.0
    %1504 = vmatprep.subr.mxu0 0.0
    %1505 = vmatpush1.msra.mxu0 0.0
    %1506 = vmatprep.subr.mxu0 0.0
    %1507 = vmatpush1.msra.mxu0 0.0
    %1508 = vmatprep.subr.mxu0 0.0
    %1509 = vmatpush1.msra.mxu0 0.0
    %1510 = vmatprep.subr.mxu0 0.0
    %1511 = vmatpush1.msra.mxu0 0.0
    %1512 = vmatprep.subr.mxu0 0.0
    %1513 = vmatpush1.msra.mxu0 0.0
    %1514 = vmatprep.subr.mxu0 0.0
    %1515 = vmatpush1.msra.mxu0 0.0
    %1516 = vmatprep.subr.mxu0 0.0
    %1517 = vmatpush1.msra.mxu0 0.0
    %1518 = vmatprep.subr.mxu0 0.0
    %1519 = vmatpush1.msra.mxu0 0.0
    %1520 = vmatprep.subr.mxu0 0.0
    %1521 = vmatpush1.msra.mxu0 0.0
    %1522 = vmatprep.subr.mxu0 0.0
    %1523 = vmatpush1.msra.mxu0 0.0
    %1524 = vmatprep.subr.mxu0 0.0
    %1525 = vmatpush1.msra.mxu0 0.0
    %1526 = vmatprep.subr.mxu0 0.0
    %1527 = vmatpush1.msra.mxu0 0.0
    %1528 = vmatprep.subr.mxu0 0.0
    %1529 = vmatpush1.msra.mxu0 0.0
    %1530 = vmatprep.subr.mxu0 0.0
    %1531 = vmatpush1.msra.mxu0 0.0
    %1532 = vmatprep.subr.mxu0 0.0
    %1533 = vmatpush1.msra.mxu0 0.0
    %1534 = vmatprep.subr.mxu0 0.0
    %1535 = vmatpush1.msra.mxu0 0.0
    %1536 = vmatprep.subr.mxu0 0.0
    %1537 = vmatpush1.msra.mxu0 0.0
    %1538 = vmatprep.subr.mxu0 0.0
    %1539 = vmatpush1.msra.mxu0 0.0
    %1540 = vmatprep.subr.mxu0 0.0
    %1541 = vmatpush1.msra.mxu0 0.0
    %1542 = vmatprep.subr.mxu0 0.0
    %1543 = vmatpush1.msra.mxu0 0.0
    %1544 = vmatprep.subr.mxu0 0.0
    %1545 = vmatpush1.msra.mxu0 0.0
    %1546 = vmatprep.subr.mxu0 0.0
    %1547 = vmatpush1.msra.mxu0 0.0
    %1548 = vmatprep.subr.mxu0 0.0
    %1549 = vmatpush1.msra.mxu0 0.0
    %1550 = vmatprep.subr.mxu0 0.0
    %1551 = vmatpush1.msra.mxu0 0.0
    %1552 = vmatprep.subr.mxu0 0.0
    %1553 = vmatpush1.msra.mxu0 0.0
    %1554 = vmatprep.subr.mxu0 0.0
    %1555 = vmatpush1.msra.mxu0 0.0
    %1556 = vmatprep.subr.mxu0 0.0
    %1557 = vmatpush1.msra.mxu0 0.0
    %1558 = vmatprep.subr.mxu0 0.0
    %1559 = vmatpush1.msra.mxu0 0.0
    %1560 = vmatprep.subr.mxu0 0.0
    %1561 = vmatpush1.msra.mxu0 0.0
    %1562 = vmatprep.mubr.f32.mxu0 0.0
    %1563 = vmatmul.mubr.f32.gmra.mrb[0].mxu0 %v1496
    %v1564 = vpop.f32.mrb[0].mxu0
    %v1565 = vadd.f32 0.0, %v1564
    %v1566 = vpop.f32.mrb[0].mxu0
    %1567 = vdwg.mxu0
    %1569 = vrot.lane.b32.xlu0 %v1109, 8
    %v1570 = vpop.permute.xlu0 %1569
    %1573 = vrot.lane.b32.xlu0 %v1185, 16
    %v1574 = vpop.permute.xlu0 %1573
    %1577 = vrot.lane.b32.xlu0 %v1261, 24
    %v1578 = vpop.permute.xlu0 %1577
    %v1580 = vsel %vm265, %v1033, %v1570
    %vm1581 = vcmask 130048
    %v1582 = vsel %vm1581, %v1580, %v1574
    %vm1583 = vcmask 195584
    %v1584 = vsel %vm1583, %v1582, %v1578
    %1586 = vrot.lane.b32.xlu0 %v1413, 8
    %v1587 = vpop.permute.xlu0 %1586
    %1590 = vrot.lane.b32.xlu0 %v1489, 16
    %v1591 = vpop.permute.xlu0 %1590
    %1594 = vrot.lane.b32.xlu0 %v1565, 24
    %v1595 = vpop.permute.xlu0 %1594
    %v1597 = vsel %vm265, %v1337, %v1587
    %v1598 = vsel %vm1581, %v1597, %v1591
    %v1599 = vsel %vm1583, %v1598, %v1595
    %v1600 = vlaneseq
    %v1601 = vshrl.u32 %v1600, 7
    %v1602 = vsub.s32 0, %v1601
    %v1603 = vrot.slane %v156, %v1602
    %1608 = vrot.lane.b32.xlu0 %v143, 32
    %v1609 = vpop.permute.xlu0 %1608
    %1610 = vrot.lane.b32.xlu0 %v144, 32
    %v1611 = vpop.permute.xlu0 %1610
    %1612 = vrot.lane.b32.xlu0 %v145, 32
    %v1613 = vpop.permute.xlu0 %1612
    %1614 = vrot.lane.b32.xlu0 %v146, 32
    %v1615 = vpop.permute.xlu0 %1614
    %v1621 = vsel %vm167, %v1584, 0
    %v1624 = vsel %vm167, %v1599, 0
    %1626 = vmatprep.subr.mxu0 0.0
    %1627 = vmatpush1.msra.mxu0 %v1609
    %1628 = vmatprep.subr.mxu0 0.0
    %1629 = vmatpush1.msra.mxu0 %v1611
    %1630 = vmatprep.subr.mxu0 0.0
    %1631 = vmatpush1.msra.mxu0 %v1613
    %1632 = vmatprep.subr.mxu0 0.0
    %1633 = vmatpush1.msra.mxu0 %v1615
    %1634 = vmatprep.subr.mxu0 0.0
    %1635 = vmatpush1.msra.mxu0 0.0
    %1636 = vmatprep.subr.mxu0 0.0
    %1637 = vmatpush1.msra.mxu0 0.0
    %1638 = vmatprep.subr.mxu0 0.0
    %1639 = vmatpush1.msra.mxu0 0.0
    %1640 = vmatprep.subr.mxu0 0.0
    %1641 = vmatpush1.msra.mxu0 0.0
    %1642 = vmatprep.subr.mxu0 0.0
    %1643 = vmatpush1.msra.mxu0 0.0
    %1644 = vmatprep.subr.mxu0 0.0
    %1645 = vmatpush1.msra.mxu0 0.0
    %1646 = vmatprep.subr.mxu0 0.0
    %1647 = vmatpush1.msra.mxu0 0.0
    %1648 = vmatprep.subr.mxu0 0.0
    %1649 = vmatpush1.msra.mxu0 0.0
    %1650 = vmatprep.subr.mxu0 0.0
    %1651 = vmatpush1.msra.mxu0 0.0
    %1652 = vmatprep.subr.mxu0 0.0
    %1653 = vmatpush1.msra.mxu0 0.0
    %1654 = vmatprep.subr.mxu0 0.0
    %1655 = vmatpush1.msra.mxu0 0.0
    %1656 = vmatprep.subr.mxu0 0.0
    %1657 = vmatpush1.msra.mxu0 0.0
    %1658 = vmatprep.subr.mxu0 0.0
    %1659 = vmatpush1.msra.mxu0 0.0
    %1660 = vmatprep.subr.mxu0 0.0
    %1661 = vmatpush1.msra.mxu0 0.0
    %1662 = vmatprep.subr.mxu0 0.0
    %1663 = vmatpush1.msra.mxu0 0.0
    %1664 = vmatprep.subr.mxu0 0.0
    %1665 = vmatpush1.msra.mxu0 0.0
    %1666 = vmatprep.subr.mxu0 0.0
    %1667 = vmatpush1.msra.mxu0 0.0
    %1668 = vmatprep.subr.mxu0 0.0
    %1669 = vmatpush1.msra.mxu0 0.0
    %1670 = vmatprep.subr.mxu0 0.0
    %1671 = vmatpush1.msra.mxu0 0.0
    %1672 = vmatprep.subr.mxu0 0.0
    %1673 = vmatpush1.msra.mxu0 0.0
    %1674 = vmatprep.subr.mxu0 0.0
    %1675 = vmatpush1.msra.mxu0 0.0
    %1676 = vmatprep.subr.mxu0 0.0
    %1677 = vmatpush1.msra.mxu0 0.0
    %1678 = vmatprep.subr.mxu0 0.0
    %1679 = vmatpush1.msra.mxu0 0.0
    %1680 = vmatprep.subr.mxu0 0.0
    %1681 = vmatpush1.msra.mxu0 0.0
    %1682 = vmatprep.subr.mxu0 0.0
    %1683 = vmatpush1.msra.mxu0 0.0
    %1684 = vmatprep.subr.mxu0 0.0
    %1685 = vmatpush1.msra.mxu0 0.0
    %1686 = vmatprep.subr.mxu0 0.0
    %1687 = vmatpush1.msra.mxu0 0.0
    %1688 = vmatprep.subr.mxu0 0.0
    %1689 = vmatpush1.msra.mxu0 0.0
    %1690 = vmatprep.mubr.f32.mxu0 0.0
    %1691 = vmatmul.mubr.f32.gmra.mrb[0].mxu0 %v1621
    %v1692 = vpop.f32.mrb[0].mxu0
    %v1693 = vadd.f32 %v1603, %v1692
    %v1694 = vpop.f32.mrb[0].mxu0
    %1695 = vmatprep.mubr.f32.mxu0 0.0
    %1696 = vmatmul.mubr.f32.gmra.mrb[0].mxu0 %v1624
    %v1697 = vpop.f32.mrb[0].mxu0
    %v1698 = vadd.f32 %v1603, %v1697
    %v1699 = vpop.f32.mrb[0].mxu0
    %1700 = vdwg.mxu0
    %v1701 = vadd.f32 %v135, %v1693
    %v1702 = vadd.f32 %v140, %v1698
    %v1703 = vsel %vm167, %v1701, 0.0
    %1704 = vadd.xlane.f32.xlu0 %v1703
    %v1705 = vpop.xlane.xlu0 %1704
    %v1706 = vsel %vm167, %v1702, 0.0
    %1707 = vadd.xlane.f32.xlu0 %v1706
    %v1708 = vpop.xlane.xlu0 %1707
    %v1709 = vrcp.pop 32.0
    %v1710 = vmul.f32 %v1705, %v1709
    %v1711 = vmul.f32 %v1708, %v1709
    %v1712 = vsub.f32 %v1701, %v1710
    %v1713 = vsub.f32 %v1702, %v1711
    %v1714 = vmul.f32 %v1712, %v1712
    %v1715 = vmul.f32 %v1713, %v1713
    %v1716 = vsel %vm167, %v1714, 0.0
    %1717 = vadd.xlane.f32.xlu0 %v1716
    %v1718 = vpop.xlane.xlu0 %1717
    %v1719 = vsel %vm167, %v1715, 0.0
    %1720 = vadd.xlane.f32.xlu0 %v1719
    %v1721 = vpop.xlane.xlu0 %1720
    %v1722 = vmul.f32 %v1718, %v1709
    %v1723 = vmul.f32 %v1721, %v1709
    %v1724 = vadd.f32 %v1722, 1e-05
    %v1725 = vadd.f32 %v1723, 1e-05
    %v1726 = vrsqrt.pop %v1724
    %v1727 = vrsqrt.pop %v1725
    %v1728 = vmul.f32 %v1712, %v1726
    %v1729 = vmul.f32 %v1713, %v1727
    %v1730 = vlaneseq
    %v1731 = vshrl.u32 %v1730, 7
    %v1732 = vsub.s32 0, %v1731
    %v1733 = vrot.slane %v157, %v1732
    %v1734 = vmul.f32 %v1728, %v1733
    %v1735 = vmul.f32 %v1729, %v1733
    %v1736 = vlaneseq
    %v1737 = vshrl.u32 %v1736, 7
    %v1738 = vsub.s32 0, %v1737
    %v1739 = vrot.slane %v158, %v1738
    %v1740 = vadd.f32 %v1734, %v1739
    %v1741 = vadd.f32 %v1735, %v1739
    %v1742 = vlaneseq
    %v1743 = vshrl.u32 %v1742, 7
    %v1744 = vsub.s32 0, %v1743
    %v1745 = vrot.slane %v159, %v1744
    %1750 = vrot.lane.b32.xlu0 %v147, 96
    %v1751 = vpop.permute.xlu0 %1750
    %1752 = vrot.lane.b32.xlu0 %v148, 96
    %v1753 = vpop.permute.xlu0 %1752
    %1754 = vrot.lane.b32.xlu0 %v149, 96
    %v1755 = vpop.permute.xlu0 %1754
    %1756 = vrot.lane.b32.xlu0 %v150, 96
    %v1757 = vpop.permute.xlu0 %1756
    %v1763 = vsel %vm167, %v1740, 0
    %v1766 = vsel %vm167, %v1741, 0
    %1768 = vmatprep.subr.mxu0 0.0
    %1769 = vmatpush1.msra.mxu0 %v1751
    %1770 = vmatprep.subr.mxu0 0.0
    %1771 = vmatpush1.msra.mxu0 %v1753
    %1772 = vmatprep.subr.mxu0 0.0
    %1773 = vmatpush1.msra.mxu0 %v1755
    %1774 = vmatprep.subr.mxu0 0.0
    %1775 = vmatpush1.msra.mxu0 %v1757
    %1776 = vmatprep.subr.mxu0 0.0
    %1777 = vmatpush1.msra.mxu0 0.0
    %1778 = vmatprep.subr.mxu0 0.0
    %1779 = vmatpush1.msra.mxu0 0.0
    %1780 = vmatprep.subr.mxu0 0.0
    %1781 = vmatpush1.msra.mxu0 0.0
    %1782 = vmatprep.subr.mxu0 0.0
    %1783 = vmatpush1.msra.mxu0 0.0
    %1784 = vmatprep.subr.mxu0 0.0
    %1785 = vmatpush1.msra.mxu0 0.0
    %1786 = vmatprep.subr.mxu0 0.0
    %1787 = vmatpush1.msra.mxu0 0.0
    %1788 = vmatprep.subr.mxu0 0.0
    %1789 = vmatpush1.msra.mxu0 0.0
    %1790 = vmatprep.subr.mxu0 0.0
    %1791 = vmatpush1.msra.mxu0 0.0
    %1792 = vmatprep.subr.mxu0 0.0
    %1793 = vmatpush1.msra.mxu0 0.0
    %1794 = vmatprep.subr.mxu0 0.0
    %1795 = vmatpush1.msra.mxu0 0.0
    %1796 = vmatprep.subr.mxu0 0.0
    %1797 = vmatpush1.msra.mxu0 0.0
    %1798 = vmatprep.subr.mxu0 0.0
    %1799 = vmatpush1.msra.mxu0 0.0
    %1800 = vmatprep.subr.mxu0 0.0
    %1801 = vmatpush1.msra.mxu0 0.0
    %1802 = vmatprep.subr.mxu0 0.0
    %1803 = vmatpush1.msra.mxu0 0.0
    %1804 = vmatprep.subr.mxu0 0.0
    %1805 = vmatpush1.msra.mxu0 0.0
    %1806 = vmatprep.subr.mxu0 0.0
    %1807 = vmatpush1.msra.mxu0 0.0
    %1808 = vmatprep.subr.mxu0 0.0
    %1809 = vmatpush1.msra.mxu0 0.0
    %1810 = vmatprep.subr.mxu0 0.0
    %1811 = vmatpush1.msra.mxu0 0.0
    %1812 = vmatprep.subr.mxu0 0.0
    %1813 = vmatpush1.msra.mxu0 0.0
    %1814 = vmatprep.subr.mxu0 0.0
    %1815 = vmatpush1.msra.mxu0 0.0
    %1816 = vmatprep.subr.mxu0 0.0
    %1817 = vmatpush1.msra.mxu0 0.0
    %1818 = vmatprep.subr.mxu0 0.0
    %1819 = vmatpush1.msra.mxu0 0.0
    %1820 = vmatprep.subr.mxu0 0.0
    %1821 = vmatpush1.msra.mxu0 0.0
    %1822 = vmatprep.subr.mxu0 0.0
    %1823 = vmatpush1.msra.mxu0 0.0
    %1824 = vmatprep.subr.mxu0 0.0
    %1825 = vmatpush1.msra.mxu0 0.0
    %1826 = vmatprep.subr.mxu0 0.0
    %1827 = vmatpush1.msra.mxu0 0.0
    %1828 = vmatprep.subr.mxu0 0.0
    %1829 = vmatpush1.msra.mxu0 0.0
    %1830 = vmatprep.subr.mxu0 0.0
    %1831 = vmatpush1.msra.mxu0 0.0
    %1832 = vmatprep.mubr.f32.mxu0 0.0
    %1833 = vmatmul.mubr.f32.gmra.mrb[0].mxu0 %v1763
    %v1834 = vpop.f32.mrb[0].mxu0
    %v1835 = vadd.f32 %v1745, %v1834
    %v1836 = vpop.f32.mrb[0].mxu0
    %1837 = vmatprep.mubr.f32.mxu0 0.0
    %1838 = vmatmul.mubr.f32.gmra.mrb[0].mxu0 %v1766
    %v1839 = vpop.f32.mrb[0].mxu0
    %v1840 = vadd.f32 %v1745, %v1839
    %v1841 = vpop.f32.mrb[0].mxu0
    %1842 = vdwg.mxu0
    %v1843 = vmax.f32 %v1835, 0.0
    %v1844 = vmax.f32 %v1840, 0.0
    %v1845 = vlaneseq
    %v1846 = vshrl.u32 %v1845, 7
    %v1847 = vsub.s32 0, %v1846
    %v1848 = vrot.slane %v160, %v1847
    %v1850 = vsel %vm61, %v1843, 0
    %v1853 = vsel %vm61, %v1844, 0
    %1855 = vmatprep.subr.mxu0 0.0
    %1856 = vmatpush1.msra.mxu0 %v147
    %1857 = vmatprep.subr.mxu0 0.0
    %1858 = vmatpush1.msra.mxu0 %v148
    %1859 = vmatprep.subr.mxu0 0.0
    %1860 = vmatpush1.msra.mxu0 %v149
    %1861 = vmatprep.subr.mxu0 0.0
    %1862 = vmatpush1.msra.mxu0 %v150
    %1863 = vmatprep.subr.mxu0 0.0
    %1864 = vmatpush1.msra.mxu0 %v151
    %1865 = vmatprep.subr.mxu0 0.0
    %1866 = vmatpush1.msra.mxu0 %v152
    %1867 = vmatprep.subr.mxu0 0.0
    %1868 = vmatpush1.msra.mxu0 %v153
    %1869 = vmatprep.subr.mxu0 0.0
    %1870 = vmatpush1.msra.mxu0 %v154
    %1871 = vmatprep.subr.mxu0 0.0
    %1872 = vmatpush1.msra.mxu0 0.0
    %1873 = vmatprep.subr.mxu0 0.0
    %1874 = vmatpush1.msra.mxu0 0.0
    %1875 = vmatprep.subr.mxu0 0.0
    %1876 = vmatpush1.msra.mxu0 0.0
    %1877 = vmatprep.subr.mxu0 0.0
    %1878 = vmatpush1.msra.mxu0 0.0
    %1879 = vmatprep.subr.mxu0 0.0
    %1880 = vmatpush1.msra.mxu0 0.0
    %1881 = vmatprep.subr.mxu0 0.0
    %1882 = vmatpush1.msra.mxu0 0.0
    %1883 = vmatprep.subr.mxu0 0.0
    %1884 = vmatpush1.msra.mxu0 0.0
    %1885 = vmatprep.subr.mxu0 0.0
    %1886 = vmatpush1.msra.mxu0 0.0
    %1887 = vmatprep.subr.mxu0 0.0
    %1888 = vmatpush1.msra.mxu0 0.0
    %1889 = vmatprep.subr.mxu0 0.0
    %1890 = vmatpush1.msra.mxu0 0.0
    %1891 = vmatprep.subr.mxu0 0.0
    %1892 = vmatpush1.msra.mxu0 0.0
    %1893 = vmatprep.subr.mxu0 0.0
    %1894 = vmatpush1.msra.mxu0 0.0
    %1895 = vmatprep.subr.mxu0 0.0
    %1896 = vmatpush1.msra.mxu0 0.0
    %1897 = vmatprep.subr.mxu0 0.0
    %1898 = vmatpush1.msra.mxu0 0.0
    %1899 = vmatprep.subr.mxu0 0.0
    %1900 = vmatpush1.msra.mxu0 0.0
    %1901 = vmatprep.subr.mxu0 0.0
    %1902 = vmatpush1.msra.mxu0 0.0
    %1903 = vmatprep.subr.mxu0 0.0
    %1904 = vmatpush1.msra.mxu0 0.0
    %1905 = vmatprep.subr.mxu0 0.0
    %1906 = vmatpush1.msra.mxu0 0.0
    %1907 = vmatprep.subr.mxu0 0.0
    %1908 = vmatpush1.msra.mxu0 0.0
    %1909 = vmatprep.subr.mxu0 0.0
    %1910 = vmatpush1.msra.mxu0 0.0
    %1911 = vmatprep.subr.mxu0 0.0
    %1912 = vmatpush1.msra.mxu0 0.0
    %1913 = vmatprep.subr.mxu0 0.0
    %1914 = vmatpush1.msra.mxu0 0.0
    %1915 = vmatprep.subr.mxu0 0.0
    %1916 = vmatpush1.msra.mxu0 0.0
    %1917 = vmatprep.subr.mxu0 0.0
    %1918 = vmatpush1.msra.mxu0 0.0
    %1919 = vmatprep.mubr.f32.mxu0 0.0
    %1920 = vmatmul.mubr.f32.gmra.mrb[0].mxu0 %v1850
    %v1921 = vpop.f32.mrb[0].mxu0
    %v1922 = vadd.f32 %v1848, %v1921
    %v1923 = vpop.f32.mrb[0].mxu0
    %1924 = vmatprep.mubr.f32.mxu0 0.0
    %1925 = vmatmul.mubr.f32.gmra.mrb[0].mxu0 %v1853
    %v1926 = vpop.f32.mrb[0].mxu0
    %v1927 = vadd.f32 %v1848, %v1926
    %v1928 = vpop.f32.mrb[0].mxu0
    %1929 = vdwg.mxu0
    %v1930 = vadd.f32 %v1740, %v1922
    %v1931 = vadd.f32 %v1741, %v1927
    %v1932 = vsel %vm167, %v1930, 0.0
    %1933 = vadd.xlane.f32.xlu0 %v1932
    %v1934 = vpop.xlane.xlu0 %1933
    %v1935 = vsel %vm167, %v1931, 0.0
    %1936 = vadd.xlane.f32.xlu0 %v1935
    %v1937 = vpop.xlane.xlu0 %1936
    %v1938 = vmul.f32 %v1934, %v1709
    %v1939 = vmul.f32 %v1937, %v1709
    %v1940 = vsub.f32 %v1930, %v1938
    %v1941 = vsub.f32 %v1931, %v1939
    %v1942 = vmul.f32 %v1940, %v1940
    %v1943 = vmul.f32 %v1941, %v1941
    %v1944 = vsel %vm167, %v1942, 0.0
    %1945 = vadd.xlane.f32.xlu0 %v1944
    %v1946 = vpop.xlane.xlu0 %1945
    %v1947 = vsel %vm167, %v1943, 0.0
    %1948 = vadd.xlane.f32.xlu0 %v1947
    %v1949 = vpop.xlane.xlu0 %1948
    %v1950 = vmul.f32 %v1946, %v1709
    %v1951 = vmul.f32 %v1949, %v1709
    %v1952 = vadd.f32 %v1950, 1e-05
    %v1953 = vadd.f32 %v1951, 1e-05
    %v1954 = vrsqrt.pop %v1952
    %v1955 = vrsqrt.pop %v1953
    %v1956 = vmul.f32 %v1940, %v1954
    %v1957 = vmul.f32 %v1941, %v1955
    %v1958 = vlaneseq
    %v1959 = vshrl.u32 %v1958, 7
    %v1960 = vsub.s32 0, %v1959
    %v1961 = vrot.slane %v161, %v1960
    %v1962 = vmul.f32 %v1956, %v1961
    %v1963 = vmul.f32 %v1957, %v1961
    %v1964 = vlaneseq
    %v1965 = vshrl.u32 %v1964, 7
    %v1966 = vsub.s32 0, %v1965
    %v1967 = vrot.slane %v162, %v1966
    %v1968 = vadd.f32 %v1962, %v1967
    %v1969 = vadd.f32 %v1963, %v1967
    %v1970 = vld [vmem:[#allocation2 + $0xa0] sm:$0xff]
    %v1971 = vld [vmem:[#allocation2 + $0xa8] sm:$0xff]
    %v1972 = vld [vmem:[#allocation2 + $0xb0] sm:$0xff]
    %v1973 = vld [vmem:[#allocation2 + $0xb8] sm:$0xff]
    %v1974 = vld [vmem:[#allocation2 + $0xc0] sm:$0xff]
    %v1975 = vld [vmem:[#allocation2 + $0xc8] sm:$0xff]
    %v1976 = vld [vmem:[#allocation2 + $0xd0] sm:$0xff]
    %v1977 = vld [vmem:[#allocation2 + $0xd8] sm:$0xff]
    %v1978 = vld [vmem:[#allocation2 + $0xe0] sm:$0xff]
    %v1979 = vld [vmem:[#allocation2 + $0xe8] sm:$0xff]
    %v1980 = vld [vmem:[#allocation2 + $0xf0] sm:$0xff]
    %v1981 = vld [vmem:[#allocation2 + $0xf8] sm:$0xff]
    %v1982 = vld [vmem:[#allocation2 + $0xc0] sm:$0xff]
    %v1983 = vld [vmem:[#allocation2 + $0xc8] sm:$0xff]
    %v1984 = vld [vmem:[#allocation2 + $0xd0] sm:$0xff]
    %v1985 = vld [vmem:[#allocation2 + $0xd8] sm:$0xff]
    %v1986 = vld [vmem:[%s2 + $0x8] sm:$0x1]
    %v1987 = vld [vmem:[%s2 + $0x9] sm:$0x1]
    %v1988 = vld [vmem:[%s2 + $0xa] sm:$0x1]
    %v1989 = vld [vmem:[%s2 + $0xb] sm:$0x1]
    %v1990 = vld [vmem:[%s2 + $0xc] sm:$0x1]
    %v1991 = vld [vmem:[%s2 + $0xd] sm:$0x1]
    %v1992 = vld [vmem:[%s2 + $0xe] sm:$0x1]
    %v1993 = vld [vmem:[%s2 + $0xf] sm:$0x1]
    %v1994 = vlaneseq
    %v1995 = vshrl.u32 %v1994, 7
    %v1996 = vsub.s32 0, %v1995
    %v1997 = vrot.slane %v1986, %v1996
    %v1999 = vsel %vm167, %v1968, 0
    %v2002 = vsel %vm167, %v1969, 0
    %2004 = vmatprep.subr.mxu0 0.0
    %2005 = vmatpush1.msra.mxu0 %v1970
    %2006 = vmatprep.subr.mxu0 0.0
    %2007 = vmatpush1.msra.mxu0 %v1971
    %2008 = vmatprep.subr.mxu0 0.0
    %2009 = vmatpush1.msra.mxu0 %v1972
    %2010 = vmatprep.subr.mxu0 0.0
    %2011 = vmatpush1.msra.mxu0 %v1973
    %2012 = vmatprep.subr.mxu0 0.0
    %2013 = vmatpush1.msra.mxu0 0.0
    %2014 = vmatprep.subr.mxu0 0.0
    %2015 = vmatpush1.msra.mxu0 0.0
    %2016 = vmatprep.subr.mxu0 0.0
    %2017 = vmatpush1.msra.mxu0 0.0
    %2018 = vmatprep.subr.mxu0 0.0
    %2019 = vmatpush1.msra.mxu0 0.0
    %2020 = vmatprep.subr.mxu0 0.0
    %2021 = vmatpush1.msra.mxu0 0.0
    %2022 = vmatprep.subr.mxu0 0.0
    %2023 = vmatpush1.msra.mxu0 0.0
    %2024 = vmatprep.subr.mxu0 0.0
    %2025 = vmatpush1.msra.mxu0 0.0
    %2026 = vmatprep.subr.mxu0 0.0
    %2027 = vmatpush1.msra.mxu0 0.0
    %2028 = vmatprep.subr.mxu0 0.0
    %2029 = vmatpush1.msra.mxu0 0.0
    %2030 = vmatprep.subr.mxu0 0.0
    %2031 = vmatpush1.msra.mxu0 0.0
    %2032 = vmatprep.subr.mxu0 0.0
    %2033 = vmatpush1.msra.mxu0 0.0
    %2034 = vmatprep.subr.mxu0 0.0
    %2035 = vmatpush1.msra.mxu0 0.0
    %2036 = vmatprep.subr.mxu0 0.0
    %2037 = vmatpush1.msra.mxu0 0.0
    %2038 = vmatprep.subr.mxu0 0.0
    %2039 = vmatpush1.msra.mxu0 0.0
    %2040 = vmatprep.subr.mxu0 0.0
    %2041 = vmatpush1.msra.mxu0 0.0
    %2042 = vmatprep.subr.mxu0 0.0
    %2043 = vmatpush1.msra.mxu0 0.0
    %2044 = vmatprep.subr.mxu0 0.0
    %2045 = vmatpush1.msra.mxu0 0.0
    %2046 = vmatprep.subr.mxu0 0.0
    %2047 = vmatpush1.msra.mxu0 0.0
    %2048 = vmatprep.subr.mxu0 0.0
    %2049 = vmatpush1.msra.mxu0 0.0
    %2050 = vmatprep.subr.mxu0 0.0
    %2051 = vmatpush1.msra.mxu0 0.0
    %2052 = vmatprep.subr.mxu0 0.0
    %2053 = vmatpush1.msra.mxu0 0.0
    %2054 = vmatprep.subr.mxu0 0.0
    %2055 = vmatpush1.msra.mxu0 0.0
    %2056 = vmatprep.subr.mxu0 0.0
    %2057 = vmatpush1.msra.mxu0 0.0
    %2058 = vmatprep.subr.mxu0 0.0
    %2059 = vmatpush1.msra.mxu0 0.0
    %2060 = vmatprep.subr.mxu0 0.0
    %2061 = vmatpush1.msra.mxu0 0.0
    %2062 = vmatprep.subr.mxu0 0.0
    %2063 = vmatpush1.msra.mxu0 0.0
    %2064 = vmatprep.subr.mxu0 0.0
    %2065 = vmatpush1.msra.mxu0 0.0
    %2066 = vmatprep.subr.mxu0 0.0
    %2067 = vmatpush1.msra.mxu0 0.0
    %2068 = vmatprep.mubr.f32.mxu0 0.0
    %2069 = vmatmul.mubr.f32.gmra.mrb[0].mxu0 %v1999
    %v2070 = vpop.f32.mrb[0].mxu0
    %v2071 = vadd.f32 %v1997, %v2070
    %v2072 = vpop.f32.mrb[0].mxu0
    %2073 = vmatprep.mubr.f32.mxu0 0.0
    %2074 = vmatmul.mubr.f32.gmra.mrb[0].mxu0 %v2002
    %v2075 = vpop.f32.mrb[0].mxu0
    %v2076 = vadd.f32 %v1997, %v2075
    %v2077 = vpop.f32.mrb[0].mxu0
    %2078 = vdwg.mxu0
    %2080 = vrot.lane.b32.xlu0 %v2071, 120
    %v2081 = vpop.permute.xlu0 %2080
    %2082 = vrot.lane.b32.xlu0 %v2071, 112
    %v2083 = vpop.permute.xlu0 %2082
    %2084 = vrot.lane.b32.xlu0 %v2071, 104
    %v2085 = vpop.permute.xlu0 %2084
    %2087 = vrot.lane.b32.xlu0 %v2076, 120
    %v2088 = vpop.permute.xlu0 %2087
    %2089 = vrot.lane.b32.xlu0 %v2076, 112
    %v2090 = vpop.permute.xlu0 %2089
    %2091 = vrot.lane.b32.xlu0 %v2076, 104
    %v2092 = vpop.permute.xlu0 %2091
    %2093 = vrot.lane.b32.xlu0 %v2071, 96
    %v2094 = vpop.permute.xlu0 %2093
    %v2095 = vsel %vm265, %v2071, 0
    %v2097 = vsel %vm265, %v2094, 0
    %2099 = vmatprep.subr.mxu0 0.0
    %2100 = vmatpush1.xpose.msra.mxu0 %v2097
    %2101 = vmatprep.subr.mxu0 0.0
    %2102 = vmatpush1.xpose.msra.mxu0 0.0
    %2103 = vmatprep.subr.mxu0 0.0
    %2104 = vmatpush1.xpose.msra.mxu0 0.0
    %2105 = vmatprep.subr.mxu0 0.0
    %2106 = vmatpush1.xpose.msra.mxu0 0.0
    %2107 = vmatprep.subr.mxu0 0.0
    %2108 = vmatpush1.xpose.msra.mxu0 0.0
    %2109 = vmatprep.subr.mxu0 0.0
    %2110 = vmatpush1.xpose.msra.mxu0 0.0
    %2111 = vmatprep.subr.mxu0 0.0
    %2112 = vmatpush1.xpose.msra.mxu0 0.0
    %2113 = vmatprep.subr.mxu0 0.0
    %2114 = vmatpush1.xpose.msra.mxu0 0.0
    %2115 = vmatprep.subr.mxu0 0.0
    %2116 = vmatpush1.xpose.msra.mxu0 0.0
    %2117 = vmatprep.subr.mxu0 0.0
    %2118 = vmatpush1.xpose.msra.mxu0 0.0
    %2119 = vmatprep.subr.mxu0 0.0
    %2120 = vmatpush1.xpose.msra.mxu0 0.0
    %2121 = vmatprep.subr.mxu0 0.0
    %2122 = vmatpush1.xpose.msra.mxu0 0.0
    %2123 = vmatprep.subr.mxu0 0.0
    %2124 = vmatpush1.xpose.msra.mxu0 0.0
    %2125 = vmatprep.subr.mxu0 0.0
    %2126 = vmatpush1.xpose.msra.mxu0 0.0
    %2127 = vmatprep.subr.mxu0 0.0
    %2128 = vmatpush1.xpose.msra.mxu0 0.0
    %2129 = vmatprep.subr.mxu0 0.0
    %2130 = vmatpush1.xpose.msra.mxu0 0.0
    %2131 = vmatprep.subr.mxu0 0.0
    %2132 = vmatpush1.xpose.msra.mxu0 0.0
    %2133 = vmatprep.subr.mxu0 0.0
    %2134 = vmatpush1.xpose.msra.mxu0 0.0
    %2135 = vmatprep.subr.mxu0 0.0
    %2136 = vmatpush1.xpose.msra.mxu0 0.0
    %2137 = vmatprep.subr.mxu0 0.0
    %2138 = vmatpush1.xpose.msra.mxu0 0.0
    %2139 = vmatprep.subr.mxu0 0.0
    %2140 = vmatpush1.xpose.msra.mxu0 0.0
    %2141 = vmatprep.subr.mxu0 0.0
    %2142 = vmatpush1.xpose.msra.mxu0 0.0
    %2143 = vmatprep.subr.mxu0 0.0
    %2144 = vmatpush1.xpose.msra.mxu0 0.0
    %2145 = vmatprep.subr.mxu0 0.0
    %2146 = vmatpush1.xpose.msra.mxu0 0.0
    %2147 = vmatprep.subr.mxu0 0.0
    %2148 = vmatpush1.xpose.msra.mxu0 0.0
    %2149 = vmatprep.subr.mxu0 0.0
    %2150 = vmatpush1.xpose.msra.mxu0 0.0
    %2151 = vmatprep.subr.mxu0 0.0
    %2152 = vmatpush1.xpose.msra.mxu0 0.0
    %2153 = vmatprep.subr.mxu0 0.0
    %2154 = vmatpush1.xpose.msra.mxu0 0.0
    %2155 = vmatprep.subr.mxu0 0.0
    %2156 = vmatpush1.xpose.msra.mxu0 0.0
    %2157 = vmatprep.subr.mxu0 0.0
    %2158 = vmatpush1.xpose.msra.mxu0 0.0
    %2159 = vmatprep.subr.mxu0 0.0
    %2160 = vmatpush1.xpose.msra.mxu0 0.0
    %2161 = vmatprep.subr.mxu0 0.0
    %2162 = vmatpush1.xpose.msra.mxu0 0.0
    %2163 = vmatprep.mubr.f32.mxu0 0.0
    %2164 = vmatmul.mubr.f32.gmra.mrb[0].mxu0 %v2095
    %v2165 = vpop.f32.mrb[0].mxu0
    %v2166 = vadd.f32 0.0, %v2165
    %v2167 = vpop.f32.mrb[0].mxu0
    %2168 = vdwg.mxu0
    %2169 = vrot.lane.b32.xlu0 %v2081, 96
    %v2170 = vpop.permute.xlu0 %2169
    %v2171 = vsel %vm265, %v2081, 0
    %v2173 = vsel %vm265, %v2170, 0
    %2175 = vmatprep.subr.mxu0 0.0
    %2176 = vmatpush1.xpose.msra.mxu0 %v2173
    %2177 = vmatprep.subr.mxu0 0.0
    %2178 = vmatpush1.xpose.msra.mxu0 0.0
    %2179 = vmatprep.subr.mxu0 0.0
    %2180 = vmatpush1.xpose.msra.mxu0 0.0
    %2181 = vmatprep.subr.mxu0 0.0
    %2182 = vmatpush1.xpose.msra.mxu0 0.0
    %2183 = vmatprep.subr.mxu0 0.0
    %2184 = vmatpush1.xpose.msra.mxu0 0.0
    %2185 = vmatprep.subr.mxu0 0.0
    %2186 = vmatpush1.xpose.msra.mxu0 0.0
    %2187 = vmatprep.subr.mxu0 0.0
    %2188 = vmatpush1.xpose.msra.mxu0 0.0
    %2189 = vmatprep.subr.mxu0 0.0
    %2190 = vmatpush1.xpose.msra.mxu0 0.0
    %2191 = vmatprep.subr.mxu0 0.0
    %2192 = vmatpush1.xpose.msra.mxu0 0.0
    %2193 = vmatprep.subr.mxu0 0.0
    %2194 = vmatpush1.xpose.msra.mxu0 0.0
    %2195 = vmatprep.subr.mxu0 0.0
    %2196 = vmatpush1.xpose.msra.mxu0 0.0
    %2197 = vmatprep.subr.mxu0 0.0
    %2198 = vmatpush1.xpose.msra.mxu0 0.0
    %2199 = vmatprep.subr.mxu0 0.0
    %2200 = vmatpush1.xpose.msra.mxu0 0.0
    %2201 = vmatprep.subr.mxu0 0.0
    %2202 = vmatpush1.xpose.msra.mxu0 0.0
    %2203 = vmatprep.subr.mxu0 0.0
    %2204 = vmatpush1.xpose.msra.mxu0 0.0
    %2205 = vmatprep.subr.mxu0 0.0
    %2206 = vmatpush1.xpose.msra.mxu0 0.0
    %2207 = vmatprep.subr.mxu0 0.0
    %2208 = vmatpush1.xpose.msra.mxu0 0.0
    %2209 = vmatprep.subr.mxu0 0.0
    %2210 = vmatpush1.xpose.msra.mxu0 0.0
    %2211 = vmatprep.subr.mxu0 0.0
    %2212 = vmatpush1.xpose.msra.mxu0 0.0
    %2213 = vmatprep.subr.mxu0 0.0
    %2214 = vmatpush1.xpose.msra.mxu0 0.0
    %2215 = vmatprep.subr.mxu0 0.0
    %2216 = vmatpush1.xpose.msra.mxu0 0.0
    %2217 = vmatprep.subr.mxu0 0.0
    %2218 = vmatpush1.xpose.msra.mxu0 0.0
    %2219 = vmatprep.subr.mxu0 0.0
    %2220 = vmatpush1.xpose.msra.mxu0 0.0
    %2221 = vmatprep.subr.mxu0 0.0
    %2222 = vmatpush1.xpose.msra.mxu0 0.0
    %2223 = vmatprep.subr.mxu0 0.0
    %2224 = vmatpush1.xpose.msra.mxu0 0.0
    %2225 = vmatprep.subr.mxu0 0.0
    %2226 = vmatpush1.xpose.msra.mxu0 0.0
    %2227 = vmatprep.subr.mxu0 0.0
    %2228 = vmatpush1.xpose.msra.mxu0 0.0
    %2229 = vmatprep.subr.mxu0 0.0
    %2230 = vmatpush1.xpose.msra.mxu0 0.0
    %2231 = vmatprep.subr.mxu0 0.0
    %2232 = vmatpush1.xpose.msra.mxu0 0.0
    %2233 = vmatprep.subr.mxu0 0.0
    %2234 = vmatpush1.xpose.msra.mxu0 0.0
    %2235 = vmatprep.subr.mxu0 0.0
    %2236 = vmatpush1.xpose.msra.mxu0 0.0
    %2237 = vmatprep.subr.mxu0 0.0
    %2238 = vmatpush1.xpose.msra.mxu0 0.0
    %2239 = vmatprep.mubr.f32.mxu0 0.0
    %2240 = vmatmul.mubr.f32.gmra.mrb[0].mxu0 %v2171
    %v2241 = vpop.f32.mrb[0].mxu0
    %v2242 = vadd.f32 0.0, %v2241
    %v2243 = vpop.f32.mrb[0].mxu0
    %2244 = vdwg.mxu0
    %2245 = vrot.lane.b32.xlu0 %v2083, 96
    %v2246 = vpop.permute.xlu0 %2245
    %v2247 = vsel %vm265, %v2083, 0
    %v2249 = vsel %vm265, %v2246, 0
    %2251 = vmatprep.subr.mxu0 0.0
    %2252 = vmatpush1.xpose.msra.mxu0 %v2249
    %2253 = vmatprep.subr.mxu0 0.0
    %2254 = vmatpush1.xpose.msra.mxu0 0.0
    %2255 = vmatprep.subr.mxu0 0.0
    %2256 = vmatpush1.xpose.msra.mxu0 0.0
    %2257 = vmatprep.subr.mxu0 0.0
    %2258 = vmatpush1.xpose.msra.mxu0 0.0
    %2259 = vmatprep.subr.mxu0 0.0
    %2260 = vmatpush1.xpose.msra.mxu0 0.0
    %2261 = vmatprep.subr.mxu0 0.0
    %2262 = vmatpush1.xpose.msra.mxu0 0.0
    %2263 = vmatprep.subr.mxu0 0.0
    %2264 = vmatpush1.xpose.msra.mxu0 0.0
    %2265 = vmatprep.subr.mxu0 0.0
    %2266 = vmatpush1.xpose.msra.mxu0 0.0
    %2267 = vmatprep.subr.mxu0 0.0
    %2268 = vmatpush1.xpose.msra.mxu0 0.0
    %2269 = vmatprep.subr.mxu0 0.0
    %2270 = vmatpush1.xpose.msra.mxu0 0.0
    %2271 = vmatprep.subr.mxu0 0.0
    %2272 = vmatpush1.xpose.msra.mxu0 0.0
    %2273 = vmatprep.subr.mxu0 0.0
    %2274 = vmatpush1.xpose.msra.mxu0 0.0
    %2275 = vmatprep.subr.mxu0 0.0
    %2276 = vmatpush1.xpose.msra.mxu0 0.0
    %2277 = vmatprep.subr.mxu0 0.0
    %2278 = vmatpush1.xpose.msra.mxu0 0.0
    %2279 = vmatprep.subr.mxu0 0.0
    %2280 = vmatpush1.xpose.msra.mxu0 0.0
    %2281 = vmatprep.subr.mxu0 0.0
    %2282 = vmatpush1.xpose.msra.mxu0 0.0
    %2283 = vmatprep.subr.mxu0 0.0
    %2284 = vmatpush1.xpose.msra.mxu0 0.0
    %2285 = vmatprep.subr.mxu0 0.0
    %2286 = vmatpush1.xpose.msra.mxu0 0.0
    %2287 = vmatprep.subr.mxu0 0.0
    %2288 = vmatpush1.xpose.msra.mxu0 0.0
    %2289 = vmatprep.subr.mxu0 0.0
    %2290 = vmatpush1.xpose.msra.mxu0 0.0
    %2291 = vmatprep.subr.mxu0 0.0
    %2292 = vmatpush1.xpose.msra.mxu0 0.0
    %2293 = vmatprep.subr.mxu0 0.0
    %2294 = vmatpush1.xpose.msra.mxu0 0.0
    %2295 = vmatprep.subr.mxu0 0.0
    %2296 = vmatpush1.xpose.msra.mxu0 0.0
    %2297 = vmatprep.subr.mxu0 0.0
    %2298 = vmatpush1.xpose.msra.mxu0 0.0
    %2299 = vmatprep.subr.mxu0 0.0
    %2300 = vmatpush1.xpose.msra.mxu0 0.0
    %2301 = vmatprep.subr.mxu0 0.0
    %2302 = vmatpush1.xpose.msra.mxu0 0.0
    %2303 = vmatprep.subr.mxu0 0.0
    %2304 = vmatpush1.xpose.msra.mxu0 0.0
    %2305 = vmatprep.subr.mxu0 0.0
    %2306 = vmatpush1.xpose.msra.mxu0 0.0
    %2307 = vmatprep.subr.mxu0 0.0
    %2308 = vmatpush1.xpose.msra.mxu0 0.0
    %2309 = vmatprep.subr.mxu0 0.0
    %2310 = vmatpush1.xpose.msra.mxu0 0.0
    %2311 = vmatprep.subr.mxu0 0.0
    %2312 = vmatpush1.xpose.msra.mxu0 0.0
    %2313 = vmatprep.subr.mxu0 0.0
    %2314 = vmatpush1.xpose.msra.mxu0 0.0
    %2315 = vmatprep.mubr.f32.mxu0 0.0
    %2316 = vmatmul.mubr.f32.gmra.mrb[0].mxu0 %v2247
    %v2317 = vpop.f32.mrb[0].mxu0
    %v2318 = vadd.f32 0.0, %v2317
    %v2319 = vpop.f32.mrb[0].mxu0
    %2320 = vdwg.mxu0
    %2321 = vrot.lane.b32.xlu0 %v2085, 96
    %v2322 = vpop.permute.xlu0 %2321
    %v2323 = vsel %vm265, %v2085, 0
    %v2325 = vsel %vm265, %v2322, 0
    %2327 = vmatprep.subr.mxu0 0.0
    %2328 = vmatpush1.xpose.msra.mxu0 %v2325
    %2329 = vmatprep.subr.mxu0 0.0
    %2330 = vmatpush1.xpose.msra.mxu0 0.0
    %2331 = vmatprep.subr.mxu0 0.0
    %2332 = vmatpush1.xpose.msra.mxu0 0.0
    %2333 = vmatprep.subr.mxu0 0.0
    %2334 = vmatpush1.xpose.msra.mxu0 0.0
    %2335 = vmatprep.subr.mxu0 0.0
    %2336 = vmatpush1.xpose.msra.mxu0 0.0
    %2337 = vmatprep.subr.mxu0 0.0
    %2338 = vmatpush1.xpose.msra.mxu0 0.0
    %2339 = vmatprep.subr.mxu0 0.0
    %2340 = vmatpush1.xpose.msra.mxu0 0.0
    %2341 = vmatprep.subr.mxu0 0.0
    %2342 = vmatpush1.xpose.msra.mxu0 0.0
    %2343 = vmatprep.subr.mxu0 0.0
    %2344 = vmatpush1.xpose.msra.mxu0 0.0
    %2345 = vmatprep.subr.mxu0 0.0
    %2346 = vmatpush1.xpose.msra.mxu0 0.0
    %2347 = vmatprep.subr.mxu0 0.0
    %2348 = vmatpush1.xpose.msra.mxu0 0.0
    %2349 = vmatprep.subr.mxu0 0.0
    %2350 = vmatpush1.xpose.msra.mxu0 0.0
    %2351 = vmatprep.subr.mxu0 0.0
    %2352 = vmatpush1.xpose.msra.mxu0 0.0
    %2353 = vmatprep.subr.mxu0 0.0
    %2354 = vmatpush1.xpose.msra.mxu0 0.0
    %2355 = vmatprep.subr.mxu0 0.0
    %2356 = vmatpush1.xpose.msra.mxu0 0.0
    %2357 = vmatprep.subr.mxu0 0.0
    %2358 = vmatpush1.xpose.msra.mxu0 0.0
    %2359 = vmatprep.subr.mxu0 0.0
    %2360 = vmatpush1.xpose.msra.mxu0 0.0
    %2361 = vmatprep.subr.mxu0 0.0
    %2362 = vmatpush1.xpose.msra.mxu0 0.0
    %2363 = vmatprep.subr.mxu0 0.0
    %2364 = vmatpush1.xpose.msra.mxu0 0.0
    %2365 = vmatprep.subr.mxu0 0.0
    %2366 = vmatpush1.xpose.msra.mxu0 0.0
    %2367 = vmatprep.subr.mxu0 0.0
    %2368 = vmatpush1.xpose.msra.mxu0 0.0
    %2369 = vmatprep.subr.mxu0 0.0
    %2370 = vmatpush1.xpose.msra.mxu0 0.0
    %2371 = vmatprep.subr.mxu0 0.0
    %2372 = vmatpush1.xpose.msra.mxu0 0.0
    %2373 = vmatprep.subr.mxu0 0.0
    %2374 = vmatpush1.xpose.msra.mxu0 0.0
    %2375 = vmatprep.subr.mxu0 0.0
    %2376 = vmatpush1.xpose.msra.mxu0 0.0
    %2377 = vmatprep.subr.mxu0 0.0
    %2378 = vmatpush1.xpose.msra.mxu0 0.0
    %2379 = vmatprep.subr.mxu0 0.0
    %2380 = vmatpush1.xpose.msra.mxu0 0.0
    %2381 = vmatprep.subr.mxu0 0.0
    %2382 = vmatpush1.xpose.msra.mxu0 0.0
    %2383 = vmatprep.subr.mxu0 0.0
    %2384 = vmatpush1.xpose.msra.mxu0 0.0
    %2385 = vmatprep.subr.mxu0 0.0
    %2386 = vmatpush1.xpose.msra.mxu0 0.0
    %2387 = vmatprep.subr.mxu0 0.0
    %2388 = vmatpush1.xpose.msra.mxu0 0.0
    %2389 = vmatprep.subr.mxu0 0.0
    %2390 = vmatpush1.xpose.msra.mxu0 0.0
    %2391 = vmatprep.mubr.f32.mxu0 0.0
    %2392 = vmatmul.mubr.f32.gmra.mrb[0].mxu0 %v2323
    %v2393 = vpop.f32.mrb[0].mxu0
    %v2394 = vadd.f32 0.0, %v2393
    %v2395 = vpop.f32.mrb[0].mxu0
    %2396 = vdwg.mxu0
    %2397 = vrot.lane.b32.xlu0 %v2076, 96
    %v2398 = vpop.permute.xlu0 %2397
    %v2399 = vsel %vm265, %v2076, 0
    %v2401 = vsel %vm265, %v2398, 0
    %2403 = vmatprep.subr.mxu0 0.0
    %2404 = vmatpush1.xpose.msra.mxu0 %v2401
    %2405 = vmatprep.subr.mxu0 0.0
    %2406 = vmatpush1.xpose.msra.mxu0 0.0
    %2407 = vmatprep.subr.mxu0 0.0
    %2408 = vmatpush1.xpose.msra.mxu0 0.0
    %2409 = vmatprep.subr.mxu0 0.0
    %2410 = vmatpush1.xpose.msra.mxu0 0.0
    %2411 = vmatprep.subr.mxu0 0.0
    %2412 = vmatpush1.xpose.msra.mxu0 0.0
    %2413 = vmatprep.subr.mxu0 0.0
    %2414 = vmatpush1.xpose.msra.mxu0 0.0
    %2415 = vmatprep.subr.mxu0 0.0
    %2416 = vmatpush1.xpose.msra.mxu0 0.0
    %2417 = vmatprep.subr.mxu0 0.0
    %2418 = vmatpush1.xpose.msra.mxu0 0.0
    %2419 = vmatprep.subr.mxu0 0.0
    %2420 = vmatpush1.xpose.msra.mxu0 0.0
    %2421 = vmatprep.subr.mxu0 0.0
    %2422 = vmatpush1.xpose.msra.mxu0 0.0
    %2423 = vmatprep.subr.mxu0 0.0
    %2424 = vmatpush1.xpose.msra.mxu0 0.0
    %2425 = vmatprep.subr.mxu0 0.0
    %2426 = vmatpush1.xpose.msra.mxu0 0.0
    %2427 = vmatprep.subr.mxu0 0.0
    %2428 = vmatpush1.xpose.msra.mxu0 0.0
    %2429 = vmatprep.subr.mxu0 0.0
    %2430 = vmatpush1.xpose.msra.mxu0 0.0
    %2431 = vmatprep.subr.mxu0 0.0
    %2432 = vmatpush1.xpose.msra.mxu0 0.0
    %2433 = vmatprep.subr.mxu0 0.0
    %2434 = vmatpush1.xpose.msra.mxu0 0.0
    %2435 = vmatprep.subr.mxu0 0.0
    %2436 = vmatpush1.xpose.msra.mxu0 0.0
    %2437 = vmatprep.subr.mxu0 0.0
    %2438 = vmatpush1.xpose.msra.mxu0 0.0
    %2439 = vmatprep.subr.mxu0 0.0
    %2440 = vmatpush1.xpose.msra.mxu0 0.0
    %2441 = vmatprep.subr.mxu0 0.0
    %2442 = vmatpush1.xpose.msra.mxu0 0.0
    %2443 = vmatprep.subr.mxu0 0.0
    %2444 = vmatpush1.xpose.msra.mxu0 0.0
    %2445 = vmatprep.subr.mxu0 0.0
    %2446 = vmatpush1.xpose.msra.mxu0 0.0
    %2447 = vmatprep.subr.mxu0 0.0
    %2448 = vmatpush1.xpose.msra.mxu0 0.0
    %2449 = vmatprep.subr.mxu0 0.0
    %2450 = vmatpush1.xpose.msra.mxu0 0.0
    %2451 = vmatprep.subr.mxu0 0.0
    %2452 = vmatpush1.xpose.msra.mxu0 0.0
    %2453 = vmatprep.subr.mxu0 0.0
    %2454 = vmatpush1.xpose.msra.mxu0 0.0
    %2455 = vmatprep.subr.mxu0 0.0
    %2456 = vmatpush1.xpose.msra.mxu0 0.0
    %2457 = vmatprep.subr.mxu0 0.0
    %2458 = vmatpush1.xpose.msra.mxu0 0.0
    %2459 = vmatprep.subr.mxu0 0.0
    %2460 = vmatpush1.xpose.msra.mxu0 0.0
    %2461 = vmatprep.subr.mxu0 0.0
    %2462 = vmatpush1.xpose.msra.mxu0 0.0
    %2463 = vmatprep.subr.mxu0 0.0
    %2464 = vmatpush1.xpose.msra.mxu0 0.0
    %2465 = vmatprep.subr.mxu0 0.0
    %2466 = vmatpush1.xpose.msra.mxu0 0.0
    %2467 = vmatprep.mubr.f32.mxu0 0.0
    %2468 = vmatmul.mubr.f32.gmra.mrb[0].mxu0 %v2399
    %v2469 = vpop.f32.mrb[0].mxu0
    %v2470 = vadd.f32 0.0, %v2469
    %v2471 = vpop.f32.mrb[0].mxu0
    %2472 = vdwg.mxu0
    %2473 = vrot.lane.b32.xlu0 %v2088, 96
    %v2474 = vpop.permute.xlu0 %2473
    %v2475 = vsel %vm265, %v2088, 0
    %v2477 = vsel %vm265, %v2474, 0
    %2479 = vmatprep.subr.mxu0 0.0
    %2480 = vmatpush1.xpose.msra.mxu0 %v2477
    %2481 = vmatprep.subr.mxu0 0.0
    %2482 = vmatpush1.xpose.msra.mxu0 0.0
    %2483 = vmatprep.subr.mxu0 0.0
    %2484 = vmatpush1.xpose.msra.mxu0 0.0
    %2485 = vmatprep.subr.mxu0 0.0
    %2486 = vmatpush1.xpose.msra.mxu0 0.0
    %2487 = vmatprep.subr.mxu0 0.0
    %2488 = vmatpush1.xpose.msra.mxu0 0.0
    %2489 = vmatprep.subr.mxu0 0.0
    %2490 = vmatpush1.xpose.msra.mxu0 0.0
    %2491 = vmatprep.subr.mxu0 0.0
    %2492 = vmatpush1.xpose.msra.mxu0 0.0
    %2493 = vmatprep.subr.mxu0 0.0
    %2494 = vmatpush1.xpose.msra.mxu0 0.0
    %2495 = vmatprep.subr.mxu0 0.0
    %2496 = vmatpush1.xpose.msra.mxu0 0.0
    %2497 = vmatprep.subr.mxu0 0.0
    %2498 = vmatpush1.xpose.msra.mxu0 0.0
    %2499 = vmatprep.subr.mxu0 0.0
    %2500 = vmatpush1.xpose.msra.mxu0 0.0
    %2501 = vmatprep.subr.mxu0 0.0
    %2502 = vmatpush1.xpose.msra.mxu0 0.0
    %2503 = vmatprep.subr.mxu0 0.0
    %2504 = vmatpush1.xpose.msra.mxu0 0.0
    %2505 = vmatprep.subr.mxu0 0.0
    %2506 = vmatpush1.xpose.msra.mxu0 0.0
    %2507 = vmatprep.subr.mxu0 0.0
    %2508 = vmatpush1.xpose.msra.mxu0 0.0
    %2509 = vmatprep.subr.mxu0 0.0
    %2510 = vmatpush1.xpose.msra.mxu0 0.0
    %2511 = vmatprep.subr.mxu0 0.0
    %2512 = vmatpush1.xpose.msra.mxu0 0.0
    %2513 = vmatprep.subr.mxu0 0.0
    %2514 = vmatpush1.xpose.msra.mxu0 0.0
    %2515 = vmatprep.subr.mxu0 0.0
    %2516 = vmatpush1.xpose.msra.mxu0 0.0
    %2517 = vmatprep.subr.mxu0 0.0
    %2518 = vmatpush1.xpose.msra.mxu0 0.0
    %2519 = vmatprep.subr.mxu0 0.0
    %2520 = vmatpush1.xpose.msra.mxu0 0.0
    %2521 = vmatprep.subr.mxu0 0.0
    %2522 = vmatpush1.xpose.msra.mxu0 0.0
    %2523 = vmatprep.subr.mxu0 0.0
    %2524 = vmatpush1.xpose.msra.mxu0 0.0
    %2525 = vmatprep.subr.mxu0 0.0
    %2526 = vmatpush1.xpose.msra.mxu0 0.0
    %2527 = vmatprep.subr.mxu0 0.0
    %2528 = vmatpush1.xpose.msra.mxu0 0.0
    %2529 = vmatprep.subr.mxu0 0.0
    %2530 = vmatpush1.xpose.msra.mxu0 0.0
    %2531 = vmatprep.subr.mxu0 0.0
    %2532 = vmatpush1.xpose.msra.mxu0 0.0
    %2533 = vmatprep.subr.mxu0 0.0
    %2534 = vmatpush1.xpose.msra.mxu0 0.0
    %2535 = vmatprep.subr.mxu0 0.0
    %2536 = vmatpush1.xpose.msra.mxu0 0.0
    %2537 = vmatprep.subr.mxu0 0.0
    %2538 = vmatpush1.xpose.msra.mxu0 0.0
    %2539 = vmatprep.subr.mxu0 0.0
    %2540 = vmatpush1.xpose.msra.mxu0 0.0
    %2541 = vmatprep.subr.mxu0 0.0
    %2542 = vmatpush1.xpose.msra.mxu0 0.0
    %2543 = vmatprep.mubr.f32.mxu0 0.0
    %2544 = vmatmul.mubr.f32.gmra.mrb[0].mxu0 %v2475
    %v2545 = vpop.f32.mrb[0].mxu0
    %v2546 = vadd.f32 0.0, %v2545
    %v2547 = vpop.f32.mrb[0].mxu0
    %2548 = vdwg.mxu0
    %2549 = vrot.lane.b32.xlu0 %v2090, 96
    %v2550 = vpop.permute.xlu0 %2549
    %v2551 = vsel %vm265, %v2090, 0
    %v2553 = vsel %vm265, %v2550, 0
    %2555 = vmatprep.subr.mxu0 0.0
    %2556 = vmatpush1.xpose.msra.mxu0 %v2553
    %2557 = vmatprep.subr.mxu0 0.0
    %2558 = vmatpush1.xpose.msra.mxu0 0.0
    %2559 = vmatprep.subr.mxu0 0.0
    %2560 = vmatpush1.xpose.msra.mxu0 0.0
    %2561 = vmatprep.subr.mxu0 0.0
    %2562 = vmatpush1.xpose.msra.mxu0 0.0
    %2563 = vmatprep.subr.mxu0 0.0
    %2564 = vmatpush1.xpose.msra.mxu0 0.0
    %2565 = vmatprep.subr.mxu0 0.0
    %2566 = vmatpush1.xpose.msra.mxu0 0.0
    %2567 = vmatprep.subr.mxu0 0.0
    %2568 = vmatpush1.xpose.msra.mxu0 0.0
    %2569 = vmatprep.subr.mxu0 0.0
    %2570 = vmatpush1.xpose.msra.mxu0 0.0
    %2571 = vmatprep.subr.mxu0 0.0
    %2572 = vmatpush1.xpose.msra.mxu0 0.0
    %2573 = vmatprep.subr.mxu0 0.0
    %2574 = vmatpush1.xpose.msra.mxu0 0.0
    %2575 = vmatprep.subr.mxu0 0.0
    %2576 = vmatpush1.xpose.msra.mxu0 0.0
    %2577 = vmatprep.subr.mxu0 0.0
    %2578 = vmatpush1.xpose.msra.mxu0 0.0
    %2579 = vmatprep.subr.mxu0 0.0
    %2580 = vmatpush1.xpose.msra.mxu0 0.0
    %2581 = vmatprep.subr.mxu0 0.0
    %2582 = vmatpush1.xpose.msra.mxu0 0.0
    %2583 = vmatprep.subr.mxu0 0.0
    %2584 = vmatpush1.xpose.msra.mxu0 0.0
    %2585 = vmatprep.subr.mxu0 0.0
    %2586 = vmatpush1.xpose.msra.mxu0 0.0
    %2587 = vmatprep.subr.mxu0 0.0
    %2588 = vmatpush1.xpose.msra.mxu0 0.0
    %2589 = vmatprep.subr.mxu0 0.0
    %2590 = vmatpush1.xpose.msra.mxu0 0.0
    %2591 = vmatprep.subr.mxu0 0.0
    %2592 = vmatpush1.xpose.msra.mxu0 0.0
    %2593 = vmatprep.subr.mxu0 0.0
    %2594 = vmatpush1.xpose.msra.mxu0 0.0
    %2595 = vmatprep.subr.mxu0 0.0
    %2596 = vmatpush1.xpose.msra.mxu0 0.0
    %2597 = vmatprep.subr.mxu0 0.0
    %2598 = vmatpush1.xpose.msra.mxu0 0.0
    %2599 = vmatprep.subr.mxu0 0.0
    %2600 = vmatpush1.xpose.msra.mxu0 0.0
    %2601 = vmatprep.subr.mxu0 0.0
    %2602 = vmatpush1.xpose.msra.mxu0 0.0
    %2603 = vmatprep.subr.mxu0 0.0
    %2604 = vmatpush1.xpose.msra.mxu0 0.0
    %2605 = vmatprep.subr.mxu0 0.0
    %2606 = vmatpush1.xpose.msra.mxu0 0.0
    %2607 = vmatprep.subr.mxu0 0.0
    %2608 = vmatpush1.xpose.msra.mxu0 0.0
    %2609 = vmatprep.subr.mxu0 0.0
    %2610 = vmatpush1.xpose.msra.mxu0 0.0
    %2611 = vmatprep.subr.mxu0 0.0
    %2612 = vmatpush1.xpose.msra.mxu0 0.0
    %2613 = vmatprep.subr.mxu0 0.0
    %2614 = vmatpush1.xpose.msra.mxu0 0.0
    %2615 = vmatprep.subr.mxu0 0.0
    %2616 = vmatpush1.xpose.msra.mxu0 0.0
    %2617 = vmatprep.subr.mxu0 0.0
    %2618 = vmatpush1.xpose.msra.mxu0 0.0
    %2619 = vmatprep.mubr.f32.mxu0 0.0
    %2620 = vmatmul.mubr.f32.gmra.mrb[0].mxu0 %v2551
    %v2621 = vpop.f32.mrb[0].mxu0
    %v2622 = vadd.f32 0.0, %v2621
    %v2623 = vpop.f32.mrb[0].mxu0
    %2624 = vdwg.mxu0
    %2625 = vrot.lane.b32.xlu0 %v2092, 96
    %v2626 = vpop.permute.xlu0 %2625
    %v2627 = vsel %vm265, %v2092, 0
    %v2629 = vsel %vm265, %v2626, 0
    %2631 = vmatprep.subr.mxu0 0.0
    %2632 = vmatpush1.xpose.msra.mxu0 %v2629
    %2633 = vmatprep.subr.mxu0 0.0
    %2634 = vmatpush1.xpose.msra.mxu0 0.0
    %2635 = vmatprep.subr.mxu0 0.0
    %2636 = vmatpush1.xpose.msra.mxu0 0.0
    %2637 = vmatprep.subr.mxu0 0.0
    %2638 = vmatpush1.xpose.msra.mxu0 0.0
    %2639 = vmatprep.subr.mxu0 0.0
    %2640 = vmatpush1.xpose.msra.mxu0 0.0
    %2641 = vmatprep.subr.mxu0 0.0
    %2642 = vmatpush1.xpose.msra.mxu0 0.0
    %2643 = vmatprep.subr.mxu0 0.0
    %2644 = vmatpush1.xpose.msra.mxu0 0.0
    %2645 = vmatprep.subr.mxu0 0.0
    %2646 = vmatpush1.xpose.msra.mxu0 0.0
    %2647 = vmatprep.subr.mxu0 0.0
    %2648 = vmatpush1.xpose.msra.mxu0 0.0
    %2649 = vmatprep.subr.mxu0 0.0
    %2650 = vmatpush1.xpose.msra.mxu0 0.0
    %2651 = vmatprep.subr.mxu0 0.0
    %2652 = vmatpush1.xpose.msra.mxu0 0.0
    %2653 = vmatprep.subr.mxu0 0.0
    %2654 = vmatpush1.xpose.msra.mxu0 0.0
    %2655 = vmatprep.subr.mxu0 0.0
    %2656 = vmatpush1.xpose.msra.mxu0 0.0
    %2657 = vmatprep.subr.mxu0 0.0
    %2658 = vmatpush1.xpose.msra.mxu0 0.0
    %2659 = vmatprep.subr.mxu0 0.0
    %2660 = vmatpush1.xpose.msra.mxu0 0.0
    %2661 = vmatprep.subr.mxu0 0.0
    %2662 = vmatpush1.xpose.msra.mxu0 0.0
    %2663 = vmatprep.subr.mxu0 0.0
    %2664 = vmatpush1.xpose.msra.mxu0 0.0
    %2665 = vmatprep.subr.mxu0 0.0
    %2666 = vmatpush1.xpose.msra.mxu0 0.0
    %2667 = vmatprep.subr.mxu0 0.0
    %2668 = vmatpush1.xpose.msra.mxu0 0.0
    %2669 = vmatprep.subr.mxu0 0.0
    %2670 = vmatpush1.xpose.msra.mxu0 0.0
    %2671 = vmatprep.subr.mxu0 0.0
    %2672 = vmatpush1.xpose.msra.mxu0 0.0
    %2673 = vmatprep.subr.mxu0 0.0
    %2674 = vmatpush1.xpose.msra.mxu0 0.0
    %2675 = vmatprep.subr.mxu0 0.0
    %2676 = vmatpush1.xpose.msra.mxu0 0.0
    %2677 = vmatprep.subr.mxu0 0.0
    %2678 = vmatpush1.xpose.msra.mxu0 0.0
    %2679 = vmatprep.subr.mxu0 0.0
    %2680 = vmatpush1.xpose.msra.mxu0 0.0
    %2681 = vmatprep.subr.mxu0 0.0
    %2682 = vmatpush1.xpose.msra.mxu0 0.0
    %2683 = vmatprep.subr.mxu0 0.0
    %2684 = vmatpush1.xpose.msra.mxu0 0.0
    %2685 = vmatprep.subr.mxu0 0.0
    %2686 = vmatpush1.xpose.msra.mxu0 0.0
    %2687 = vmatprep.subr.mxu0 0.0
    %2688 = vmatpush1.xpose.msra.mxu0 0.0
    %2689 = vmatprep.subr.mxu0 0.0
    %2690 = vmatpush1.xpose.msra.mxu0 0.0
    %2691 = vmatprep.subr.mxu0 0.0
    %2692 = vmatpush1.xpose.msra.mxu0 0.0
    %2693 = vmatprep.subr.mxu0 0.0
    %2694 = vmatpush1.xpose.msra.mxu0 0.0
    %2695 = vmatprep.mubr.f32.mxu0 0.0
    %2696 = vmatmul.mubr.f32.gmra.mrb[0].mxu0 %v2627
    %v2697 = vpop.f32.mrb[0].mxu0
    %v2698 = vadd.f32 0.0, %v2697
    %v2699 = vpop.f32.mrb[0].mxu0
    %2700 = vdwg.mxu0
    %v2701 = vsel %vm265, %v2166, -inf
    %2702 = vmax.xlane.f32.xlu0 %v2701
    %v2703 = vpop.xlane.xlu0 %2702
    %v2704 = vsel %vm265, %v2242, -inf
    %2705 = vmax.xlane.f32.xlu0 %v2704
    %v2706 = vpop.xlane.xlu0 %2705
    %v2707 = vsel %vm265, %v2318, -inf
    %2708 = vmax.xlane.f32.xlu0 %v2707
    %v2709 = vpop.xlane.xlu0 %2708
    %v2710 = vsel %vm265, %v2394, -inf
    %2711 = vmax.xlane.f32.xlu0 %v2710
    %v2712 = vpop.xlane.xlu0 %2711
    %v2713 = vsel %vm265, %v2470, -inf
    %2714 = vmax.xlane.f32.xlu0 %v2713
    %v2715 = vpop.xlane.xlu0 %2714
    %v2716 = vsel %vm265, %v2546, -inf
    %2717 = vmax.xlane.f32.xlu0 %v2716
    %v2718 = vpop.xlane.xlu0 %2717
    %v2719 = vsel %vm265, %v2622, -inf
    %2720 = vmax.xlane.f32.xlu0 %v2719
    %v2721 = vpop.xlane.xlu0 %2720
    %v2722 = vsel %vm265, %v2698, -inf
    %2723 = vmax.xlane.f32.xlu0 %v2722
    %v2724 = vpop.xlane.xlu0 %2723
    %v2725 = vsub.f32 %v2166, %v2703
    %v2726 = vsub.f32 %v2242, %v2706
    %v2727 = vsub.f32 %v2318, %v2709
    %v2728 = vsub.f32 %v2394, %v2712
    %v2729 = vsub.f32 %v2470, %v2715
    %v2730 = vsub.f32 %v2546, %v2718
    %v2731 = vsub.f32 %v2622, %v2721
    %v2732 = vsub.f32 %v2698, %v2724
    %v2733 = vmul.f32 %v2725, 1.442695
    %v2734 = vpow.pop %v2733
    %v2735 = vmul.f32 %v2726, 1.442695
    %v2736 = vpow.pop %v2735
    %v2737 = vmul.f32 %v2727, 1.442695
    %v2738 = vpow.pop %v2737
    %v2739 = vmul.f32 %v2728, 1.442695
    %v2740 = vpow.pop %v2739
    %v2741 = vmul.f32 %v2729, 1.442695
    %v2742 = vpow.pop %v2741
    %v2743 = vmul.f32 %v2730, 1.442695
    %v2744 = vpow.pop %v2743
    %v2745 = vmul.f32 %v2731, 1.442695
    %v2746 = vpow.pop %v2745
    %v2747 = vmul.f32 %v2732, 1.442695
    %v2748 = vpow.pop %v2747
    %v2749 = vsel %vm265, %v2734, 0.0
    %2750 = vadd.xlane.f32.xlu0 %v2749
    %v2751 = vpop.xlane.xlu0 %2750
    %v2752 = vsel %vm265, %v2736, 0.0
    %2753 = vadd.xlane.f32.xlu0 %v2752
    %v2754 = vpop.xlane.xlu0 %2753
    %v2755 = vsel %vm265, %v2738, 0.0
    %2756 = vadd.xlane.f32.xlu0 %v2755
    %v2757 = vpop.xlane.xlu0 %2756
    %v2758 = vsel %vm265, %v2740, 0.0
    %2759 = vadd.xlane.f32.xlu0 %v2758
    %v2760 = vpop.xlane.xlu0 %2759
    %v2761 = vsel %vm265, %v2742, 0.0
    %2762 = vadd.xlane.f32.xlu0 %v2761
    %v2763 = vpop.xlane.xlu0 %2762
    %v2764 = vsel %vm265, %v2744, 0.0
    %2765 = vadd.xlane.f32.xlu0 %v2764
    %v2766 = vpop.xlane.xlu0 %2765
    %v2767 = vsel %vm265, %v2746, 0.0
    %2768 = vadd.xlane.f32.xlu0 %v2767
    %v2769 = vpop.xlane.xlu0 %2768
    %v2770 = vsel %vm265, %v2748, 0.0
    %2771 = vadd.xlane.f32.xlu0 %v2770
    %v2772 = vpop.xlane.xlu0 %2771
    %v2773 = vrcp.pop %v2751
    %v2774 = vrcp.pop %v2754
    %v2775 = vrcp.pop %v2757
    %v2776 = vrcp.pop %v2760
    %v2777 = vrcp.pop %v2763
    %v2778 = vrcp.pop %v2766
    %v2779 = vrcp.pop %v2769
    %v2780 = vrcp.pop %v2772
    %v2781 = vmul.f32 %v2734, %v2773
    %v2782 = vmul.f32 %v2736, %v2774
    %v2783 = vmul.f32 %v2738, %v2775
    %v2784 = vmul.f32 %v2740, %v2776
    %v2785 = vmul.f32 %v2742, %v2777
    %v2786 = vmul.f32 %v2744, %v2778
    %v2787 = vmul.f32 %v2746, %v2779
    %v2788 = vmul.f32 %v2748, %v2780
    %2789 = vrot.lane.b32.xlu0 %v2071, 64
    %v2790 = vpop.permute.xlu0 %2789
    %v2793 = vsel %vm265, %v2781, 0
    %2795 = vmatprep.subr.mxu0 0.0
    %2796 = vmatpush1.msra.mxu0 %v2790
    %2797 = vmatprep.subr.mxu0 0.0
    %2798 = vmatpush1.msra.mxu0 0.0
    %2799 = vmatprep.subr.mxu0 0.0
    %2800 = vmatpush1.msra.mxu0 0.0
    %2801 = vmatprep.subr.mxu0 0.0
    %2802 = vmatpush1.msra.mxu0 0.0
    %2803 = vmatprep.subr.mxu0 0.0
    %2804 = vmatpush1.msra.mxu0 0.0
    %2805 = vmatprep.subr.mxu0 0.0
    %2806 = vmatpush1.msra.mxu0 0.0
    %2807 = vmatprep.subr.mxu0 0.0
    %2808 = vmatpush1.msra.mxu0 0.0
    %2809 = vmatprep.subr.mxu0 0.0
    %2810 = vmatpush1.msra.mxu0 0.0
    %2811 = vmatprep.subr.mxu0 0.0
    %2812 = vmatpush1.msra.mxu0 0.0
    %2813 = vmatprep.subr.mxu0 0.0
    %2814 = vmatpush1.msra.mxu0 0.0
    %2815 = vmatprep.subr.mxu0 0.0
    %2816 = vmatpush1.msra.mxu0 0.0
    %2817 = vmatprep.subr.mxu0 0.0
    %2818 = vmatpush1.msra.mxu0 0.0
    %2819 = vmatprep.subr.mxu0 0.0
    %2820 = vmatpush1.msra.mxu0 0.0
    %2821 = vmatprep.subr.mxu0 0.0
    %2822 = vmatpush1.msra.mxu0 0.0
    %2823 = vmatprep.subr.mxu0 0.0
    %2824 = vmatpush1.msra.mxu0 0.0
    %2825 = vmatprep.subr.mxu0 0.0
    %2826 = vmatpush1.msra.mxu0 0.0
    %2827 = vmatprep.subr.mxu0 0.0
    %2828 = vmatpush1.msra.mxu0 0.0
    %2829 = vmatprep.subr.mxu0 0.0
    %2830 = vmatpush1.msra.mxu0 0.0
    %2831 = vmatprep.subr.mxu0 0.0
    %2832 = vmatpush1.msra.mxu0 0.0
    %2833 = vmatprep.subr.mxu0 0.0
    %2834 = vmatpush1.msra.mxu0 0.0
    %2835 = vmatprep.subr.mxu0 0.0
    %2836 = vmatpush1.msra.mxu0 0.0
    %2837 = vmatprep.subr.mxu0 0.0
    %2838 = vmatpush1.msra.mxu0 0.0
    %2839 = vmatprep.subr.mxu0 0.0
    %2840 = vmatpush1.msra.mxu0 0.0
    %2841 = vmatprep.subr.mxu0 0.0
    %2842 = vmatpush1.msra.mxu0 0.0
    %2843 = vmatprep.subr.mxu0 0.0
    %2844 = vmatpush1.msra.mxu0 0.0
    %2845 = vmatprep.subr.mxu0 0.0
    %2846 = vmatpush1.msra.mxu0 0.0
    %2847 = vmatprep.subr.mxu0 0.0
    %2848 = vmatpush1.msra.mxu0 0.0
    %2849 = vmatprep.subr.mxu0 0.0
    %2850 = vmatpush1.msra.mxu0 0.0
    %2851 = vmatprep.subr.mxu0 0.0
    %2852 = vmatpush1.msra.mxu0 0.0
    %2853 = vmatprep.subr.mxu0 0.0
    %2854 = vmatpush1.msra.mxu0 0.0
    %2855 = vmatprep.subr.mxu0 0.0
    %2856 = vmatpush1.msra.mxu0 0.0
    %2857 = vmatprep.subr.mxu0 0.0
    %2858 = vmatpush1.msra.mxu0 0.0
    %2859 = vmatprep.mubr.f32.mxu0 0.0
    %2860 = vmatmul.mubr.f32.gmra.mrb[0].mxu0 %v2793
    %v2861 = vpop.f32.mrb[0].mxu0
    %v2862 = vadd.f32 0.0, %v2861
    %v2863 = vpop.f32.mrb[0].mxu0
    %2864 = vdwg.mxu0
    %2865 = vrot.lane.b32.xlu0 %v2081, 64
    %v2866 = vpop.permute.xlu0 %2865
    %v2869 = vsel %vm265, %v2782, 0
    %2871 = vmatprep.subr.mxu0 0.0
    %2872 = vmatpush1.msra.mxu0 %v2866
    %2873 = vmatprep.subr.mxu0 0.0
    %2874 = vmatpush1.msra.mxu0 0.0
    %2875 = vmatprep.subr.mxu0 0.0
    %2876 = vmatpush1.msra.mxu0 0.0
    %2877 = vmatprep.subr.mxu0 0.0
    %2878 = vmatpush1.msra.mxu0 0.0
    %2879 = vmatprep.subr.mxu0 0.0
    %2880 = vmatpush1.msra.mxu0 0.0
    %2881 = vmatprep.subr.mxu0 0.0
    %2882 = vmatpush1.msra.mxu0 0.0
    %2883 = vmatprep.subr.mxu0 0.0
    %2884 = vmatpush1.msra.mxu0 0.0
    %2885 = vmatprep.subr.mxu0 0.0
    %2886 = vmatpush1.msra.mxu0 0.0
    %2887 = vmatprep.subr.mxu0 0.0
    %2888 = vmatpush1.msra.mxu0 0.0
    %2889 = vmatprep.subr.mxu0 0.0
    %2890 = vmatpush1.msra.mxu0 0.0
    %2891 = vmatprep.subr.mxu0 0.0
    %2892 = vmatpush1.msra.mxu0 0.0
    %2893 = vmatprep.subr.mxu0 0.0
    %2894 = vmatpush1.msra.mxu0 0.0
    %2895 = vmatprep.subr.mxu0 0.0
    %2896 = vmatpush1.msra.mxu0 0.0
    %2897 = vmatprep.subr.mxu0 0.0
    %2898 = vmatpush1.msra.mxu0 0.0
    %2899 = vmatprep.subr.mxu0 0.0
    %2900 = vmatpush1.msra.mxu0 0.0
    %2901 = vmatprep.subr.mxu0 0.0
    %2902 = vmatpush1.msra.mxu0 0.0
    %2903 = vmatprep.subr.mxu0 0.0
    %2904 = vmatpush1.msra.mxu0 0.0
    %2905 = vmatprep.subr.mxu0 0.0
    %2906 = vmatpush1.msra.mxu0 0.0
    %2907 = vmatprep.subr.mxu0 0.0
    %2908 = vmatpush1.msra.mxu0 0.0
    %2909 = vmatprep.subr.mxu0 0.0
    %2910 = vmatpush1.msra.mxu0 0.0
    %2911 = vmatprep.subr.mxu0 0.0
    %2912 = vmatpush1.msra.mxu0 0.0
    %2913 = vmatprep.subr.mxu0 0.0
    %2914 = vmatpush1.msra.mxu0 0.0
    %2915 = vmatprep.subr.mxu0 0.0
    %2916 = vmatpush1.msra.mxu0 0.0
    %2917 = vmatprep.subr.mxu0 0.0
    %2918 = vmatpush1.msra.mxu0 0.0
    %2919 = vmatprep.subr.mxu0 0.0
    %2920 = vmatpush1.msra.mxu0 0.0
    %2921 = vmatprep.subr.mxu0 0.0
    %2922 = vmatpush1.msra.mxu0 0.0
    %2923 = vmatprep.subr.mxu0 0.0
    %2924 = vmatpush1.msra.mxu0 0.0
    %2925 = vmatprep.subr.mxu0 0.0
    %2926 = vmatpush1.msra.mxu0 0.0
    %2927 = vmatprep.subr.mxu0 0.0
    %2928 = vmatpush1.msra.mxu0 0.0
    %2929 = vmatprep.subr.mxu0 0.0
    %2930 = vmatpush1.msra.mxu0 0.0
    %2931 = vmatprep.subr.mxu0 0.0
    %2932 = vmatpush1.msra.mxu0 0.0
    %2933 = vmatprep.subr.mxu0 0.0
    %2934 = vmatpush1.msra.mxu0 0.0
    %2935 = vmatprep.mubr.f32.mxu0 0.0
    %2936 = vmatmul.mubr.f32.gmra.mrb[0].mxu0 %v2869
    %v2937 = vpop.f32.mrb[0].mxu0
    %v2938 = vadd.f32 0.0, %v2937
    %v2939 = vpop.f32.mrb[0].mxu0
    %2940 = vdwg.mxu0
    %2941 = vrot.lane.b32.xlu0 %v2083, 64
    %v2942 = vpop.permute.xlu0 %2941
    %v2945 = vsel %vm265, %v2783, 0
    %2947 = vmatprep.subr.mxu0 0.0
    %2948 = vmatpush1.msra.mxu0 %v2942
    %2949 = vmatprep.subr.mxu0 0.0
    %2950 = vmatpush1.msra.mxu0 0.0
    %2951 = vmatprep.subr.mxu0 0.0
    %2952 = vmatpush1.msra.mxu0 0.0
    %2953 = vmatprep.subr.mxu0 0.0
    %2954 = vmatpush1.msra.mxu0 0.0
    %2955 = vmatprep.subr.mxu0 0.0
    %2956 = vmatpush1.msra.mxu0 0.0
    %2957 = vmatprep.subr.mxu0 0.0
    %2958 = vmatpush1.msra.mxu0 0.0
    %2959 = vmatprep.subr.mxu0 0.0
    %2960 = vmatpush1.msra.mxu0 0.0
    %2961 = vmatprep.subr.mxu0 0.0
    %2962 = vmatpush1.msra.mxu0 0.0
    %2963 = vmatprep.subr.mxu0 0.0
    %2964 = vmatpush1.msra.mxu0 0.0
    %2965 = vmatprep.subr.mxu0 0.0
    %2966 = vmatpush1.msra.mxu0 0.0
    %2967 = vmatprep.subr.mxu0 0.0
    %2968 = vmatpush1.msra.mxu0 0.0
    %2969 = vmatprep.subr.mxu0 0.0
    %2970 = vmatpush1.msra.mxu0 0.0
    %2971 = vmatprep.subr.mxu0 0.0
    %2972 = vmatpush1.msra.mxu0 0.0
    %2973 = vmatprep.subr.mxu0 0.0
    %2974 = vmatpush1.msra.mxu0 0.0
    %2975 = vmatprep.subr.mxu0 0.0
    %2976 = vmatpush1.msra.mxu0 0.0
    %2977 = vmatprep.subr.mxu0 0.0
    %2978 = vmatpush1.msra.mxu0 0.0
    %2979 = vmatprep.subr.mxu0 0.0
    %2980 = vmatpush1.msra.mxu0 0.0
    %2981 = vmatprep.subr.mxu0 0.0
    %2982 = vmatpush1.msra.mxu0 0.0
    %2983 = vmatprep.subr.mxu0 0.0
    %2984 = vmatpush1.msra.mxu0 0.0
    %2985 = vmatprep.subr.mxu0 0.0
    %2986 = vmatpush1.msra.mxu0 0.0
    %2987 = vmatprep.subr.mxu0 0.0
    %2988 = vmatpush1.msra.mxu0 0.0
    %2989 = vmatprep.subr.mxu0 0.0
    %2990 = vmatpush1.msra.mxu0 0.0
    %2991 = vmatprep.subr.mxu0 0.0
    %2992 = vmatpush1.msra.mxu0 0.0
    %2993 = vmatprep.subr.mxu0 0.0
    %2994 = vmatpush1.msra.mxu0 0.0
    %2995 = vmatprep.subr.mxu0 0.0
    %2996 = vmatpush1.msra.mxu0 0.0
    %2997 = vmatprep.subr.mxu0 0.0
    %2998 = vmatpush1.msra.mxu0 0.0
    %2999 = vmatprep.subr.mxu0 0.0
    %3000 = vmatpush1.msra.mxu0 0.0
    %3001 = vmatprep.subr.mxu0 0.0
    %3002 = vmatpush1.msra.mxu0 0.0
    %3003 = vmatprep.subr.mxu0 0.0
    %3004 = vmatpush1.msra.mxu0 0.0
    %3005 = vmatprep.subr.mxu0 0.0
    %3006 = vmatpush1.msra.mxu0 0.0
    %3007 = vmatprep.subr.mxu0 0.0
    %3008 = vmatpush1.msra.mxu0 0.0
    %3009 = vmatprep.subr.mxu0 0.0
    %3010 = vmatpush1.msra.mxu0 0.0
    %3011 = vmatprep.mubr.f32.mxu0 0.0
    %3012 = vmatmul.mubr.f32.gmra.mrb[0].mxu0 %v2945
    %v3013 = vpop.f32.mrb[0].mxu0
    %v3014 = vadd.f32 0.0, %v3013
    %v3015 = vpop.f32.mrb[0].mxu0
    %3016 = vdwg.mxu0
    %3017 = vrot.lane.b32.xlu0 %v2085, 64
    %v3018 = vpop.permute.xlu0 %3017
    %v3021 = vsel %vm265, %v2784, 0
    %3023 = vmatprep.subr.mxu0 0.0
    %3024 = vmatpush1.msra.mxu0 %v3018
    %3025 = vmatprep.subr.mxu0 0.0
    %3026 = vmatpush1.msra.mxu0 0.0
    %3027 = vmatprep.subr.mxu0 0.0
    %3028 = vmatpush1.msra.mxu0 0.0
    %3029 = vmatprep.subr.mxu0 0.0
    %3030 = vmatpush1.msra.mxu0 0.0
    %3031 = vmatprep.subr.mxu0 0.0
    %3032 = vmatpush1.msra.mxu0 0.0
    %3033 = vmatprep.subr.mxu0 0.0
    %3034 = vmatpush1.msra.mxu0 0.0
    %3035 = vmatprep.subr.mxu0 0.0
    %3036 = vmatpush1.msra.mxu0 0.0
    %3037 = vmatprep.subr.mxu0 0.0
    %3038 = vmatpush1.msra.mxu0 0.0
    %3039 = vmatprep.subr.mxu0 0.0
    %3040 = vmatpush1.msra.mxu0 0.0
    %3041 = vmatprep.subr.mxu0 0.0
    %3042 = vmatpush1.msra.mxu0 0.0
    %3043 = vmatprep.subr.mxu0 0.0
    %3044 = vmatpush1.msra.mxu0 0.0
    %3045 = vmatprep.subr.mxu0 0.0
    %3046 = vmatpush1.msra.mxu0 0.0
    %3047 = vmatprep.subr.mxu0 0.0
    %3048 = vmatpush1.msra.mxu0 0.0
    %3049 = vmatprep.subr.mxu0 0.0
    %3050 = vmatpush1.msra.mxu0 0.0
    %3051 = vmatprep.subr.mxu0 0.0
    %3052 = vmatpush1.msra.mxu0 0.0
    %3053 = vmatprep.subr.mxu0 0.0
    %3054 = vmatpush1.msra.mxu0 0.0
    %3055 = vmatprep.subr.mxu0 0.0
    %3056 = vmatpush1.msra.mxu0 0.0
    %3057 = vmatprep.subr.mxu0 0.0
    %3058 = vmatpush1.msra.mxu0 0.0
    %3059 = vmatprep.subr.mxu0 0.0
    %3060 = vmatpush1.msra.mxu0 0.0
    %3061 = vmatprep.subr.mxu0 0.0
    %3062 = vmatpush1.msra.mxu0 0.0
    %3063 = vmatprep.subr.mxu0 0.0
    %3064 = vmatpush1.msra.mxu0 0.0
    %3065 = vmatprep.subr.mxu0 0.0
    %3066 = vmatpush1.msra.mxu0 0.0
    %3067 = vmatprep.subr.mxu0 0.0
    %3068 = vmatpush1.msra.mxu0 0.0
    %3069 = vmatprep.subr.mxu0 0.0
    %3070 = vmatpush1.msra.mxu0 0.0
    %3071 = vmatprep.subr.mxu0 0.0
    %3072 = vmatpush1.msra.mxu0 0.0
    %3073 = vmatprep.subr.mxu0 0.0
    %3074 = vmatpush1.msra.mxu0 0.0
    %3075 = vmatprep.subr.mxu0 0.0
    %3076 = vmatpush1.msra.mxu0 0.0
    %3077 = vmatprep.subr.mxu0 0.0
    %3078 = vmatpush1.msra.mxu0 0.0
    %3079 = vmatprep.subr.mxu0 0.0
    %3080 = vmatpush1.msra.mxu0 0.0
    %3081 = vmatprep.subr.mxu0 0.0
    %3082 = vmatpush1.msra.mxu0 0.0
    %3083 = vmatprep.subr.mxu0 0.0
    %3084 = vmatpush1.msra.mxu0 0.0
    %3085 = vmatprep.subr.mxu0 0.0
    %3086 = vmatpush1.msra.mxu0 0.0
    %3087 = vmatprep.mubr.f32.mxu0 0.0
    %3088 = vmatmul.mubr.f32.gmra.mrb[0].mxu0 %v3021
    %v3089 = vpop.f32.mrb[0].mxu0
    %v3090 = vadd.f32 0.0, %v3089
    %v3091 = vpop.f32.mrb[0].mxu0
    %3092 = vdwg.mxu0
    %3093 = vrot.lane.b32.xlu0 %v2076, 64
    %v3094 = vpop.permute.xlu0 %3093
    %v3097 = vsel %vm265, %v2785, 0
    %3099 = vmatprep.subr.mxu0 0.0
    %3100 = vmatpush1.msra.mxu0 %v3094
    %3101 = vmatprep.subr.mxu0 0.0
    %3102 = vmatpush1.msra.mxu0 0.0
    %3103 = vmatprep.subr.mxu0 0.0
    %3104 = vmatpush1.msra.mxu0 0.0
    %3105 = vmatprep.subr.mxu0 0.0
    %3106 = vmatpush1.msra.mxu0 0.0
    %3107 = vmatprep.subr.mxu0 0.0
    %3108 = vmatpush1.msra.mxu0 0.0
    %3109 = vmatprep.subr.mxu0 0.0
    %3110 = vmatpush1.msra.mxu0 0.0
    %3111 = vmatprep.subr.mxu0 0.0
    %3112 = vmatpush1.msra.mxu0 0.0
    %3113 = vmatprep.subr.mxu0 0.0
    %3114 = vmatpush1.msra.mxu0 0.0
    %3115 = vmatprep.subr.mxu0 0.0
    %3116 = vmatpush1.msra.mxu0 0.0
    %3117 = vmatprep.subr.mxu0 0.0
    %3118 = vmatpush1.msra.mxu0 0.0
    %3119 = vmatprep.subr.mxu0 0.0
    %3120 = vmatpush1.msra.mxu0 0.0
    %3121 = vmatprep.subr.mxu0 0.0
    %3122 = vmatpush1.msra.mxu0 0.0
    %3123 = vmatprep.subr.mxu0 0.0
    %3124 = vmatpush1.msra.mxu0 0.0
    %3125 = vmatprep.subr.mxu0 0.0
    %3126 = vmatpush1.msra.mxu0 0.0
    %3127 = vmatprep.subr.mxu0 0.0
    %3128 = vmatpush1.msra.mxu0 0.0
    %3129 = vmatprep.subr.mxu0 0.0
    %3130 = vmatpush1.msra.mxu0 0.0
    %3131 = vmatprep.subr.mxu0 0.0
    %3132 = vmatpush1.msra.mxu0 0.0
    %3133 = vmatprep.subr.mxu0 0.0
    %3134 = vmatpush1.msra.mxu0 0.0
    %3135 = vmatprep.subr.mxu0 0.0
    %3136 = vmatpush1.msra.mxu0 0.0
    %3137 = vmatprep.subr.mxu0 0.0
    %3138 = vmatpush1.msra.mxu0 0.0
    %3139 = vmatprep.subr.mxu0 0.0
    %3140 = vmatpush1.msra.mxu0 0.0
    %3141 = vmatprep.subr.mxu0 0.0
    %3142 = vmatpush1.msra.mxu0 0.0
    %3143 = vmatprep.subr.mxu0 0.0
    %3144 = vmatpush1.msra.mxu0 0.0
    %3145 = vmatprep.subr.mxu0 0.0
    %3146 = vmatpush1.msra.mxu0 0.0
    %3147 = vmatprep.subr.mxu0 0.0
    %3148 = vmatpush1.msra.mxu0 0.0
    %3149 = vmatprep.subr.mxu0 0.0
    %3150 = vmatpush1.msra.mxu0 0.0
    %3151 = vmatprep.subr.mxu0 0.0
    %3152 = vmatpush1.msra.mxu0 0.0
    %3153 = vmatprep.subr.mxu0 0.0
    %3154 = vmatpush1.msra.mxu0 0.0
    %3155 = vmatprep.subr.mxu0 0.0
    %3156 = vmatpush1.msra.mxu0 0.0
    %3157 = vmatprep.subr.mxu0 0.0
    %3158 = vmatpush1.msra.mxu0 0.0
    %3159 = vmatprep.subr.mxu0 0.0
    %3160 = vmatpush1.msra.mxu0 0.0
    %3161 = vmatprep.subr.mxu0 0.0
    %3162 = vmatpush1.msra.mxu0 0.0
    %3163 = vmatprep.mubr.f32.mxu0 0.0
    %3164 = vmatmul.mubr.f32.gmra.mrb[0].mxu0 %v3097
    %v3165 = vpop.f32.mrb[0].mxu0
    %v3166 = vadd.f32 0.0, %v3165
    %v3167 = vpop.f32.mrb[0].mxu0
    %3168 = vdwg.mxu0
    %3169 = vrot.lane.b32.xlu0 %v2088, 64
    %v3170 = vpop.permute.xlu0 %3169
    %v3173 = vsel %vm265, %v2786, 0
    %3175 = vmatprep.subr.mxu0 0.0
    %3176 = vmatpush1.msra.mxu0 %v3170
    %3177 = vmatprep.subr.mxu0 0.0
    %3178 = vmatpush1.msra.mxu0 0.0
    %3179 = vmatprep.subr.mxu0 0.0
    %3180 = vmatpush1.msra.mxu0 0.0
    %3181 = vmatprep.subr.mxu0 0.0
    %3182 = vmatpush1.msra.mxu0 0.0
    %3183 = vmatprep.subr.mxu0 0.0
    %3184 = vmatpush1.msra.mxu0 0.0
    %3185 = vmatprep.subr.mxu0 0.0
    %3186 = vmatpush1.msra.mxu0 0.0
    %3187 = vmatprep.subr.mxu0 0.0
    %3188 = vmatpush1.msra.mxu0 0.0
    %3189 = vmatprep.subr.mxu0 0.0
    %3190 = vmatpush1.msra.mxu0 0.0
    %3191 = vmatprep.subr.mxu0 0.0
    %3192 = vmatpush1.msra.mxu0 0.0
    %3193 = vmatprep.subr.mxu0 0.0
    %3194 = vmatpush1.msra.mxu0 0.0
    %3195 = vmatprep.subr.mxu0 0.0
    %3196 = vmatpush1.msra.mxu0 0.0
    %3197 = vmatprep.subr.mxu0 0.0
    %3198 = vmatpush1.msra.mxu0 0.0
    %3199 = vmatprep.subr.mxu0 0.0
    %3200 = vmatpush1.msra.mxu0 0.0
    %3201 = vmatprep.subr.mxu0 0.0
    %3202 = vmatpush1.msra.mxu0 0.0
    %3203 = vmatprep.subr.mxu0 0.0
    %3204 = vmatpush1.msra.mxu0 0.0
    %3205 = vmatprep.subr.mxu0 0.0
    %3206 = vmatpush1.msra.mxu0 0.0
    %3207 = vmatprep.subr.mxu0 0.0
    %3208 = vmatpush1.msra.mxu0 0.0
    %3209 = vmatprep.subr.mxu0 0.0
    %3210 = vmatpush1.msra.mxu0 0.0
    %3211 = vmatprep.subr.mxu0 0.0
    %3212 = vmatpush1.msra.mxu0 0.0
    %3213 = vmatprep.subr.mxu0 0.0
    %3214 = vmatpush1.msra.mxu0 0.0
    %3215 = vmatprep.subr.mxu0 0.0
    %3216 = vmatpush1.msra.mxu0 0.0
    %3217 = vmatprep.subr.mxu0 0.0
    %3218 = vmatpush1.msra.mxu0 0.0
    %3219 = vmatprep.subr.mxu0 0.0
    %3220 = vmatpush1.msra.mxu0 0.0
    %3221 = vmatprep.subr.mxu0 0.0
    %3222 = vmatpush1.msra.mxu0 0.0
    %3223 = vmatprep.subr.mxu0 0.0
    %3224 = vmatpush1.msra.mxu0 0.0
    %3225 = vmatprep.subr.mxu0 0.0
    %3226 = vmatpush1.msra.mxu0 0.0
    %3227 = vmatprep.subr.mxu0 0.0
    %3228 = vmatpush1.msra.mxu0 0.0
    %3229 = vmatprep.subr.mxu0 0.0
    %3230 = vmatpush1.msra.mxu0 0.0
    %3231 = vmatprep.subr.mxu0 0.0
    %3232 = vmatpush1.msra.mxu0 0.0
    %3233 = vmatprep.subr.mxu0 0.0
    %3234 = vmatpush1.msra.mxu0 0.0
    %3235 = vmatprep.subr.mxu0 0.0
    %3236 = vmatpush1.msra.mxu0 0.0
    %3237 = vmatprep.subr.mxu0 0.0
    %3238 = vmatpush1.msra.mxu0 0.0
    %3239 = vmatprep.mubr.f32.mxu0 0.0
    %3240 = vmatmul.mubr.f32.gmra.mrb[0].mxu0 %v3173
    %v3241 = vpop.f32.mrb[0].mxu0
    %v3242 = vadd.f32 0.0, %v3241
    %v3243 = vpop.f32.mrb[0].mxu0
    %3244 = vdwg.mxu0
    %3245 = vrot.lane.b32.xlu0 %v2090, 64
    %v3246 = vpop.permute.xlu0 %3245
    %v3249 = vsel %vm265, %v2787, 0
    %3251 = vmatprep.subr.mxu0 0.0
    %3252 = vmatpush1.msra.mxu0 %v3246
    %3253 = vmatprep.subr.mxu0 0.0
    %3254 = vmatpush1.msra.mxu0 0.0
    %3255 = vmatprep.subr.mxu0 0.0
    %3256 = vmatpush1.msra.mxu0 0.0
    %3257 = vmatprep.subr.mxu0 0.0
    %3258 = vmatpush1.msra.mxu0 0.0
    %3259 = vmatprep.subr.mxu0 0.0
    %3260 = vmatpush1.msra.mxu0 0.0
    %3261 = vmatprep.subr.mxu0 0.0
    %3262 = vmatpush1.msra.mxu0 0.0
    %3263 = vmatprep.subr.mxu0 0.0
    %3264 = vmatpush1.msra.mxu0 0.0
    %3265 = vmatprep.subr.mxu0 0.0
    %3266 = vmatpush1.msra.mxu0 0.0
    %3267 = vmatprep.subr.mxu0 0.0
    %3268 = vmatpush1.msra.mxu0 0.0
    %3269 = vmatprep.subr.mxu0 0.0
    %3270 = vmatpush1.msra.mxu0 0.0
    %3271 = vmatprep.subr.mxu0 0.0
    %3272 = vmatpush1.msra.mxu0 0.0
    %3273 = vmatprep.subr.mxu0 0.0
    %3274 = vmatpush1.msra.mxu0 0.0
    %3275 = vmatprep.subr.mxu0 0.0
    %3276 = vmatpush1.msra.mxu0 0.0
    %3277 = vmatprep.subr.mxu0 0.0
    %3278 = vmatpush1.msra.mxu0 0.0
    %3279 = vmatprep.subr.mxu0 0.0
    %3280 = vmatpush1.msra.mxu0 0.0
    %3281 = vmatprep.subr.mxu0 0.0
    %3282 = vmatpush1.msra.mxu0 0.0
    %3283 = vmatprep.subr.mxu0 0.0
    %3284 = vmatpush1.msra.mxu0 0.0
    %3285 = vmatprep.subr.mxu0 0.0
    %3286 = vmatpush1.msra.mxu0 0.0
    %3287 = vmatprep.subr.mxu0 0.0
    %3288 = vmatpush1.msra.mxu0 0.0
    %3289 = vmatprep.subr.mxu0 0.0
    %3290 = vmatpush1.msra.mxu0 0.0
    %3291 = vmatprep.subr.mxu0 0.0
    %3292 = vmatpush1.msra.mxu0 0.0
    %3293 = vmatprep.subr.mxu0 0.0
    %3294 = vmatpush1.msra.mxu0 0.0
    %3295 = vmatprep.subr.mxu0 0.0
    %3296 = vmatpush1.msra.mxu0 0.0
    %3297 = vmatprep.subr.mxu0 0.0
    %3298 = vmatpush1.msra.mxu0 0.0
    %3299 = vmatprep.subr.mxu0 0.0
    %3300 = vmatpush1.msra.mxu0 0.0
    %3301 = vmatprep.subr.mxu0 0.0
    %3302 = vmatpush1.msra.mxu0 0.0
    %3303 = vmatprep.subr.mxu0 0.0
    %3304 = vmatpush1.msra.mxu0 0.0
    %3305 = vmatprep.subr.mxu0 0.0
    %3306 = vmatpush1.msra.mxu0 0.0
    %3307 = vmatprep.subr.mxu0 0.0
    %3308 = vmatpush1.msra.mxu0 0.0
    %3309 = vmatprep.subr.mxu0 0.0
    %3310 = vmatpush1.msra.mxu0 0.0
    %3311 = vmatprep.subr.mxu0 0.0
    %3312 = vmatpush1.msra.mxu0 0.0
    %3313 = vmatprep.subr.mxu0 0.0
    %3314 = vmatpush1.msra.mxu0 0.0
    %3315 = vmatprep.mubr.f32.mxu0 0.0
    %3316 = vmatmul.mubr.f32.gmra.mrb[0].mxu0 %v3249
    %v3317 = vpop.f32.mrb[0].mxu0
    %v3318 = vadd.f32 0.0, %v3317
    %v3319 = vpop.f32.mrb[0].mxu0
    %3320 = vdwg.mxu0
    %3321 = vrot.lane.b32.xlu0 %v2092, 64
    %v3322 = vpop.permute.xlu0 %3321
    %v3325 = vsel %vm265, %v2788, 0
    %3327 = vmatprep.subr.mxu0 0.0
    %3328 = vmatpush1.msra.mxu0 %v3322
    %3329 = vmatprep.subr.mxu0 0.0
    %3330 = vmatpush1.msra.mxu0 0.0
    %3331 = vmatprep.subr.mxu0 0.0
    %3332 = vmatpush1.msra.mxu0 0.0
    %3333 = vmatprep.subr.mxu0 0.0
    %3334 = vmatpush1.msra.mxu0 0.0
    %3335 = vmatprep.subr.mxu0 0.0
    %3336 = vmatpush1.msra.mxu0 0.0
    %3337 = vmatprep.subr.mxu0 0.0
    %3338 = vmatpush1.msra.mxu0 0.0
    %3339 = vmatprep.subr.mxu0 0.0
    %3340 = vmatpush1.msra.mxu0 0.0
    %3341 = vmatprep.subr.mxu0 0.0
    %3342 = vmatpush1.msra.mxu0 0.0
    %3343 = vmatprep.subr.mxu0 0.0
    %3344 = vmatpush1.msra.mxu0 0.0
    %3345 = vmatprep.subr.mxu0 0.0
    %3346 = vmatpush1.msra.mxu0 0.0
    %3347 = vmatprep.subr.mxu0 0.0
    %3348 = vmatpush1.msra.mxu0 0.0
    %3349 = vmatprep.subr.mxu0 0.0
    %3350 = vmatpush1.msra.mxu0 0.0
    %3351 = vmatprep.subr.mxu0 0.0
    %3352 = vmatpush1.msra.mxu0 0.0
    %3353 = vmatprep.subr.mxu0 0.0
    %3354 = vmatpush1.msra.mxu0 0.0
    %3355 = vmatprep.subr.mxu0 0.0
    %3356 = vmatpush1.msra.mxu0 0.0
    %3357 = vmatprep.subr.mxu0 0.0
    %3358 = vmatpush1.msra.mxu0 0.0
    %3359 = vmatprep.subr.mxu0 0.0
    %3360 = vmatpush1.msra.mxu0 0.0
    %3361 = vmatprep.subr.mxu0 0.0
    %3362 = vmatpush1.msra.mxu0 0.0
    %3363 = vmatprep.subr.mxu0 0.0
    %3364 = vmatpush1.msra.mxu0 0.0
    %3365 = vmatprep.subr.mxu0 0.0
    %3366 = vmatpush1.msra.mxu0 0.0
    %3367 = vmatprep.subr.mxu0 0.0
    %3368 = vmatpush1.msra.mxu0 0.0
    %3369 = vmatprep.subr.mxu0 0.0
    %3370 = vmatpush1.msra.mxu0 0.0
    %3371 = vmatprep.subr.mxu0 0.0
    %3372 = vmatpush1.msra.mxu0 0.0
    %3373 = vmatprep.subr.mxu0 0.0
    %3374 = vmatpush1.msra.mxu0 0.0
    %3375 = vmatprep.subr.mxu0 0.0
    %3376 = vmatpush1.msra.mxu0 0.0
    %3377 = vmatprep.subr.mxu0 0.0
    %3378 = vmatpush1.msra.mxu0 0.0
    %3379 = vmatprep.subr.mxu0 0.0
    %3380 = vmatpush1.msra.mxu0 0.0
    %3381 = vmatprep.subr.mxu0 0.0
    %3382 = vmatpush1.msra.mxu0 0.0
    %3383 = vmatprep.subr.mxu0 0.0
    %3384 = vmatpush1.msra.mxu0 0.0
    %3385 = vmatprep.subr.mxu0 0.0
    %3386 = vmatpush1.msra.mxu0 0.0
    %3387 = vmatprep.subr.mxu0 0.0
    %3388 = vmatpush1.msra.mxu0 0.0
    %3389 = vmatprep.subr.mxu0 0.0
    %3390 = vmatpush1.msra.mxu0 0.0
    %3391 = vmatprep.mubr.f32.mxu0 0.0
    %3392 = vmatmul.mubr.f32.gmra.mrb[0].mxu0 %v3325
    %v3393 = vpop.f32.mrb[0].mxu0
    %v3394 = vadd.f32 0.0, %v3393
    %v3395 = vpop.f32.mrb[0].mxu0
    %3396 = vdwg.mxu0
    %3398 = vrot.lane.b32.xlu0 %v2938, 8
    %v3399 = vpop.permute.xlu0 %3398
    %3402 = vrot.lane.b32.xlu0 %v3014, 16
    %v3403 = vpop.permute.xlu0 %3402
    %3406 = vrot.lane.b32.xlu0 %v3090, 24
    %v3407 = vpop.permute.xlu0 %3406
    %v3409 = vsel %vm265, %v2862, %v3399
    %v3410 = vsel %vm1581, %v3409, %v3403
    %v3411 = vsel %vm1583, %v3410, %v3407
    %3413 = vrot.lane.b32.xlu0 %v3242, 8
    %v3414 = vpop.permute.xlu0 %3413
    %3417 = vrot.lane.b32.xlu0 %v3318, 16
    %v3418 = vpop.permute.xlu0 %3417
    %3421 = vrot.lane.b32.xlu0 %v3394, 24
    %v3422 = vpop.permute.xlu0 %3421
    %v3424 = vsel %vm265, %v3166, %v3414
    %v3425 = vsel %vm1581, %v3424, %v3418
    %v3426 = vsel %vm1583, %v3425, %v3422
    %v3427 = vlaneseq
    %v3428 = vshrl.u32 %v3427, 7
    %v3429 = vsub.s32 0, %v3428
    %v3430 = vrot.slane %v1987, %v3429
    %3435 = vrot.lane.b32.xlu0 %v1970, 32
    %v3436 = vpop.permute.xlu0 %3435
    %3437 = vrot.lane.b32.xlu0 %v1971, 32
    %v3438 = vpop.permute.xlu0 %3437
    %3439 = vrot.lane.b32.xlu0 %v1972, 32
    %v3440 = vpop.permute.xlu0 %3439
    %3441 = vrot.lane.b32.xlu0 %v1973, 32
    %v3442 = vpop.permute.xlu0 %3441
    %v3448 = vsel %vm167, %v3411, 0
    %v3451 = vsel %vm167, %v3426, 0
    %3453 = vmatprep.subr.mxu0 0.0
    %3454 = vmatpush1.msra.mxu0 %v3436
    %3455 = vmatprep.subr.mxu0 0.0
    %3456 = vmatpush1.msra.mxu0 %v3438
    %3457 = vmatprep.subr.mxu0 0.0
    %3458 = vmatpush1.msra.mxu0 %v3440
    %3459 = vmatprep.subr.mxu0 0.0
    %3460 = vmatpush1.msra.mxu0 %v3442
    %3461 = vmatprep.subr.mxu0 0.0
    %3462 = vmatpush1.msra.mxu0 0.0
    %3463 = vmatprep.subr.mxu0 0.0
    %3464 = vmatpush1.msra.mxu0 0.0
    %3465 = vmatprep.subr.mxu0 0.0
    %3466 = vmatpush1.msra.mxu0 0.0
    %3467 = vmatprep.subr.mxu0 0.0
    %3468 = vmatpush1.msra.mxu0 0.0
    %3469 = vmatprep.subr.mxu0 0.0
    %3470 = vmatpush1.msra.mxu0 0.0
    %3471 = vmatprep.subr.mxu0 0.0
    %3472 = vmatpush1.msra.mxu0 0.0
    %3473 = vmatprep.subr.mxu0 0.0
    %3474 = vmatpush1.msra.mxu0 0.0
    %3475 = vmatprep.subr.mxu0 0.0
    %3476 = vmatpush1.msra.mxu0 0.0
    %3477 = vmatprep.subr.mxu0 0.0
    %3478 = vmatpush1.msra.mxu0 0.0
    %3479 = vmatprep.subr.mxu0 0.0
    %3480 = vmatpush1.msra.mxu0 0.0
    %3481 = vmatprep.subr.mxu0 0.0
    %3482 = vmatpush1.msra.mxu0 0.0
    %3483 = vmatprep.subr.mxu0 0.0
    %3484 = vmatpush1.msra.mxu0 0.0
    %3485 = vmatprep.subr.mxu0 0.0
    %3486 = vmatpush1.msra.mxu0 0.0
    %3487 = vmatprep.subr.mxu0 0.0
    %3488 = vmatpush1.msra.mxu0 0.0
    %3489 = vmatprep.subr.mxu0 0.0
    %3490 = vmatpush1.msra.mxu0 0.0
    %3491 = vmatprep.subr.mxu0 0.0
    %3492 = vmatpush1.msra.mxu0 0.0
    %3493 = vmatprep.subr.mxu0 0.0
    %3494 = vmatpush1.msra.mxu0 0.0
    %3495 = vmatprep.subr.mxu0 0.0
    %3496 = vmatpush1.msra.mxu0 0.0
    %3497 = vmatprep.subr.mxu0 0.0
    %3498 = vmatpush1.msra.mxu0 0.0
    %3499 = vmatprep.subr.mxu0 0.0
    %3500 = vmatpush1.msra.mxu0 0.0
    %3501 = vmatprep.subr.mxu0 0.0
    %3502 = vmatpush1.msra.mxu0 0.0
    %3503 = vmatprep.subr.mxu0 0.0
    %3504 = vmatpush1.msra.mxu0 0.0
    %3505 = vmatprep.subr.mxu0 0.0
    %3506 = vmatpush1.msra.mxu0 0.0
    %3507 = vmatprep.subr.mxu0 0.0
    %3508 = vmatpush1.msra.mxu0 0.0
    %3509 = vmatprep.subr.mxu0 0.0
    %3510 = vmatpush1.msra.mxu0 0.0
    %3511 = vmatprep.subr.mxu0 0.0
    %3512 = vmatpush1.msra.mxu0 0.0
    %3513 = vmatprep.subr.mxu0 0.0
    %3514 = vmatpush1.msra.mxu0 0.0
    %3515 = vmatprep.subr.mxu0 0.0
    %3516 = vmatpush1.msra.mxu0 0.0
    %3517 = vmatprep.mubr.f32.mxu0 0.0
    %3518 = vmatmul.mubr.f32.gmra.mrb[0].mxu0 %v3448
    %v3519 = vpop.f32.mrb[0].mxu0
    %v3520 = vadd.f32 %v3430, %v3519
    %v3521 = vpop.f32.mrb[0].mxu0
    %3522 = vmatprep.mubr.f32.mxu0 0.0
    %3523 = vmatmul.mubr.f32.gmra.mrb[0].mxu0 %v3451
    %v3524 = vpop.f32.mrb[0].mxu0
    %v3525 = vadd.f32 %v3430, %v3524
    %v3526 = vpop.f32.mrb[0].mxu0
    %3527 = vdwg.mxu0
    %v3528 = vadd.f32 %v1968, %v3520
    %v3529 = vadd.f32 %v1969, %v3525
    %v3530 = vsel %vm167, %v3528, 0.0
    %3531 = vadd.xlane.f32.xlu0 %v3530
    %v3532 = vpop.xlane.xlu0 %3531
    %v3533 = vsel %vm167, %v3529, 0.0
    %3534 = vadd.xlane.f32.xlu0 %v3533
    %v3535 = vpop.xlane.xlu0 %3534
    %v3536 = vmul.f32 %v3532, %v1709
    %v3537 = vmul.f32 %v3535, %v1709
    %v3538 = vsub.f32 %v3528, %v3536
    %v3539 = vsub.f32 %v3529, %v3537
    %v3540 = vmul.f32 %v3538, %v3538
    %v3541 = vmul.f32 %v3539, %v3539
    %v3542 = vsel %vm167, %v3540, 0.0
    %3543 = vadd.xlane.f32.xlu0 %v3542
    %v3544 = vpop.xlane.xlu0 %3543
    %v3545 = vsel %vm167, %v3541, 0.0
    %3546 = vadd.xlane.f32.xlu0 %v3545
    %v3547 = vpop.xlane.xlu0 %3546
    %v3548 = vmul.f32 %v3544, %v1709
    %v3549 = vmul.f32 %v3547, %v1709
    %v3550 = vadd.f32 %v3548, 1e-05
    %v3551 = vadd.f32 %v3549, 1e-05
    %v3552 = vrsqrt.pop %v3550
    %v3553 = vrsqrt.pop %v3551
    %v3554 = vmul.f32 %v3538, %v3552
    %v3555 = vmul.f32 %v3539, %v3553
    %v3556 = vlaneseq
    %v3557 = vshrl.u32 %v3556, 7
    %v3558 = vsub.s32 0, %v3557
    %v3559 = vrot.slane %v1988, %v3558
    %v3560 = vmul.f32 %v3554, %v3559
    %v3561 = vmul.f32 %v3555, %v3559
    %v3562 = vlaneseq
    %v3563 = vshrl.u32 %v3562, 7
    %v3564 = vsub.s32 0, %v3563
    %v3565 = vrot.slane %v1989, %v3564
    %v3566 = vadd.f32 %v3560, %v3565
    %v3567 = vadd.f32 %v3561, %v3565
    %v3568 = vlaneseq
    %v3569 = vshrl.u32 %v3568, 7
    %v3570 = vsub.s32 0, %v3569
    %v3571 = vrot.slane %v1990, %v3570
    %3576 = vrot.lane.b32.xlu0 %v1982, 96
    %v3577 = vpop.permute.xlu0 %3576
    %3578 = vrot.lane.b32.xlu0 %v1983, 96
    %v3579 = vpop.permute.xlu0 %3578
    %3580 = vrot.lane.b32.xlu0 %v1984, 96
    %v3581 = vpop.permute.xlu0 %3580
    %3582 = vrot.lane.b32.xlu0 %v1985, 96
    %v3583 = vpop.permute.xlu0 %3582
    %v3589 = vsel %vm167, %v3566, 0
    %v3592 = vsel %vm167, %v3567, 0
    %3594 = vmatprep.subr.mxu0 0.0
    %3595 = vmatpush1.msra.mxu0 %v3577
    %3596 = vmatprep.subr.mxu0 0.0
    %3597 = vmatpush1.msra.mxu0 %v3579
    %3598 = vmatprep.subr.mxu0 0.0
    %3599 = vmatpush1.msra.mxu0 %v3581
    %3600 = vmatprep.subr.mxu0 0.0
    %3601 = vmatpush1.msra.mxu0 %v3583
    %3602 = vmatprep.subr.mxu0 0.0
    %3603 = vmatpush1.msra.mxu0 0.0
    %3604 = vmatprep.subr.mxu0 0.0
    %3605 = vmatpush1.msra.mxu0 0.0
    %3606 = vmatprep.subr.mxu0 0.0
    %3607 = vmatpush1.msra.mxu0 0.0
    %3608 = vmatprep.subr.mxu0 0.0
    %3609 = vmatpush1.msra.mxu0 0.0
    %3610 = vmatprep.subr.mxu0 0.0
    %3611 = vmatpush1.msra.mxu0 0.0
    %3612 = vmatprep.subr.mxu0 0.0
    %3613 = vmatpush1.msra.mxu0 0.0
    %3614 = vmatprep.subr.mxu0 0.0
    %3615 = vmatpush1.msra.mxu0 0.0
    %3616 = vmatprep.subr.mxu0 0.0
    %3617 = vmatpush1.msra.mxu0 0.0
    %3618 = vmatprep.subr.mxu0 0.0
    %3619 = vmatpush1.msra.mxu0 0.0
    %3620 = vmatprep.subr.mxu0 0.0
    %3621 = vmatpush1.msra.mxu0 0.0
    %3622 = vmatprep.subr.mxu0 0.0
    %3623 = vmatpush1.msra.mxu0 0.0
    %3624 = vmatprep.subr.mxu0 0.0
    %3625 = vmatpush1.msra.mxu0 0.0
    %3626 = vmatprep.subr.mxu0 0.0
    %3627 = vmatpush1.msra.mxu0 0.0
    %3628 = vmatprep.subr.mxu0 0.0
    %3629 = vmatpush1.msra.mxu0 0.0
    %3630 = vmatprep.subr.mxu0 0.0
    %3631 = vmatpush1.msra.mxu0 0.0
    %3632 = vmatprep.subr.mxu0 0.0
    %3633 = vmatpush1.msra.mxu0 0.0
    %3634 = vmatprep.subr.mxu0 0.0
    %3635 = vmatpush1.msra.mxu0 0.0
    %3636 = vmatprep.subr.mxu0 0.0
    %3637 = vmatpush1.msra.mxu0 0.0
    %3638 = vmatprep.subr.mxu0 0.0
    %3639 = vmatpush1.msra.mxu0 0.0
    %3640 = vmatprep.subr.mxu0 0.0
    %3641 = vmatpush1.msra.mxu0 0.0
    %3642 = vmatprep.subr.mxu0 0.0
    %3643 = vmatpush1.msra.mxu0 0.0
    %3644 = vmatprep.subr.mxu0 0.0
    %3645 = vmatpush1.msra.mxu0 0.0
    %3646 = vmatprep.subr.mxu0 0.0
    %3647 = vmatpush1.msra.mxu0 0.0
    %3648 = vmatprep.subr.mxu0 0.0
    %3649 = vmatpush1.msra.mxu0 0.0
    %3650 = vmatprep.subr.mxu0 0.0
    %3651 = vmatpush1.msra.mxu0 0.0
    %3652 = vmatprep.subr.mxu0 0.0
    %3653 = vmatpush1.msra.mxu0 0.0
    %3654 = vmatprep.subr.mxu0 0.0
    %3655 = vmatpush1.msra.mxu0 0.0
    %3656 = vmatprep.subr.mxu0 0.0
    %3657 = vmatpush1.msra.mxu0 0.0
    %3658 = vmatprep.mubr.f32.mxu0 0.0
    %3659 = vmatmul.mubr.f32.gmra.mrb[0].mxu0 %v3589
    %v3660 = vpop.f32.mrb[0].mxu0
    %v3661 = vadd.f32 %v3571, %v3660
    %v3662 = vpop.f32.mrb[0].mxu0
    %3663 = vmatprep.mubr.f32.mxu0 0.0
    %3664 = vmatmul.mubr.f32.gmra.mrb[0].mxu0 %v3592
    %v3665 = vpop.f32.mrb[0].mxu0
    %v3666 = vadd.f32 %v3571, %v3665
    %v3667 = vpop.f32.mrb[0].mxu0
    %3668 = vdwg.mxu0
    %v3669 = vmax.f32 %v3661, 0.0
    %v3670 = vmax.f32 %v3666, 0.0
    %v3671 = vlaneseq
    %v3672 = vshrl.u32 %v3671, 7
    %v3673 = vsub.s32 0, %v3672
    %v3674 = vrot.slane %v1991, %v3673
    %v3676 = vsel %vm61, %v3669, 0
    %v3679 = vsel %vm61, %v3670, 0
    %3681 = vmatprep.subr.mxu0 0.0
    %3682 = vmatpush1.msra.mxu0 %v1974
    %3683 = vmatprep.subr.mxu0 0.0
    %3684 = vmatpush1.msra.mxu0 %v1975
    %3685 = vmatprep.subr.mxu0 0.0
    %3686 = vmatpush1.msra.mxu0 %v1976
    %3687 = vmatprep.subr.mxu0 0.0
    %3688 = vmatpush1.msra.mxu0 %v1977
    %3689 = vmatprep.subr.mxu0 0.0
    %3690 = vmatpush1.msra.mxu0 %v1978
    %3691 = vmatprep.subr.mxu0 0.0
    %3692 = vmatpush1.msra.mxu0 %v1979
    %3693 = vmatprep.subr.mxu0 0.0
    %3694 = vmatpush1.msra.mxu0 %v1980
    %3695 = vmatprep.subr.mxu0 0.0
    %3696 = vmatpush1.msra.mxu0 %v1981
    %3697 = vmatprep.subr.mxu0 0.0
    %3698 = vmatpush1.msra.mxu0 0.0
    %3699 = vmatprep.subr.mxu0 0.0
    %3700 = vmatpush1.msra.mxu0 0.0
    %3701 = vmatprep.subr.mxu0 0.0
    %3702 = vmatpush1.msra.mxu0 0.0
    %3703 = vmatprep.subr.mxu0 0.0
    %3704 = vmatpush1.msra.mxu0 0.0
    %3705 = vmatprep.subr.mxu0 0.0
    %3706 = vmatpush1.msra.mxu0 0.0
    %3707 = vmatprep.subr.mxu0 0.0
    %3708 = vmatpush1.msra.mxu0 0.0
    %3709 = vmatprep.subr.mxu0 0.0
    %3710 = vmatpush1.msra.mxu0 0.0
    %3711 = vmatprep.subr.mxu0 0.0
    %3712 = vmatpush1.msra.mxu0 0.0
    %3713 = vmatprep.subr.mxu0 0.0
    %3714 = vmatpush1.msra.mxu0 0.0
    %3715 = vmatprep.subr.mxu0 0.0
    %3716 = vmatpush1.msra.mxu0 0.0
    %3717 = vmatprep.subr.mxu0 0.0
    %3718 = vmatpush1.msra.mxu0 0.0
    %3719 = vmatprep.subr.mxu0 0.0
    %3720 = vmatpush1.msra.mxu0 0.0
    %3721 = vmatprep.subr.mxu0 0.0
    %3722 = vmatpush1.msra.mxu0 0.0
    %3723 = vmatprep.subr.mxu0 0.0
    %3724 = vmatpush1.msra.mxu0 0.0
    %3725 = vmatprep.subr.mxu0 0.0
    %3726 = vmatpush1.msra.mxu0 0.0
    %3727 = vmatprep.subr.mxu0 0.0
    %3728 = vmatpush1.msra.mxu0 0.0
    %3729 = vmatprep.subr.mxu0 0.0
    %3730 = vmatpush1.msra.mxu0 0.0
    %3731 = vmatprep.subr.mxu0 0.0
    %3732 = vmatpush1.msra.mxu0 0.0
    %3733 = vmatprep.subr.mxu0 0.0
    %3734 = vmatpush1.msra.mxu0 0.0
    %3735 = vmatprep.subr.mxu0 0.0
    %3736 = vmatpush1.msra.mxu0 0.0
    %3737 = vmatprep.subr.mxu0 0.0
    %3738 = vmatpush1.msra.mxu0 0.0
    %3739 = vmatprep.subr.mxu0 0.0
    %3740 = vmatpush1.msra.mxu0 0.0
    %3741 = vmatprep.subr.mxu0 0.0
    %3742 = vmatpush1.msra.mxu0 0.0
    %3743 = vmatprep.subr.mxu0 0.0
    %3744 = vmatpush1.msra.mxu0 0.0
    %3745 = vmatprep.mubr.f32.mxu0 0.0
    %3746 = vmatmul.mubr.f32.gmra.mrb[0].mxu0 %v3676
    %v3747 = vpop.f32.mrb[0].mxu0
    %v3748 = vadd.f32 %v3674, %v3747
    %v3749 = vpop.f32.mrb[0].mxu0
    %3750 = vmatprep.mubr.f32.mxu0 0.0
    %3751 = vmatmul.mubr.f32.gmra.mrb[0].mxu0 %v3679
    %v3752 = vpop.f32.mrb[0].mxu0
    %v3753 = vadd.f32 %v3674, %v3752
    %v3754 = vpop.f32.mrb[0].mxu0
    %3755 = vdwg.mxu0
    %v3756 = vadd.f32 %v3566, %v3748
    %v3757 = vadd.f32 %v3567, %v3753
    %v3758 = vsel %vm167, %v3756, 0.0
    %3759 = vadd.xlane.f32.xlu0 %v3758
    %v3760 = vpop.xlane.xlu0 %3759
    %v3761 = vsel %vm167, %v3757, 0.0
    %3762 = vadd.xlane.f32.xlu0 %v3761
    %v3763 = vpop.xlane.xlu0 %3762
    %v3764 = vmul.f32 %v3760, %v1709
    %v3765 = vmul.f32 %v3763, %v1709
    %v3766 = vsub.f32 %v3756, %v3764
    %v3767 = vsub.f32 %v3757, %v3765
    %v3768 = vmul.f32 %v3766, %v3766
    %v3769 = vmul.f32 %v3767, %v3767
    %v3770 = vsel %vm167, %v3768, 0.0
    %3771 = vadd.xlane.f32.xlu0 %v3770
    %v3772 = vpop.xlane.xlu0 %3771
    %v3773 = vsel %vm167, %v3769, 0.0
    %3774 = vadd.xlane.f32.xlu0 %v3773
    %v3775 = vpop.xlane.xlu0 %3774
    %v3776 = vmul.f32 %v3772, %v1709
    %v3777 = vmul.f32 %v3775, %v1709
    %v3778 = vadd.f32 %v3776, 1e-05
    %v3779 = vadd.f32 %v3777, 1e-05
    %v3780 = vrsqrt.pop %v3778
    %v3781 = vrsqrt.pop %v3779
    %v3782 = vmul.f32 %v3766, %v3780
    %v3783 = vmul.f32 %v3767, %v3781
    %v3784 = vlaneseq
    %v3785 = vshrl.u32 %v3784, 7
    %v3786 = vsub.s32 0, %v3785
    %v3787 = vrot.slane %v1992, %v3786
    %v3788 = vmul.f32 %v3782, %v3787
    %v3789 = vmul.f32 %v3783, %v3787
    %v3790 = vlaneseq
    %v3791 = vshrl.u32 %v3790, 7
    %v3792 = vsub.s32 0, %v3791
    %v3793 = vrot.slane %v1993, %v3792
    %v3794 = vadd.f32 %v3788, %v3793
    %v3795 = vadd.f32 %v3789, %v3793
    %v3796 = vlaneseq
    %v3797 = vshrl.u32 %v3796, 7
    %v3798 = vmul.u32 %v3797, 8
    %vm3799 = vcmp.ge.s32.totalorder %v40, %v3798
    %v3800 = vadd.s32 %v3797, 1
    %v3801 = vmul.u32 %v3800, 8
    %vm3802 = vcmp.lt.s32.totalorder %v40, %v3801
    %vm3803 = vmand %vm3799, %vm3802
    %v3804 = vsel %vm3803, 0.125, 0.0
    %v3806 = vsel %vm1581, %v3804, 0
    %3808 = vmatprep.subr.mxu0 0.0
    %3809 = vmatpush1.msra.mxu0 %v3794
    %3810 = vmatprep.subr.mxu0 0.0
    %3811 = vmatpush1.msra.mxu0 %v3795
    %3812 = vmatprep.subr.mxu0 0.0
    %3813 = vmatpush1.msra.mxu0 0.0
    %3814 = vmatprep.subr.mxu0 0.0
    %3815 = vmatpush1.msra.mxu0 0.0
    %3816 = vmatprep.subr.mxu0 0.0
    %3817 = vmatpush1.msra.mxu0 0.0
    %3818 = vmatprep.subr.mxu0 0.0
    %3819 = vmatpush1.msra.mxu0 0.0
    %3820 = vmatprep.subr.mxu0 0.0
    %3821 = vmatpush1.msra.mxu0 0.0
    %3822 = vmatprep.subr.mxu0 0.0
    %3823 = vmatpush1.msra.mxu0 0.0
    %3824 = vmatprep.subr.mxu0 0.0
    %3825 = vmatpush1.msra.mxu0 0.0
    %3826 = vmatprep.subr.mxu0 0.0
    %3827 = vmatpush1.msra.mxu0 0.0
    %3828 = vmatprep.subr.mxu0 0.0
    %3829 = vmatpush1.msra.mxu0 0.0
    %3830 = vmatprep.subr.mxu0 0.0
    %3831 = vmatpush1.msra.mxu0 0.0
    %3832 = vmatprep.subr.mxu0 0.0
    %3833 = vmatpush1.msra.mxu0 0.0
    %3834 = vmatprep.subr.mxu0 0.0
    %3835 = vmatpush1.msra.mxu0 0.0
    %3836 = vmatprep.subr.mxu0 0.0
    %3837 = vmatpush1.msra.mxu0 0.0
    %3838 = vmatprep.subr.mxu0 0.0
    %3839 = vmatpush1.msra.mxu0 0.0
    %3840 = vmatprep.subr.mxu0 0.0
    %3841 = vmatpush1.msra.mxu0 0.0
    %3842 = vmatprep.subr.mxu0 0.0
    %3843 = vmatpush1.msra.mxu0 0.0
    %3844 = vmatprep.subr.mxu0 0.0
    %3845 = vmatpush1.msra.mxu0 0.0
    %3846 = vmatprep.subr.mxu0 0.0
    %3847 = vmatpush1.msra.mxu0 0.0
    %3848 = vmatprep.subr.mxu0 0.0
    %3849 = vmatpush1.msra.mxu0 0.0
    %3850 = vmatprep.subr.mxu0 0.0
    %3851 = vmatpush1.msra.mxu0 0.0
    %3852 = vmatprep.subr.mxu0 0.0
    %3853 = vmatpush1.msra.mxu0 0.0
    %3854 = vmatprep.subr.mxu0 0.0
    %3855 = vmatpush1.msra.mxu0 0.0
    %3856 = vmatprep.subr.mxu0 0.0
    %3857 = vmatpush1.msra.mxu0 0.0
    %3858 = vmatprep.subr.mxu0 0.0
    %3859 = vmatpush1.msra.mxu0 0.0
    %3860 = vmatprep.subr.mxu0 0.0
    %3861 = vmatpush1.msra.mxu0 0.0
    %3862 = vmatprep.subr.mxu0 0.0
    %3863 = vmatpush1.msra.mxu0 0.0
    %3864 = vmatprep.subr.mxu0 0.0
    %3865 = vmatpush1.msra.mxu0 0.0
    %3866 = vmatprep.subr.mxu0 0.0
    %3867 = vmatpush1.msra.mxu0 0.0
    %3868 = vmatprep.subr.mxu0 0.0
    %3869 = vmatpush1.msra.mxu0 0.0
    %3870 = vmatprep.subr.mxu0 0.0
    %3871 = vmatpush1.msra.mxu0 0.0
    %3872 = vmatprep.mubr.f32.mxu0 0.0
    %3873 = vmatmul.mubr.f32.gmra.mrb[0].mxu0 %v3806
    %v3874 = vpop.f32.mrb[0].mxu0
    %v3875 = vadd.f32 0.0, %v3874
    %v3876 = vpop.f32.mrb[0].mxu0
    %3877 = vdwg.mxu0
    %vm3878 = vcmask 254976
    %3879 = vst.msk [vmem:[#allocation5] sm:$0x3] %vm3878, %v3875
    // Predicated region
    $region18: #{sequence_encoder_forward.1} parent=1 // pred_check
      _
    $region19: #{sequence_encoder_forward.1} parent=1 // pred_check_branch
      %3881 = sbr.rel (0) target = $region21
    $region20: #{sequence_encoder_forward.1} parent=1 // pred_region
      %s3883 = ssub.s32 32, 32
      %3884 = vsyncadd [#allocation4], %s3883
      %s3886 = sshll.u32 [#allocation5], 4
      %s3887 = int_to_ptr.vmem [resolvable:$true] %s3886
      %3889 = dma.vmem_to_hbm [thread:$0]  %s3887, 32, %s3, [#allocation4]
    $region21: #{sequence_encoder_forward.1} parent=1 // pred_fallthru
      _
    // Predicated region
    $region22: #{sequence_encoder_forward.1} parent=1 // pred_check
      _
    $region23: #{sequence_encoder_forward.1} parent=1 // pred_check_branch
      %3891 = sbr.rel (0) target = $region25
    $region24: #{sequence_encoder_forward.1} parent=1 // pred_region
      %3892 = dma.done [#allocation4], 32
    $region25: #{sequence_encoder_forward.1} parent=1 // pred_fallthru
      _
    %3893 = vsyncpa [#allocation3], 1
    %3894 = vsyncpa [#allocation4], 1

</llo_original>
